<compile_context>
chip_gen: v5e
topology: v5e:2x2
jax: 0.10.0
libtpu: 0.0.40
codegen_flags: <defaults>
</compile_context>

<pallas_src>
import functools

import jax
import jax.numpy as jnp
from jax import lax
from jax.experimental import pallas as pl
from jax.experimental.pallas import tpu as pltpu


_LANES = 128
_SUBLANES = 8


def _round_up(n, m):
    return ((n + m - 1) // m) * m


def _pick_t_chunk(T, max_chunk=64):
    """Largest divisor of T that is <= max_chunk (full residency for small T)."""
    if T <= max_chunk:
        return T
    best = 1
    for d in range(1, max_chunk + 1):
        if T % d == 0:
            best = d
    return best if best >= 8 else T


# ----------------------------------------------------------------------------
# Fused Pallas kernel: interleaved 2-layer GRU + pooling + fc_stack + heads
# ----------------------------------------------------------------------------
def gru_fused_kernel(x_ref, wih0_ref, whh0_ref, bih0_ref, bhh0_ref,
                     wih1_ref, whh1_ref, bih1_ref, bhh1_ref,
                     fc_w_ref, fc_b_ref, heads_w_ref, heads_b_ref,
                     pooled_ref, logits_ref,
                     gi0_ref, h0_ref, h1_ref, pool_ref,
                     *, pooling_method, t_chunk, b_pad, t_total, unroll):
    """One grid step = one T-chunk.

    x_ref:        [Tc*Bp, Fp]   bf16, time-major, sublane/lane dense
    wih*/whh*:    bf16 weights, gate order r,z,n, lane-padded to Hp
    b*:           f32 biases [1, 3*Hp]
    fc_w/heads_w: bf16;  fc_b/heads_b: f32
    pooled_ref:   [Bp, HSp]  f32   (written only at the last chunk)
    logits_ref:   [Bp, Dp]   f32   (written only at the last chunk)
    gi0_ref:      VMEM [Tc*Bp, 3*Hp] f32  layer-0 input projections (per chunk)
    h0/h1/pool:   VMEM [Bp, Hp] f32       persistent carries across chunks
    """
    c = pl.program_id(0)
    n_chunks = pl.num_programs(0)
    Hp = whh0_ref.shape[0]

    @pl.when(c == 0)
    def _init():
        h0_ref[...] = jnp.zeros_like(h0_ref)          # matches self.h_0 (zeros)
        h1_ref[...] = jnp.zeros_like(h1_ref)
        if pooling_method == "max":
            pool_ref[...] = jnp.full(pool_ref.shape, -jnp.inf, jnp.float32)
        elif pooling_method == "avg":
            pool_ref[...] = jnp.zeros_like(pool_ref)

    # ---- layer-0 input projection, hoisted: one bf16 MXU matmul per chunk ----
    gi0_ref[...] = (jnp.dot(x_ref[...], wih0_ref[...],
                            preferred_element_type=jnp.float32) + bih0_ref[...])

    def gates(gi, gh, h_prev):
        r = jax.nn.sigmoid(gi[:, 0 * Hp:1 * Hp] + gh[:, 0 * Hp:1 * Hp])
        z = jax.nn.sigmoid(gi[:, 1 * Hp:2 * Hp] + gh[:, 1 * Hp:2 * Hp])
        n = jnp.tanh(gi[:, 2 * Hp:3 * Hp] + r * gh[:, 2 * Hp:3 * Hp])
        return (1.0 - z) * n + z * h_prev

    # ---- both GRU layers interleaved in ONE recurrence loop ----
    def step(t, carry):
        if pooling_method == "last":
            h0, h1 = carry
        else:
            h0, h1, pool = carry
        off = pl.multiple_of(t * b_pad, b_pad)           # sublane-aligned slice
        gi0 = gi0_ref[pl.ds(off, b_pad), :]
        # layer 0: only the small h @ Whh matmul remains per step
        gh0 = jnp.dot(h0.astype(jnp.bfloat16), whh0_ref[...],
                      preferred_element_type=jnp.float32) + bhh0_ref[...]
        h0n = gates(gi0, gh0, h0)
        # layer 1: input projection is per-step on the freshly computed h0(t)
        gi1 = jnp.dot(h0n.astype(jnp.bfloat16), wih1_ref[...],
                      preferred_element_type=jnp.float32) + bih1_ref[...]
        gh1 = jnp.dot(h1.astype(jnp.bfloat16), whh1_ref[...],
                      preferred_element_type=jnp.float32) + bhh1_ref[...]
        h1n = gates(gi1, gh1, h1)
        if pooling_method == "last":
            return h0n, h1n
        elif pooling_method == "max":
            return h0n, h1n, jnp.maximum(pool, h1n)
        else:  # avg
            return h0n, h1n, pool + h1n

    if pooling_method == "last":
        carry0 = (h0_ref[...], h1_ref[...])
    else:
        carry0 = (h0_ref[...], h1_ref[...], pool_ref[...])
    carry = lax.fori_loop(0, t_chunk, step, carry0, unroll=unroll)

    # persist carries for the next chunk
    h0_ref[...] = carry[0]
    h1_ref[...] = carry[1]
    if pooling_method != "last":
        pool_ref[...] = carry[2]

    # ---- epilogue at the last chunk: fc_stack + all task heads fused ----
    @pl.when(c == n_chunks - 1)
    def _epilogue():
        if pooling_method == "last":
            pooled = carry[1]
        elif pooling_method == "max":
            pooled = carry[2]
        else:  # avg
            pooled = carry[2] * (1.0 / float(t_total))
        rep = (jnp.dot(pooled.astype(jnp.bfloat16), fc_w_ref[...],
                       preferred_element_type=jnp.float32) + fc_b_ref[...])
        pooled_ref[...] = rep
        logits_ref[...] = (jnp.dot(rep.astype(jnp.bfloat16), heads_w_ref[...],
                                   preferred_element_type=jnp.float32)
                           + heads_b_ref[...])


def run_encoder(x, params, heads_w, heads_b, pooling_method):
    """x: [B, T, F] float32. Returns (pooled_rep [B, HSp], logits [B, Dp])."""
    B, T, F = x.shape
    Hp = params["hidden_dim_p"]
    HSp = params["hidden_size_p"]
    Fp = params["wih0_p"].shape[0]
    Dp = heads_w.shape[1]
    Bp = _round_up(max(B, _SUBLANES), _SUBLANES)

    # Sublane/lane-dense streamed layout: time-major, batch padded to 8
    # sublanes, features padded to 128 lanes, flattened to a 2-D bf16 slab.
    x_tm = jnp.transpose(x, (1, 0, 2))
    x_tm = jnp.pad(x_tm, ((0, 0), (0, Bp - B), (0, Fp - F)))
    x_flat = x_tm.reshape(T * Bp, Fp).astype(jnp.bfloat16)

    Tc = _pick_t_chunk(T)
    n_chunks = T // Tc
    unroll = True if Tc <= 8 else 4     # keep vreg pressure bounded

    kernel = functools.partial(
        gru_fused_kernel, pooling_method=pooling_method,
        t_chunk=Tc, b_pad=Bp, t_total=T, unroll=unroll)

    weights = (params["wih0_p"], params["whh0_p"], params["bih0_p"], params["bhh0_p"],
               params["wih1_p"], params["whh1_p"], params["bih1_p"], params["bhh1_p"],
               params["fc_w_p"], params["fc_b_p"], heads_w, heads_b)

    def _resident(a):
        # full-array block, same index every grid step -> stays resident in VMEM
        return pl.BlockSpec(a.shape, lambda c: (0, 0))

    # Explicit VMEM budget: the default scoped limit (not physical VMEM) is the
    # first wall on long sequences.  Cap at 64 MiB (v7x physical per-TC).
    w_bytes = sum(int(a.size) * a.dtype.itemsize for a in weights)
    x_bytes = 2 * Tc * Bp * Fp * 2                 # double-buffered bf16 chunk
    scratch_bytes = (Tc * Bp * 3 * Hp + 3 * Bp * Hp) * 4
    out_bytes = (Bp * HSp + Bp * Dp) * 4
    vmem_limit = int(min(64 << 20,
                         max(32 << 20,
                             2 * (w_bytes + x_bytes + scratch_bytes + out_bytes))))

    pooled_p, logits_p = pl.pallas_call(
        kernel,
        grid=(n_chunks,),
        out_shape=(jax.ShapeDtypeStruct((Bp, HSp), jnp.float32),
                   jax.ShapeDtypeStruct((Bp, Dp), jnp.float32)),
        in_specs=[pl.BlockSpec((Tc * Bp, Fp), lambda c: (c, 0))]
                 + [_resident(a) for a in weights],
        out_specs=(pl.BlockSpec((Bp, HSp), lambda c: (0, 0)),
                   pl.BlockSpec((Bp, Dp), lambda c: (0, 0))),
        scratch_shapes=[pltpu.VMEM((Tc * Bp, 3 * Hp), jnp.float32),  # gi0 (per chunk)
                        pltpu.VMEM((Bp, Hp), jnp.float32),           # h0 carry
                        pltpu.VMEM((Bp, Hp), jnp.float32),           # h1 carry
                        pltpu.VMEM((Bp, Hp), jnp.float32)],          # pooling carry
        compiler_params=pltpu.CompilerParams(
            dimension_semantics=("arbitrary",),
            vmem_limit_bytes=vmem_limit),
    )(x_flat, *weights)
    return pooled_p[:B], logits_p[:B]


# ----------------------------------------------------------------------------
# Loss helpers (plain-JAX glue, semantics match the torch losses used)
# ----------------------------------------------------------------------------
def _log_sigmoid(x):
    return -jax.nn.softplus(-x)


def ce_none_ignore(logits, labels, ignore_index=-1):
    # nn.CrossEntropyLoss(ignore_index=-1, reduction='none')
    ls = jax.nn.log_softmax(logits, axis=-1)
    safe = jnp.where(labels == ignore_index, 0, labels).astype(jnp.int32)
    nll = -jnp.take_along_axis(ls, safe[:, None], axis=-1)[:, 0]
    return jnp.where(labels == ignore_index, 0.0, nll)


def ce_mean_ignore(logits, labels, ignore_index=-1):
    # nn.CrossEntropyLoss(ignore_index=-1)  (mean over non-ignored)
    per = ce_none_ignore(logits, labels, ignore_index)
    cnt = jnp.sum((labels != ignore_index).astype(jnp.float32))
    return jnp.sum(per) / cnt


def bce_with_logits_pos_weight(logits, labels, pos_weight):
    # nn.BCEWithLogitsLoss(pos_weight=w, reduction='none')
    return (pos_weight * labels * jax.nn.softplus(-logits)
            + (1.0 - labels) * jax.nn.softplus(logits))


def multilabel_soft_margin(logits, labels):
    # nn.MultiLabelSoftMarginLoss() (no class weight, mean reduction)
    per = -(labels * _log_sigmoid(logits) + (1.0 - labels) * _log_sigmoid(-logits))
    return jnp.mean(jnp.mean(per, axis=-1))


# ----------------------------------------------------------------------------
# Model definition (parameters + forward)
# ----------------------------------------------------------------------------
TASK_DIMS = {            # do_eicu=False
    "disch_24h": 20,
    "disch_48h": 20,
    "Final Acuity Outcome": 20,
    "tasks_binary_multilabel": 26,
    "next_timepoint": 56,
    "next_timepoint_was_measured": 56,
    "masked_imputation": 56 * 2,
}
TASK_PERMITS_MISSINGNESS = {"disch_24h", "disch_48h", "tasks_binary_multilabel"}
TASK_LOSS_KEYS = ["disch_24h", "disch_48h", "Final Acuity Outcome",
                  "tasks_binary_multilabel", "next_timepoint_was_measured"]


def init_params(key, feat_dim, hidden_dim, hidden_size):
    keys = jax.random.split(key, 40)
    it = iter(keys)

    def unif(k, shape, fan):
        bound = 1.0 / jnp.sqrt(jnp.asarray(fan, jnp.float32))
        return jax.random.uniform(k, shape, jnp.float32, -bound, bound)

    H = hidden_dim
    Hp = _round_up(max(H, _LANES), _LANES)
    HS = hidden_size
    HSp = _round_up(max(HS, _LANES), _LANES)
    Fp = _round_up(max(feat_dim, _LANES), _LANES)

    def pad_gate_cols(w):           # [in, 3H] -> [in, 3*Hp], per-gate zero pad
        fin = w.shape[0]
        return jnp.pad(w.reshape(fin, 3, H),
                       ((0, 0), (0, 0), (0, Hp - H))).reshape(fin, 3 * Hp)

    def pad_rows(w, rows):          # zero-pad contraction rows
        return jnp.pad(w, ((0, rows - w.shape[0]), (0, 0)))

    params = {"hidden_dim": H, "hidden_dim_p": Hp,
              "hidden_size": HS, "hidden_size_p": HSp}

    # GRU layer 0 (input feat_dim) and layer 1 (input H); gate order r,z,n.
    wih0 = unif(next(it), (feat_dim, 3 * H), H)
    whh0 = unif(next(it), (H, 3 * H), H)
    bih0 = unif(next(it), (1, 3 * H), H)
    bhh0 = unif(next(it), (1, 3 * H), H)
    wih1 = unif(next(it), (H, 3 * H), H)
    whh1 = unif(next(it), (H, 3 * H), H)
    bih1 = unif(next(it), (1, 3 * H), H)
    bhh1 = unif(next(it), (1, 3 * H), H)

    # matmul operands stored in bf16 (MXU-native on v5e/v6e/v7x); biases f32.
    params["wih0_p"] = pad_rows(pad_gate_cols(wih0), Fp).astype(jnp.bfloat16)
    params["whh0_p"] = pad_rows(pad_gate_cols(whh0), Hp).astype(jnp.bfloat16)
    params["bih0_p"] = pad_gate_cols(bih0)
    params["bhh0_p"] = pad_gate_cols(bhh0)
    params["wih1_p"] = pad_rows(pad_gate_cols(wih1), Hp).astype(jnp.bfloat16)
    params["whh1_p"] = pad_rows(pad_gate_cols(whh1), Hp).astype(jnp.bfloat16)
    params["bih1_p"] = pad_gate_cols(bih1)
    params["bhh1_p"] = pad_gate_cols(bhh1)

    # fc_stack: fc_layer_sizes=[] -> single Linear(hidden_dim -> hidden_size)
    fc_w = unif(next(it), (H, HS), H)
    fc_b = unif(next(it), (1, HS), H)
    params["fc_w_p"] = jnp.pad(fc_w, ((0, Hp - H), (0, HSp - HS))).astype(jnp.bfloat16)
    params["fc_b_p"] = jnp.pad(fc_b, ((0, 0), (0, HSp - HS)))

    # task heads: Linear(hidden_size -> d), kept unpadded; padded/concat per call
    heads = {}
    for t, d in TASK_DIMS.items():
        heads[t] = (unif(next(it), (HS, d), HS),
                    unif(next(it), (1, d), HS))
    params["task_heads"] = heads
    return params


def build_heads_cat(params, tasks):
    """Concatenate the task-head Linears along the output dim, lane-padded."""
    HS = params["hidden_size"]
    HSp = params["hidden_size_p"]
    ws, bs, slices = [], [], {}
    off = 0
    for t in tasks:
        w, b = params["task_heads"][t]
        ws.append(w)
        bs.append(b)
        slices[t] = (off, w.shape[1])
        off += w.shape[1]
    D = off
    Dp = _round_up(max(D, _LANES), _LANES)
    w_cat = jnp.concatenate(ws, axis=1)
    b_cat = jnp.concatenate(bs, axis=1)
    heads_w = (jnp.zeros((HSp, Dp), jnp.float32).at[:HS, :D].set(w_cat)
               .astype(jnp.bfloat16))
    heads_b = jnp.zeros((1, Dp), jnp.float32).at[:, :D].set(b_cat)
    return heads_w, heads_b, slices


def gru_model_forward(dfs, params, task_class_weights, task_weights,
                      pooling_method="last", tuning=False):
    dfs = dict(dfs)
    for k in ("ts", "statics", "next_timepoint_was_measured", "next_timepoint",
              "tasks_binary_multilabel", "ts_vals", "ts_is_measured", "ts_mask"):
        if k in dfs:
            dfs[k] = dfs[k].astype(jnp.float32)
    for k in ("disch_24h", "disch_48h", "Final Acuity Outcome", "rolling_ftseq"):
        if k in dfs:
            # Mirrors torch's .squeeze().long() (including the B==1 collapse).
            dfs[k] = jnp.squeeze(dfs[k]).astype(jnp.int32)

    x = dfs["input_sequence"].astype(jnp.float32)         # [B, T, F]
    B = x.shape[0]

    # ---- which task heads apply (intersection with provided labels) ----
    task_labels = {k: v for k, v in dfs.items()
                   if k not in ("statics", "ts", "rolling_ftseq", "ts_mask")
                   and v is not None}
    tasks = [t for t in params["task_heads"] if t in task_labels]
    heads_w, heads_b, head_slices = build_heads_cat(params, tasks)

    # ---- fused Pallas encoder: GRU + pooling + fc_stack + all heads ----
    pooled_p, logits_p = run_encoder(x, params, heads_w, heads_b, pooling_method)
    pooled_output = pooled_p[:, :params["hidden_size"]]
    task_logits = {t: logits_p[:, off:off + d]
                   for t, (off, d) in head_slices.items()}
    # NOTE: torch also computes unpooled_output = fc_stack(out_unpooled); it is
    # only consumed by masked_imputation (weight 0) so the dead work is skipped.

    # ---- losses (glue in plain JAX) ----
    task_losses = {}
    weights_sum = 0.0
    common = [t for t in TASK_LOSS_KEYS
              if t in task_logits and t in dfs and t in task_weights]
    for task in common:
        weight = task_weights[task]
        if tuning and weight < 0:
            weight = 0
        weights_sum += abs(weight)
        logits = task_logits[task]
        labels = dfs[task]
        if task in TASK_PERMITS_MISSINGNESS:
            if task in ("disch_24h", "disch_48h"):
                # integer labels: isnan is all-False; ignore_index=-1 in CE
                loss = jnp.mean(ce_none_ignore(logits, labels))
            elif task == "tasks_binary_multilabel":
                isnan = jnp.isnan(labels)
                labels_s = jnp.where(isnan, jnp.zeros_like(labels), labels)
                w = task_class_weights["tasks_binary_multilabel"]
                # NOTE: the reference TaskBinaryMultilabelLoss applies the class
                # weight twice (pos_weight inside BCE, then an elementwise
                # multiply); replicated verbatim for parity.
                per = bce_with_logits_pos_weight(logits, labels_s, w) * w[None, :]
                per = jnp.where(isnan, jnp.zeros_like(logits), per)
                mask = (w > 0) if tuning else (w != 0)
                loss = jnp.mean(mask.astype(jnp.float32) * per)
            loss = weight * loss
        else:
            if task == "Final Acuity Outcome":
                loss = weight * ce_mean_ignore(logits, labels)
            elif task == "next_timepoint_was_measured":
                loss = weight * multilabel_soft_margin(logits, labels)
        task_losses[task] = loss

    # 'rolling_ftseq' branch skipped (see TODO at top)

    if "next_timepoint_was_measured" in dfs:
        weights_sum += abs(task_weights["next_timepoint"])
        recst = (dfs["next_timepoint"] - task_logits["next_timepoint"]) ** 2
        recst = recst * dfs["next_timepoint_was_measured"]
        n_meas = dfs["next_timepoint_was_measured"].sum(axis=1)
        n_meas = jnp.where(n_meas == 0, jnp.ones_like(n_meas), n_meas)
        recst = recst.sum(axis=1) / n_meas
        recst = recst.sum(axis=0)
        # Torch literally does `0 * recst_loss` here (while still adding the
        # task weight to weights_sum); kept verbatim for parity.
        task_losses["next_timepoint"] = 0.0 * recst

    # masked_imputation: weight == 0 -> skipped (same condition as torch)

    total_loss = None
    for l in task_losses.values():
        total_loss = l if total_loss is None else total_loss + l
    total_loss = total_loss / weights_sum

    out_data = {t: (task_logits[t], dfs[t], task_losses[t]) for t in tasks}
    return None, pooled_output, out_data, total_loss


# ----------------------------------------------------------------------------
# Driver
# ----------------------------------------------------------------------------
if __name__ == "__main__":
    B, T, F, H, HIDDEN_SIZE = 2, 8, 16, 32, 32

    key = jax.random.PRNGKey(0)
    k_param, k_x, k_bm, k_nt, k_ntm = jax.random.split(key, 5)
    params = init_params(k_param, F, H, HIDDEN_SIZE)

    tbm = (jax.random.uniform(k_bm, (B, 26)) > 0.5).astype(jnp.float32)
    tbm = tbm.at[0, 2].set(jnp.nan)  # exercise missingness handling

    dfs = {
        "input_sequence": jax.random.normal(k_x, (B, T, F), jnp.float32),
        "disch_24h": jnp.array([3, -1], jnp.int32),
        "disch_48h": jnp.array([-1, 7], jnp.int32),
        "Final Acuity Outcome": jnp.array([2, 5], jnp.int32),
        "tasks_binary_multilabel": tbm,
        "next_timepoint": jax.random.normal(k_nt, (B, 56), jnp.float32),
        "next_timepoint_was_measured":
            (jax.random.uniform(k_ntm, (B, 56)) > 0.5).astype(jnp.float32),
    }

    tbm_w = jnp.ones((26,), jnp.float32).at[3].set(0.0).at[0].set(2.0)
    task_class_weights = {"tasks_binary_multilabel": tbm_w}

    task_weights = {t: 1 for t in TASK_DIMS}
    task_weights["rolling_ftseq"] = 1
    task_weights["masked_imputation"] = 0

    _, pooled_output, out_data, total_loss = gru_model_forward(
        dfs, params, task_class_weights, task_weights,
        pooling_method="last", tuning=False)

    jax.block_until_ready(pooled_output)
    total_loss = jax.block_until_ready(total_loss)
    assert pooled_output.shape == (B, HIDDEN_SIZE)
    assert bool(jnp.isfinite(total_loss)), "non-finite total loss"
    print("KERNEL_OK")
</pallas_src>

<mosaic_0001>
module attributes {stable_mosaic.version = 11 : i64} {
  func.func @gru_fused_kernel(%arg0: i32, %arg1: memref<64x128xbf16, #tpu.memory_space<vmem>>, %arg2: memref<128x384xbf16, #tpu.memory_space<vmem>>, %arg3: memref<128x384xbf16, #tpu.memory_space<vmem>>, %arg4: memref<1x384xf32, #tpu.memory_space<vmem>>, %arg5: memref<1x384xf32, #tpu.memory_space<vmem>>, %arg6: memref<128x384xbf16, #tpu.memory_space<vmem>>, %arg7: memref<128x384xbf16, #tpu.memory_space<vmem>>, %arg8: memref<1x384xf32, #tpu.memory_space<vmem>>, %arg9: memref<1x384xf32, #tpu.memory_space<vmem>>, %arg10: memref<128x128xbf16, #tpu.memory_space<vmem>>, %arg11: memref<1x128xf32, #tpu.memory_space<vmem>>, %arg12: memref<128x256xbf16, #tpu.memory_space<vmem>>, %arg13: memref<1x256xf32, #tpu.memory_space<vmem>>, %arg14: memref<8x128xf32, #tpu.memory_space<vmem>>, %arg15: memref<8x256xf32, #tpu.memory_space<vmem>>, %arg16: memref<64x384xf32, #tpu.memory_space<vmem>>, %arg17: memref<8x128xf32, #tpu.memory_space<vmem>>, %arg18: memref<8x128xf32, #tpu.memory_space<vmem>>, %arg19: memref<8x128xf32, #tpu.memory_space<vmem>>) attributes {dimension_semantics = [#tpu.dimension_semantics<arbitrary>], iteration_bounds = array<i64: 1>, scalar_prefetch = 0 : i64, scratch_operands = 4 : i64, tpu.core_type = #tpu.core_type<tc>, window_params = [{transform_indices = @transform_0, window_bounds = array<i64: 64, 128>}, {pipeline_mode = #tpu.pipeline_mode<synchronous>, transform_indices = @transform_1, window_bounds = array<i64: 128, 384>}, {pipeline_mode = #tpu.pipeline_mode<synchronous>, transform_indices = @transform_2, window_bounds = array<i64: 128, 384>}, {pipeline_mode = #tpu.pipeline_mode<synchronous>, transform_indices = @transform_3, window_bounds = array<i64: 1, 384>}, {pipeline_mode = #tpu.pipeline_mode<synchronous>, transform_indices = @transform_4, window_bounds = array<i64: 1, 384>}, {pipeline_mode = #tpu.pipeline_mode<synchronous>, transform_indices = @transform_5, window_bounds = array<i64: 128, 384>}, {pipeline_mode = #tpu.pipeline_mode<synchronous>, transform_indices = @transform_6, window_bounds = array<i64: 128, 384>}, {pipeline_mode = #tpu.pipeline_mode<synchronous>, transform_indices = @transform_7, window_bounds = array<i64: 1, 384>}, {pipeline_mode = #tpu.pipeline_mode<synchronous>, transform_indices = @transform_8, window_bounds = array<i64: 1, 384>}, {pipeline_mode = #tpu.pipeline_mode<synchronous>, transform_indices = @transform_9, window_bounds = array<i64: 128, 128>}, {pipeline_mode = #tpu.pipeline_mode<synchronous>, transform_indices = @transform_10, window_bounds = array<i64: 1, 128>}, {pipeline_mode = #tpu.pipeline_mode<synchronous>, transform_indices = @transform_11, window_bounds = array<i64: 128, 256>}, {pipeline_mode = #tpu.pipeline_mode<synchronous>, transform_indices = @transform_12, window_bounds = array<i64: 1, 256>}, {pipeline_mode = #tpu.pipeline_mode<synchronous>, transform_indices = @transform_13, window_bounds = array<i64: 8, 128>}, {pipeline_mode = #tpu.pipeline_mode<synchronous>, transform_indices = @transform_14, window_bounds = array<i64: 8, 256>}]} {
    %c0_i32 = arith.constant 0 : i32
    %0 = arith.cmpi eq, %arg0, %c0_i32 : i32
    %1 = arith.extui %0 : i1 to i32
    %c0_i32_0 = arith.constant 0 : i32
    %2 = arith.cmpi ne, %1, %c0_i32_0 : i32
    scf.if %2 {
      %cst_203 = arith.constant 0.000000e+00 : f32
      %609 = vector.broadcast %cst_203 : f32 to vector<8x128xf32>
      %c0_204 = arith.constant 0 : index
      %c0_205 = arith.constant 0 : index
      %610 = vector.load %arg17[%c0_204, %c0_205] : memref<8x128xf32, #tpu.memory_space<vmem>>, vector<8x128xf32>
      tpu.vector_store %arg17[%c0_204, %c0_205], %609 {strides = array<i32>} : memref<8x128xf32, #tpu.memory_space<vmem>>, vector<8x128xf32>,
      %cst_206 = arith.constant 0.000000e+00 : f32
      %611 = vector.broadcast %cst_206 : f32 to vector<8x128xf32>
      %c0_207 = arith.constant 0 : index
      %c0_208 = arith.constant 0 : index
      %612 = vector.load %arg18[%c0_207, %c0_208] : memref<8x128xf32, #tpu.memory_space<vmem>>, vector<8x128xf32>
      tpu.vector_store %arg18[%c0_207, %c0_208], %611 {strides = array<i32>} : memref<8x128xf32, #tpu.memory_space<vmem>>, vector<8x128xf32>,
    } else {
    }
    %c0 = arith.constant 0 : index
    %c0_1 = arith.constant 0 : index
    %3 = vector.load %arg1[%c0, %c0_1] : memref<64x128xbf16, #tpu.memory_space<vmem>>, vector<64x128xbf16>
    %c0_2 = arith.constant 0 : index
    %c0_3 = arith.constant 0 : index
    %4 = vector.load %arg2[%c0_2, %c0_3] : memref<128x384xbf16, #tpu.memory_space<vmem>>, vector<128x384xbf16>
    %cst = arith.constant dense<0.000000e+00> : vector<64x384xf32>
    %5 = tpu.matmul %3, %4, %cst {dimension_numbers = #tpu.dot_dimension_numbers<[1], [0], [0], [1], [0, 0, 1, 1], [], []>} : vector<64x128xbf16>, vector<128x384xbf16>, vector<64x384xf32> -> vector<64x384xf32>
    %c0_4 = arith.constant 0 : index
    %c0_5 = arith.constant 0 : index
    %6 = vector.load %arg4[%c0_4, %c0_5] : memref<1x384xf32, #tpu.memory_space<vmem>>, vector<1x384xf32>
    %7 = vector.broadcast %6 : vector<1x384xf32> to vector<64x384xf32>
    %8 = arith.addf %5, %7 : vector<64x384xf32>
    %c0_6 = arith.constant 0 : index
    %c0_7 = arith.constant 0 : index
    %9 = vector.load %arg16[%c0_6, %c0_7] : memref<64x384xf32, #tpu.memory_space<vmem>>, vector<64x384xf32>
    tpu.vector_store %arg16[%c0_6, %c0_7], %8 {strides = array<i32>} : memref<64x384xf32, #tpu.memory_space<vmem>>, vector<64x384xf32>,
    %c0_8 = arith.constant 0 : index
    %c0_9 = arith.constant 0 : index
    %10 = vector.load %arg17[%c0_8, %c0_9] : memref<8x128xf32, #tpu.memory_space<vmem>>, vector<8x128xf32>
    %c0_10 = arith.constant 0 : index
    %c0_11 = arith.constant 0 : index
    %11 = vector.load %arg18[%c0_10, %c0_11] : memref<8x128xf32, #tpu.memory_space<vmem>>, vector<8x128xf32>
    %c0_i32_12 = arith.constant 0 : i32
    %c8_i32 = arith.constant 8 : i32
    %12 = arith.muli %c0_i32_12, %c8_i32 : i32
    %13 = tpu.assume_multiple %12, 8 : i32
    %14 = arith.index_cast %13 : i32 to index
    %c0_13 = arith.constant 0 : index
    %15 = vector.load %arg16[%14, %c0_13] : memref<64x384xf32, #tpu.memory_space<vmem>>, vector<8x384xf32>
    %16 = arith.truncf %10 : vector<8x128xf32> to vector<8x128xbf16>
    %c0_14 = arith.constant 0 : index
    %c0_15 = arith.constant 0 : index
    %17 = vector.load %arg3[%c0_14, %c0_15] : memref<128x384xbf16, #tpu.memory_space<vmem>>, vector<128x384xbf16>
    %cst_16 = arith.constant dense<0.000000e+00> : vector<8x384xf32>
    %18 = tpu.matmul %16, %17, %cst_16 {dimension_numbers = #tpu.dot_dimension_numbers<[1], [0], [0], [1], [0, 0, 1, 1], [], []>} : vector<8x128xbf16>, vector<128x384xbf16>, vector<8x384xf32> -> vector<8x384xf32>
    %c0_17 = arith.constant 0 : index
    %c0_18 = arith.constant 0 : index
    %19 = vector.load %arg5[%c0_17, %c0_18] : memref<1x384xf32, #tpu.memory_space<vmem>>, vector<1x384xf32>
    %20 = vector.broadcast %19 : vector<1x384xf32> to vector<8x384xf32>
    %21 = arith.addf %18, %20 : vector<8x384xf32>
    %22 = vector.extract_strided_slice %15 {offsets = [0, 0], sizes = [8, 128], strides = [1, 1]} : vector<8x384xf32> to vector<8x128xf32>
    %23 = vector.extract_strided_slice %21 {offsets = [0, 0], sizes = [8, 128], strides = [1, 1]} : vector<8x384xf32> to vector<8x128xf32>
    %24 = arith.addf %22, %23 : vector<8x128xf32>
    %25 = arith.negf %24 : vector<8x128xf32>
    %26 = math.exp %25 : vector<8x128xf32>
    %cst_19 = arith.constant 1.000000e+00 : f32
    %27 = vector.broadcast %cst_19 : f32 to vector<8x128xf32>
    %28 = arith.addf %27, %26 : vector<8x128xf32>
    %29 = arith.divf %27, %28 : vector<8x128xf32>
    %30 = vector.extract_strided_slice %15 {offsets = [0, 128], sizes = [8, 128], strides = [1, 1]} : vector<8x384xf32> to vector<8x128xf32>
    %31 = vector.extract_strided_slice %21 {offsets = [0, 128], sizes = [8, 128], strides = [1, 1]} : vector<8x384xf32> to vector<8x128xf32>
    %32 = arith.addf %30, %31 : vector<8x128xf32>
    %33 = arith.negf %32 : vector<8x128xf32>
    %34 = math.exp %33 : vector<8x128xf32>
    %cst_20 = arith.constant 1.000000e+00 : f32
    %35 = vector.broadcast %cst_20 : f32 to vector<8x128xf32>
    %36 = arith.addf %35, %34 : vector<8x128xf32>
    %37 = arith.divf %35, %36 : vector<8x128xf32>
    %38 = vector.extract_strided_slice %15 {offsets = [0, 256], sizes = [8, 128], strides = [1, 1]} : vector<8x384xf32> to vector<8x128xf32>
    %39 = vector.extract_strided_slice %21 {offsets = [0, 256], sizes = [8, 128], strides = [1, 1]} : vector<8x384xf32> to vector<8x128xf32>
    %40 = arith.mulf %29, %39 : vector<8x128xf32>
    %41 = arith.addf %38, %40 : vector<8x128xf32>
    %42 = math.tanh %41 : vector<8x128xf32>
    %cst_21 = arith.constant 1.000000e+00 : f32
    %43 = vector.broadcast %cst_21 : f32 to vector<8x128xf32>
    %44 = arith.subf %43, %37 : vector<8x128xf32>
    %45 = arith.mulf %44, %42 : vector<8x128xf32>
    %46 = arith.mulf %37, %10 : vector<8x128xf32>
    %47 = arith.addf %45, %46 : vector<8x128xf32>
    %48 = arith.truncf %47 : vector<8x128xf32> to vector<8x128xbf16>
    %c0_22 = arith.constant 0 : index
    %c0_23 = arith.constant 0 : index
    %49 = vector.load %arg6[%c0_22, %c0_23] : memref<128x384xbf16, #tpu.memory_space<vmem>>, vector<128x384xbf16>
    %cst_24 = arith.constant dense<0.000000e+00> : vector<8x384xf32>
    %50 = tpu.matmul %48, %49, %cst_24 {dimension_numbers = #tpu.dot_dimension_numbers<[1], [0], [0], [1], [0, 0, 1, 1], [], []>} : vector<8x128xbf16>, vector<128x384xbf16>, vector<8x384xf32> -> vector<8x384xf32>
    %c0_25 = arith.constant 0 : index
    %c0_26 = arith.constant 0 : index
    %51 = vector.load %arg8[%c0_25, %c0_26] : memref<1x384xf32, #tpu.memory_space<vmem>>, vector<1x384xf32>
    %52 = vector.broadcast %51 : vector<1x384xf32> to vector<8x384xf32>
    %53 = arith.addf %50, %52 : vector<8x384xf32>
    %54 = arith.truncf %11 : vector<8x128xf32> to vector<8x128xbf16>
    %c0_27 = arith.constant 0 : index
    %c0_28 = arith.constant 0 : index
    %55 = vector.load %arg7[%c0_27, %c0_28] : memref<128x384xbf16, #tpu.memory_space<vmem>>, vector<128x384xbf16>
    %cst_29 = arith.constant dense<0.000000e+00> : vector<8x384xf32>
    %56 = tpu.matmul %54, %55, %cst_29 {dimension_numbers = #tpu.dot_dimension_numbers<[1], [0], [0], [1], [0, 0, 1, 1], [], []>} : vector<8x128xbf16>, vector<128x384xbf16>, vector<8x384xf32> -> vector<8x384xf32>
    %c0_30 = arith.constant 0 : index
    %c0_31 = arith.constant 0 : index
    %57 = vector.load %arg9[%c0_30, %c0_31] : memref<1x384xf32, #tpu.memory_space<vmem>>, vector<1x384xf32>
    %58 = vector.broadcast %57 : vector<1x384xf32> to vector<8x384xf32>
    %59 = arith.addf %56, %58 : vector<8x384xf32>
    %60 = vector.extract_strided_slice %53 {offsets = [0, 0], sizes = [8, 128], strides = [1, 1]} : vector<8x384xf32> to vector<8x128xf32>
    %61 = vector.extract_strided_slice %59 {offsets = [0, 0], sizes = [8, 128], strides = [1, 1]} : vector<8x384xf32> to vector<8x128xf32>
    %62 = arith.addf %60, %61 : vector<8x128xf32>
    %63 = arith.negf %62 : vector<8x128xf32>
    %64 = math.exp %63 : vector<8x128xf32>
    %cst_32 = arith.constant 1.000000e+00 : f32
    %65 = vector.broadcast %cst_32 : f32 to vector<8x128xf32>
    %66 = arith.addf %65, %64 : vector<8x128xf32>
    %67 = arith.divf %65, %66 : vector<8x128xf32>
    %68 = vector.extract_strided_slice %53 {offsets = [0, 128], sizes = [8, 128], strides = [1, 1]} : vector<8x384xf32> to vector<8x128xf32>
    %69 = vector.extract_strided_slice %59 {offsets = [0, 128], sizes = [8, 128], strides = [1, 1]} : vector<8x384xf32> to vector<8x128xf32>
    %70 = arith.addf %68, %69 : vector<8x128xf32>
    %71 = arith.negf %70 : vector<8x128xf32>
    %72 = math.exp %71 : vector<8x128xf32>
    %cst_33 = arith.constant 1.000000e+00 : f32
    %73 = vector.broadcast %cst_33 : f32 to vector<8x128xf32>
    %74 = arith.addf %73, %72 : vector<8x128xf32>
    %75 = arith.divf %73, %74 : vector<8x128xf32>
    %76 = vector.extract_strided_slice %53 {offsets = [0, 256], sizes = [8, 128], strides = [1, 1]} : vector<8x384xf32> to vector<8x128xf32>
    %77 = vector.extract_strided_slice %59 {offsets = [0, 256], sizes = [8, 128], strides = [1, 1]} : vector<8x384xf32> to vector<8x128xf32>
    %78 = arith.mulf %67, %77 : vector<8x128xf32>
    %79 = arith.addf %76, %78 : vector<8x128xf32>
    %80 = math.tanh %79 : vector<8x128xf32>
    %cst_34 = arith.constant 1.000000e+00 : f32
    %81 = vector.broadcast %cst_34 : f32 to vector<8x128xf32>
    %82 = arith.subf %81, %75 : vector<8x128xf32>
    %83 = arith.mulf %82, %80 : vector<8x128xf32>
    %84 = arith.mulf %75, %11 : vector<8x128xf32>
    %85 = arith.addf %83, %84 : vector<8x128xf32>
    %c1_i32 = arith.constant 1 : i32
    %c8_i32_35 = arith.constant 8 : i32
    %86 = arith.muli %c1_i32, %c8_i32_35 : i32
    %87 = tpu.assume_multiple %86, 8 : i32
    %88 = arith.index_cast %87 : i32 to index
    %c0_36 = arith.constant 0 : index
    %89 = vector.load %arg16[%88, %c0_36] : memref<64x384xf32, #tpu.memory_space<vmem>>, vector<8x384xf32>
    %90 = arith.truncf %47 : vector<8x128xf32> to vector<8x128xbf16>
    %c0_37 = arith.constant 0 : index
    %c0_38 = arith.constant 0 : index
    %91 = vector.load %arg3[%c0_37, %c0_38] : memref<128x384xbf16, #tpu.memory_space<vmem>>, vector<128x384xbf16>
    %cst_39 = arith.constant dense<0.000000e+00> : vector<8x384xf32>
    %92 = tpu.matmul %90, %91, %cst_39 {dimension_numbers = #tpu.dot_dimension_numbers<[1], [0], [0], [1], [0, 0, 1, 1], [], []>} : vector<8x128xbf16>, vector<128x384xbf16>, vector<8x384xf32> -> vector<8x384xf32>
    %c0_40 = arith.constant 0 : index
    %c0_41 = arith.constant 0 : index
    %93 = vector.load %arg5[%c0_40, %c0_41] : memref<1x384xf32, #tpu.memory_space<vmem>>, vector<1x384xf32>
    %94 = vector.broadcast %93 : vector<1x384xf32> to vector<8x384xf32>
    %95 = arith.addf %92, %94 : vector<8x384xf32>
    %96 = vector.extract_strided_slice %89 {offsets = [0, 0], sizes = [8, 128], strides = [1, 1]} : vector<8x384xf32> to vector<8x128xf32>
    %97 = vector.extract_strided_slice %95 {offsets = [0, 0], sizes = [8, 128], strides = [1, 1]} : vector<8x384xf32> to vector<8x128xf32>
    %98 = arith.addf %96, %97 : vector<8x128xf32>
    %99 = arith.negf %98 : vector<8x128xf32>
    %100 = math.exp %99 : vector<8x128xf32>
    %cst_42 = arith.constant 1.000000e+00 : f32
    %101 = vector.broadcast %cst_42 : f32 to vector<8x128xf32>
    %102 = arith.addf %101, %100 : vector<8x128xf32>
    %103 = arith.divf %101, %102 : vector<8x128xf32>
    %104 = vector.extract_strided_slice %89 {offsets = [0, 128], sizes = [8, 128], strides = [1, 1]} : vector<8x384xf32> to vector<8x128xf32>
    %105 = vector.extract_strided_slice %95 {offsets = [0, 128], sizes = [8, 128], strides = [1, 1]} : vector<8x384xf32> to vector<8x128xf32>
    %106 = arith.addf %104, %105 : vector<8x128xf32>
    %107 = arith.negf %106 : vector<8x128xf32>
    %108 = math.exp %107 : vector<8x128xf32>
    %cst_43 = arith.constant 1.000000e+00 : f32
    %109 = vector.broadcast %cst_43 : f32 to vector<8x128xf32>
    %110 = arith.addf %109, %108 : vector<8x128xf32>
    %111 = arith.divf %109, %110 : vector<8x128xf32>
    %112 = vector.extract_strided_slice %89 {offsets = [0, 256], sizes = [8, 128], strides = [1, 1]} : vector<8x384xf32> to vector<8x128xf32>
    %113 = vector.extract_strided_slice %95 {offsets = [0, 256], sizes = [8, 128], strides = [1, 1]} : vector<8x384xf32> to vector<8x128xf32>
    %114 = arith.mulf %103, %113 : vector<8x128xf32>
    %115 = arith.addf %112, %114 : vector<8x128xf32>
    %116 = math.tanh %115 : vector<8x128xf32>
    %cst_44 = arith.constant 1.000000e+00 : f32
    %117 = vector.broadcast %cst_44 : f32 to vector<8x128xf32>
    %118 = arith.subf %117, %111 : vector<8x128xf32>
    %119 = arith.mulf %118, %116 : vector<8x128xf32>
    %120 = arith.mulf %111, %47 : vector<8x128xf32>
    %121 = arith.addf %119, %120 : vector<8x128xf32>
    %122 = arith.truncf %121 : vector<8x128xf32> to vector<8x128xbf16>
    %c0_45 = arith.constant 0 : index
    %c0_46 = arith.constant 0 : index
    %123 = vector.load %arg6[%c0_45, %c0_46] : memref<128x384xbf16, #tpu.memory_space<vmem>>, vector<128x384xbf16>
    %cst_47 = arith.constant dense<0.000000e+00> : vector<8x384xf32>
    %124 = tpu.matmul %122, %123, %cst_47 {dimension_numbers = #tpu.dot_dimension_numbers<[1], [0], [0], [1], [0, 0, 1, 1], [], []>} : vector<8x128xbf16>, vector<128x384xbf16>, vector<8x384xf32> -> vector<8x384xf32>
    %c0_48 = arith.constant 0 : index
    %c0_49 = arith.constant 0 : index
    %125 = vector.load %arg8[%c0_48, %c0_49] : memref<1x384xf32, #tpu.memory_space<vmem>>, vector<1x384xf32>
    %126 = vector.broadcast %125 : vector<1x384xf32> to vector<8x384xf32>
    %127 = arith.addf %124, %126 : vector<8x384xf32>
    %128 = arith.truncf %85 : vector<8x128xf32> to vector<8x128xbf16>
    %c0_50 = arith.constant 0 : index
    %c0_51 = arith.constant 0 : index
    %129 = vector.load %arg7[%c0_50, %c0_51] : memref<128x384xbf16, #tpu.memory_space<vmem>>, vector<128x384xbf16>
    %cst_52 = arith.constant dense<0.000000e+00> : vector<8x384xf32>
    %130 = tpu.matmul %128, %129, %cst_52 {dimension_numbers = #tpu.dot_dimension_numbers<[1], [0], [0], [1], [0, 0, 1, 1], [], []>} : vector<8x128xbf16>, vector<128x384xbf16>, vector<8x384xf32> -> vector<8x384xf32>
    %c0_53 = arith.constant 0 : index
    %c0_54 = arith.constant 0 : index
    %131 = vector.load %arg9[%c0_53, %c0_54] : memref<1x384xf32, #tpu.memory_space<vmem>>, vector<1x384xf32>
    %132 = vector.broadcast %131 : vector<1x384xf32> to vector<8x384xf32>
    %133 = arith.addf %130, %132 : vector<8x384xf32>
    %134 = vector.extract_strided_slice %127 {offsets = [0, 0], sizes = [8, 128], strides = [1, 1]} : vector<8x384xf32> to vector<8x128xf32>
    %135 = vector.extract_strided_slice %133 {offsets = [0, 0], sizes = [8, 128], strides = [1, 1]} : vector<8x384xf32> to vector<8x128xf32>
    %136 = arith.addf %134, %135 : vector<8x128xf32>
    %137 = arith.negf %136 : vector<8x128xf32>
    %138 = math.exp %137 : vector<8x128xf32>
    %cst_55 = arith.constant 1.000000e+00 : f32
    %139 = vector.broadcast %cst_55 : f32 to vector<8x128xf32>
    %140 = arith.addf %139, %138 : vector<8x128xf32>
    %141 = arith.divf %139, %140 : vector<8x128xf32>
    %142 = vector.extract_strided_slice %127 {offsets = [0, 128], sizes = [8, 128], strides = [1, 1]} : vector<8x384xf32> to vector<8x128xf32>
    %143 = vector.extract_strided_slice %133 {offsets = [0, 128], sizes = [8, 128], strides = [1, 1]} : vector<8x384xf32> to vector<8x128xf32>
    %144 = arith.addf %142, %143 : vector<8x128xf32>
    %145 = arith.negf %144 : vector<8x128xf32>
    %146 = math.exp %145 : vector<8x128xf32>
    %cst_56 = arith.constant 1.000000e+00 : f32
    %147 = vector.broadcast %cst_56 : f32 to vector<8x128xf32>
    %148 = arith.addf %147, %146 : vector<8x128xf32>
    %149 = arith.divf %147, %148 : vector<8x128xf32>
    %150 = vector.extract_strided_slice %127 {offsets = [0, 256], sizes = [8, 128], strides = [1, 1]} : vector<8x384xf32> to vector<8x128xf32>
    %151 = vector.extract_strided_slice %133 {offsets = [0, 256], sizes = [8, 128], strides = [1, 1]} : vector<8x384xf32> to vector<8x128xf32>
    %152 = arith.mulf %141, %151 : vector<8x128xf32>
    %153 = arith.addf %150, %152 : vector<8x128xf32>
    %154 = math.tanh %153 : vector<8x128xf32>
    %cst_57 = arith.constant 1.000000e+00 : f32
    %155 = vector.broadcast %cst_57 : f32 to vector<8x128xf32>
    %156 = arith.subf %155, %149 : vector<8x128xf32>
    %157 = arith.mulf %156, %154 : vector<8x128xf32>
    %158 = arith.mulf %149, %85 : vector<8x128xf32>
    %159 = arith.addf %157, %158 : vector<8x128xf32>
    %c2_i32 = arith.constant 2 : i32
    %c8_i32_58 = arith.constant 8 : i32
    %160 = arith.muli %c2_i32, %c8_i32_58 : i32
    %161 = tpu.assume_multiple %160, 8 : i32
    %162 = arith.index_cast %161 : i32 to index
    %c0_59 = arith.constant 0 : index
    %163 = vector.load %arg16[%162, %c0_59] : memref<64x384xf32, #tpu.memory_space<vmem>>, vector<8x384xf32>
    %164 = arith.truncf %121 : vector<8x128xf32> to vector<8x128xbf16>
    %c0_60 = arith.constant 0 : index
    %c0_61 = arith.constant 0 : index
    %165 = vector.load %arg3[%c0_60, %c0_61] : memref<128x384xbf16, #tpu.memory_space<vmem>>, vector<128x384xbf16>
    %cst_62 = arith.constant dense<0.000000e+00> : vector<8x384xf32>
    %166 = tpu.matmul %164, %165, %cst_62 {dimension_numbers = #tpu.dot_dimension_numbers<[1], [0], [0], [1], [0, 0, 1, 1], [], []>} : vector<8x128xbf16>, vector<128x384xbf16>, vector<8x384xf32> -> vector<8x384xf32>
    %c0_63 = arith.constant 0 : index
    %c0_64 = arith.constant 0 : index
    %167 = vector.load %arg5[%c0_63, %c0_64] : memref<1x384xf32, #tpu.memory_space<vmem>>, vector<1x384xf32>
    %168 = vector.broadcast %167 : vector<1x384xf32> to vector<8x384xf32>
    %169 = arith.addf %166, %168 : vector<8x384xf32>
    %170 = vector.extract_strided_slice %163 {offsets = [0, 0], sizes = [8, 128], strides = [1, 1]} : vector<8x384xf32> to vector<8x128xf32>
    %171 = vector.extract_strided_slice %169 {offsets = [0, 0], sizes = [8, 128], strides = [1, 1]} : vector<8x384xf32> to vector<8x128xf32>
    %172 = arith.addf %170, %171 : vector<8x128xf32>
    %173 = arith.negf %172 : vector<8x128xf32>
    %174 = math.exp %173 : vector<8x128xf32>
    %cst_65 = arith.constant 1.000000e+00 : f32
    %175 = vector.broadcast %cst_65 : f32 to vector<8x128xf32>
    %176 = arith.addf %175, %174 : vector<8x128xf32>
    %177 = arith.divf %175, %176 : vector<8x128xf32>
    %178 = vector.extract_strided_slice %163 {offsets = [0, 128], sizes = [8, 128], strides = [1, 1]} : vector<8x384xf32> to vector<8x128xf32>
    %179 = vector.extract_strided_slice %169 {offsets = [0, 128], sizes = [8, 128], strides = [1, 1]} : vector<8x384xf32> to vector<8x128xf32>
    %180 = arith.addf %178, %179 : vector<8x128xf32>
    %181 = arith.negf %180 : vector<8x128xf32>
    %182 = math.exp %181 : vector<8x128xf32>
    %cst_66 = arith.constant 1.000000e+00 : f32
    %183 = vector.broadcast %cst_66 : f32 to vector<8x128xf32>
    %184 = arith.addf %183, %182 : vector<8x128xf32>
    %185 = arith.divf %183, %184 : vector<8x128xf32>
    %186 = vector.extract_strided_slice %163 {offsets = [0, 256], sizes = [8, 128], strides = [1, 1]} : vector<8x384xf32> to vector<8x128xf32>
    %187 = vector.extract_strided_slice %169 {offsets = [0, 256], sizes = [8, 128], strides = [1, 1]} : vector<8x384xf32> to vector<8x128xf32>
    %188 = arith.mulf %177, %187 : vector<8x128xf32>
    %189 = arith.addf %186, %188 : vector<8x128xf32>
    %190 = math.tanh %189 : vector<8x128xf32>
    %cst_67 = arith.constant 1.000000e+00 : f32
    %191 = vector.broadcast %cst_67 : f32 to vector<8x128xf32>
    %192 = arith.subf %191, %185 : vector<8x128xf32>
    %193 = arith.mulf %192, %190 : vector<8x128xf32>
    %194 = arith.mulf %185, %121 : vector<8x128xf32>
    %195 = arith.addf %193, %194 : vector<8x128xf32>
    %196 = arith.truncf %195 : vector<8x128xf32> to vector<8x128xbf16>
    %c0_68 = arith.constant 0 : index
    %c0_69 = arith.constant 0 : index
    %197 = vector.load %arg6[%c0_68, %c0_69] : memref<128x384xbf16, #tpu.memory_space<vmem>>, vector<128x384xbf16>
    %cst_70 = arith.constant dense<0.000000e+00> : vector<8x384xf32>
    %198 = tpu.matmul %196, %197, %cst_70 {dimension_numbers = #tpu.dot_dimension_numbers<[1], [0], [0], [1], [0, 0, 1, 1], [], []>} : vector<8x128xbf16>, vector<128x384xbf16>, vector<8x384xf32> -> vector<8x384xf32>
    %c0_71 = arith.constant 0 : index
    %c0_72 = arith.constant 0 : index
    %199 = vector.load %arg8[%c0_71, %c0_72] : memref<1x384xf32, #tpu.memory_space<vmem>>, vector<1x384xf32>
    %200 = vector.broadcast %199 : vector<1x384xf32> to vector<8x384xf32>
    %201 = arith.addf %198, %200 : vector<8x384xf32>
    %202 = arith.truncf %159 : vector<8x128xf32> to vector<8x128xbf16>
    %c0_73 = arith.constant 0 : index
    %c0_74 = arith.constant 0 : index
    %203 = vector.load %arg7[%c0_73, %c0_74] : memref<128x384xbf16, #tpu.memory_space<vmem>>, vector<128x384xbf16>
    %cst_75 = arith.constant dense<0.000000e+00> : vector<8x384xf32>
    %204 = tpu.matmul %202, %203, %cst_75 {dimension_numbers = #tpu.dot_dimension_numbers<[1], [0], [0], [1], [0, 0, 1, 1], [], []>} : vector<8x128xbf16>, vector<128x384xbf16>, vector<8x384xf32> -> vector<8x384xf32>
    %c0_76 = arith.constant 0 : index
    %c0_77 = arith.constant 0 : index
    %205 = vector.load %arg9[%c0_76, %c0_77] : memref<1x384xf32, #tpu.memory_space<vmem>>, vector<1x384xf32>
    %206 = vector.broadcast %205 : vector<1x384xf32> to vector<8x384xf32>
    %207 = arith.addf %204, %206 : vector<8x384xf32>
    %208 = vector.extract_strided_slice %201 {offsets = [0, 0], sizes = [8, 128], strides = [1, 1]} : vector<8x384xf32> to vector<8x128xf32>
    %209 = vector.extract_strided_slice %207 {offsets = [0, 0], sizes = [8, 128], strides = [1, 1]} : vector<8x384xf32> to vector<8x128xf32>
    %210 = arith.addf %208, %209 : vector<8x128xf32>
    %211 = arith.negf %210 : vector<8x128xf32>
    %212 = math.exp %211 : vector<8x128xf32>
    %cst_78 = arith.constant 1.000000e+00 : f32
    %213 = vector.broadcast %cst_78 : f32 to vector<8x128xf32>
    %214 = arith.addf %213, %212 : vector<8x128xf32>
    %215 = arith.divf %213, %214 : vector<8x128xf32>
    %216 = vector.extract_strided_slice %201 {offsets = [0, 128], sizes = [8, 128], strides = [1, 1]} : vector<8x384xf32> to vector<8x128xf32>
    %217 = vector.extract_strided_slice %207 {offsets = [0, 128], sizes = [8, 128], strides = [1, 1]} : vector<8x384xf32> to vector<8x128xf32>
    %218 = arith.addf %216, %217 : vector<8x128xf32>
    %219 = arith.negf %218 : vector<8x128xf32>
    %220 = math.exp %219 : vector<8x128xf32>
    %cst_79 = arith.constant 1.000000e+00 : f32
    %221 = vector.broadcast %cst_79 : f32 to vector<8x128xf32>
    %222 = arith.addf %221, %220 : vector<8x128xf32>
    %223 = arith.divf %221, %222 : vector<8x128xf32>
    %224 = vector.extract_strided_slice %201 {offsets = [0, 256], sizes = [8, 128], strides = [1, 1]} : vector<8x384xf32> to vector<8x128xf32>
    %225 = vector.extract_strided_slice %207 {offsets = [0, 256], sizes = [8, 128], strides = [1, 1]} : vector<8x384xf32> to vector<8x128xf32>
    %226 = arith.mulf %215, %225 : vector<8x128xf32>
    %227 = arith.addf %224, %226 : vector<8x128xf32>
    %228 = math.tanh %227 : vector<8x128xf32>
    %cst_80 = arith.constant 1.000000e+00 : f32
    %229 = vector.broadcast %cst_80 : f32 to vector<8x128xf32>
    %230 = arith.subf %229, %223 : vector<8x128xf32>
    %231 = arith.mulf %230, %228 : vector<8x128xf32>
    %232 = arith.mulf %223, %159 : vector<8x128xf32>
    %233 = arith.addf %231, %232 : vector<8x128xf32>
    %c3_i32 = arith.constant 3 : i32
    %c8_i32_81 = arith.constant 8 : i32
    %234 = arith.muli %c3_i32, %c8_i32_81 : i32
    %235 = tpu.assume_multiple %234, 8 : i32
    %236 = arith.index_cast %235 : i32 to index
    %c0_82 = arith.constant 0 : index
    %237 = vector.load %arg16[%236, %c0_82] : memref<64x384xf32, #tpu.memory_space<vmem>>, vector<8x384xf32>
    %238 = arith.truncf %195 : vector<8x128xf32> to vector<8x128xbf16>
    %c0_83 = arith.constant 0 : index
    %c0_84 = arith.constant 0 : index
    %239 = vector.load %arg3[%c0_83, %c0_84] : memref<128x384xbf16, #tpu.memory_space<vmem>>, vector<128x384xbf16>
    %cst_85 = arith.constant dense<0.000000e+00> : vector<8x384xf32>
    %240 = tpu.matmul %238, %239, %cst_85 {dimension_numbers = #tpu.dot_dimension_numbers<[1], [0], [0], [1], [0, 0, 1, 1], [], []>} : vector<8x128xbf16>, vector<128x384xbf16>, vector<8x384xf32> -> vector<8x384xf32>
    %c0_86 = arith.constant 0 : index
    %c0_87 = arith.constant 0 : index
    %241 = vector.load %arg5[%c0_86, %c0_87] : memref<1x384xf32, #tpu.memory_space<vmem>>, vector<1x384xf32>
    %242 = vector.broadcast %241 : vector<1x384xf32> to vector<8x384xf32>
    %243 = arith.addf %240, %242 : vector<8x384xf32>
    %244 = vector.extract_strided_slice %237 {offsets = [0, 0], sizes = [8, 128], strides = [1, 1]} : vector<8x384xf32> to vector<8x128xf32>
    %245 = vector.extract_strided_slice %243 {offsets = [0, 0], sizes = [8, 128], strides = [1, 1]} : vector<8x384xf32> to vector<8x128xf32>
    %246 = arith.addf %244, %245 : vector<8x128xf32>
    %247 = arith.negf %246 : vector<8x128xf32>
    %248 = math.exp %247 : vector<8x128xf32>
    %cst_88 = arith.constant 1.000000e+00 : f32
    %249 = vector.broadcast %cst_88 : f32 to vector<8x128xf32>
    %250 = arith.addf %249, %248 : vector<8x128xf32>
    %251 = arith.divf %249, %250 : vector<8x128xf32>
    %252 = vector.extract_strided_slice %237 {offsets = [0, 128], sizes = [8, 128], strides = [1, 1]} : vector<8x384xf32> to vector<8x128xf32>
    %253 = vector.extract_strided_slice %243 {offsets = [0, 128], sizes = [8, 128], strides = [1, 1]} : vector<8x384xf32> to vector<8x128xf32>
    %254 = arith.addf %252, %253 : vector<8x128xf32>
    %255 = arith.negf %254 : vector<8x128xf32>
    %256 = math.exp %255 : vector<8x128xf32>
    %cst_89 = arith.constant 1.000000e+00 : f32
    %257 = vector.broadcast %cst_89 : f32 to vector<8x128xf32>
    %258 = arith.addf %257, %256 : vector<8x128xf32>
    %259 = arith.divf %257, %258 : vector<8x128xf32>
    %260 = vector.extract_strided_slice %237 {offsets = [0, 256], sizes = [8, 128], strides = [1, 1]} : vector<8x384xf32> to vector<8x128xf32>
    %261 = vector.extract_strided_slice %243 {offsets = [0, 256], sizes = [8, 128], strides = [1, 1]} : vector<8x384xf32> to vector<8x128xf32>
    %262 = arith.mulf %251, %261 : vector<8x128xf32>
    %263 = arith.addf %260, %262 : vector<8x128xf32>
    %264 = math.tanh %263 : vector<8x128xf32>
    %cst_90 = arith.constant 1.000000e+00 : f32
    %265 = vector.broadcast %cst_90 : f32 to vector<8x128xf32>
    %266 = arith.subf %265, %259 : vector<8x128xf32>
    %267 = arith.mulf %266, %264 : vector<8x128xf32>
    %268 = arith.mulf %259, %195 : vector<8x128xf32>
    %269 = arith.addf %267, %268 : vector<8x128xf32>
    %270 = arith.truncf %269 : vector<8x128xf32> to vector<8x128xbf16>
    %c0_91 = arith.constant 0 : index
    %c0_92 = arith.constant 0 : index
    %271 = vector.load %arg6[%c0_91, %c0_92] : memref<128x384xbf16, #tpu.memory_space<vmem>>, vector<128x384xbf16>
    %cst_93 = arith.constant dense<0.000000e+00> : vector<8x384xf32>
    %272 = tpu.matmul %270, %271, %cst_93 {dimension_numbers = #tpu.dot_dimension_numbers<[1], [0], [0], [1], [0, 0, 1, 1], [], []>} : vector<8x128xbf16>, vector<128x384xbf16>, vector<8x384xf32> -> vector<8x384xf32>
    %c0_94 = arith.constant 0 : index
    %c0_95 = arith.constant 0 : index
    %273 = vector.load %arg8[%c0_94, %c0_95] : memref<1x384xf32, #tpu.memory_space<vmem>>, vector<1x384xf32>
    %274 = vector.broadcast %273 : vector<1x384xf32> to vector<8x384xf32>
    %275 = arith.addf %272, %274 : vector<8x384xf32>
    %276 = arith.truncf %233 : vector<8x128xf32> to vector<8x128xbf16>
    %c0_96 = arith.constant 0 : index
    %c0_97 = arith.constant 0 : index
    %277 = vector.load %arg7[%c0_96, %c0_97] : memref<128x384xbf16, #tpu.memory_space<vmem>>, vector<128x384xbf16>
    %cst_98 = arith.constant dense<0.000000e+00> : vector<8x384xf32>
    %278 = tpu.matmul %276, %277, %cst_98 {dimension_numbers = #tpu.dot_dimension_numbers<[1], [0], [0], [1], [0, 0, 1, 1], [], []>} : vector<8x128xbf16>, vector<128x384xbf16>, vector<8x384xf32> -> vector<8x384xf32>
    %c0_99 = arith.constant 0 : index
    %c0_100 = arith.constant 0 : index
    %279 = vector.load %arg9[%c0_99, %c0_100] : memref<1x384xf32, #tpu.memory_space<vmem>>, vector<1x384xf32>
    %280 = vector.broadcast %279 : vector<1x384xf32> to vector<8x384xf32>
    %281 = arith.addf %278, %280 : vector<8x384xf32>
    %282 = vector.extract_strided_slice %275 {offsets = [0, 0], sizes = [8, 128], strides = [1, 1]} : vector<8x384xf32> to vector<8x128xf32>
    %283 = vector.extract_strided_slice %281 {offsets = [0, 0], sizes = [8, 128], strides = [1, 1]} : vector<8x384xf32> to vector<8x128xf32>
    %284 = arith.addf %282, %283 : vector<8x128xf32>
    %285 = arith.negf %284 : vector<8x128xf32>
    %286 = math.exp %285 : vector<8x128xf32>
    %cst_101 = arith.constant 1.000000e+00 : f32
    %287 = vector.broadcast %cst_101 : f32 to vector<8x128xf32>
    %288 = arith.addf %287, %286 : vector<8x128xf32>
    %289 = arith.divf %287, %288 : vector<8x128xf32>
    %290 = vector.extract_strided_slice %275 {offsets = [0, 128], sizes = [8, 128], strides = [1, 1]} : vector<8x384xf32> to vector<8x128xf32>
    %291 = vector.extract_strided_slice %281 {offsets = [0, 128], sizes = [8, 128], strides = [1, 1]} : vector<8x384xf32> to vector<8x128xf32>
    %292 = arith.addf %290, %291 : vector<8x128xf32>
    %293 = arith.negf %292 : vector<8x128xf32>
    %294 = math.exp %293 : vector<8x128xf32>
    %cst_102 = arith.constant 1.000000e+00 : f32
    %295 = vector.broadcast %cst_102 : f32 to vector<8x128xf32>
    %296 = arith.addf %295, %294 : vector<8x128xf32>
    %297 = arith.divf %295, %296 : vector<8x128xf32>
    %298 = vector.extract_strided_slice %275 {offsets = [0, 256], sizes = [8, 128], strides = [1, 1]} : vector<8x384xf32> to vector<8x128xf32>
    %299 = vector.extract_strided_slice %281 {offsets = [0, 256], sizes = [8, 128], strides = [1, 1]} : vector<8x384xf32> to vector<8x128xf32>
    %300 = arith.mulf %289, %299 : vector<8x128xf32>
    %301 = arith.addf %298, %300 : vector<8x128xf32>
    %302 = math.tanh %301 : vector<8x128xf32>
    %cst_103 = arith.constant 1.000000e+00 : f32
    %303 = vector.broadcast %cst_103 : f32 to vector<8x128xf32>
    %304 = arith.subf %303, %297 : vector<8x128xf32>
    %305 = arith.mulf %304, %302 : vector<8x128xf32>
    %306 = arith.mulf %297, %233 : vector<8x128xf32>
    %307 = arith.addf %305, %306 : vector<8x128xf32>
    %c4_i32 = arith.constant 4 : i32
    %c8_i32_104 = arith.constant 8 : i32
    %308 = arith.muli %c4_i32, %c8_i32_104 : i32
    %309 = tpu.assume_multiple %308, 8 : i32
    %310 = arith.index_cast %309 : i32 to index
    %c0_105 = arith.constant 0 : index
    %311 = vector.load %arg16[%310, %c0_105] : memref<64x384xf32, #tpu.memory_space<vmem>>, vector<8x384xf32>
    %312 = arith.truncf %269 : vector<8x128xf32> to vector<8x128xbf16>
    %c0_106 = arith.constant 0 : index
    %c0_107 = arith.constant 0 : index
    %313 = vector.load %arg3[%c0_106, %c0_107] : memref<128x384xbf16, #tpu.memory_space<vmem>>, vector<128x384xbf16>
    %cst_108 = arith.constant dense<0.000000e+00> : vector<8x384xf32>
    %314 = tpu.matmul %312, %313, %cst_108 {dimension_numbers = #tpu.dot_dimension_numbers<[1], [0], [0], [1], [0, 0, 1, 1], [], []>} : vector<8x128xbf16>, vector<128x384xbf16>, vector<8x384xf32> -> vector<8x384xf32>
    %c0_109 = arith.constant 0 : index
    %c0_110 = arith.constant 0 : index
    %315 = vector.load %arg5[%c0_109, %c0_110] : memref<1x384xf32, #tpu.memory_space<vmem>>, vector<1x384xf32>
    %316 = vector.broadcast %315 : vector<1x384xf32> to vector<8x384xf32>
    %317 = arith.addf %314, %316 : vector<8x384xf32>
    %318 = vector.extract_strided_slice %311 {offsets = [0, 0], sizes = [8, 128], strides = [1, 1]} : vector<8x384xf32> to vector<8x128xf32>
    %319 = vector.extract_strided_slice %317 {offsets = [0, 0], sizes = [8, 128], strides = [1, 1]} : vector<8x384xf32> to vector<8x128xf32>
    %320 = arith.addf %318, %319 : vector<8x128xf32>
    %321 = arith.negf %320 : vector<8x128xf32>
    %322 = math.exp %321 : vector<8x128xf32>
    %cst_111 = arith.constant 1.000000e+00 : f32
    %323 = vector.broadcast %cst_111 : f32 to vector<8x128xf32>
    %324 = arith.addf %323, %322 : vector<8x128xf32>
    %325 = arith.divf %323, %324 : vector<8x128xf32>
    %326 = vector.extract_strided_slice %311 {offsets = [0, 128], sizes = [8, 128], strides = [1, 1]} : vector<8x384xf32> to vector<8x128xf32>
    %327 = vector.extract_strided_slice %317 {offsets = [0, 128], sizes = [8, 128], strides = [1, 1]} : vector<8x384xf32> to vector<8x128xf32>
    %328 = arith.addf %326, %327 : vector<8x128xf32>
    %329 = arith.negf %328 : vector<8x128xf32>
    %330 = math.exp %329 : vector<8x128xf32>
    %cst_112 = arith.constant 1.000000e+00 : f32
    %331 = vector.broadcast %cst_112 : f32 to vector<8x128xf32>
    %332 = arith.addf %331, %330 : vector<8x128xf32>
    %333 = arith.divf %331, %332 : vector<8x128xf32>
    %334 = vector.extract_strided_slice %311 {offsets = [0, 256], sizes = [8, 128], strides = [1, 1]} : vector<8x384xf32> to vector<8x128xf32>
    %335 = vector.extract_strided_slice %317 {offsets = [0, 256], sizes = [8, 128], strides = [1, 1]} : vector<8x384xf32> to vector<8x128xf32>
    %336 = arith.mulf %325, %335 : vector<8x128xf32>
    %337 = arith.addf %334, %336 : vector<8x128xf32>
    %338 = math.tanh %337 : vector<8x128xf32>
    %cst_113 = arith.constant 1.000000e+00 : f32
    %339 = vector.broadcast %cst_113 : f32 to vector<8x128xf32>
    %340 = arith.subf %339, %333 : vector<8x128xf32>
    %341 = arith.mulf %340, %338 : vector<8x128xf32>
    %342 = arith.mulf %333, %269 : vector<8x128xf32>
    %343 = arith.addf %341, %342 : vector<8x128xf32>
    %344 = arith.truncf %343 : vector<8x128xf32> to vector<8x128xbf16>
    %c0_114 = arith.constant 0 : index
    %c0_115 = arith.constant 0 : index
    %345 = vector.load %arg6[%c0_114, %c0_115] : memref<128x384xbf16, #tpu.memory_space<vmem>>, vector<128x384xbf16>
    %cst_116 = arith.constant dense<0.000000e+00> : vector<8x384xf32>
    %346 = tpu.matmul %344, %345, %cst_116 {dimension_numbers = #tpu.dot_dimension_numbers<[1], [0], [0], [1], [0, 0, 1, 1], [], []>} : vector<8x128xbf16>, vector<128x384xbf16>, vector<8x384xf32> -> vector<8x384xf32>
    %c0_117 = arith.constant 0 : index
    %c0_118 = arith.constant 0 : index
    %347 = vector.load %arg8[%c0_117, %c0_118] : memref<1x384xf32, #tpu.memory_space<vmem>>, vector<1x384xf32>
    %348 = vector.broadcast %347 : vector<1x384xf32> to vector<8x384xf32>
    %349 = arith.addf %346, %348 : vector<8x384xf32>
    %350 = arith.truncf %307 : vector<8x128xf32> to vector<8x128xbf16>
    %c0_119 = arith.constant 0 : index
    %c0_120 = arith.constant 0 : index
    %351 = vector.load %arg7[%c0_119, %c0_120] : memref<128x384xbf16, #tpu.memory_space<vmem>>, vector<128x384xbf16>
    %cst_121 = arith.constant dense<0.000000e+00> : vector<8x384xf32>
    %352 = tpu.matmul %350, %351, %cst_121 {dimension_numbers = #tpu.dot_dimension_numbers<[1], [0], [0], [1], [0, 0, 1, 1], [], []>} : vector<8x128xbf16>, vector<128x384xbf16>, vector<8x384xf32> -> vector<8x384xf32>
    %c0_122 = arith.constant 0 : index
    %c0_123 = arith.constant 0 : index
    %353 = vector.load %arg9[%c0_122, %c0_123] : memref<1x384xf32, #tpu.memory_space<vmem>>, vector<1x384xf32>
    %354 = vector.broadcast %353 : vector<1x384xf32> to vector<8x384xf32>
    %355 = arith.addf %352, %354 : vector<8x384xf32>
    %356 = vector.extract_strided_slice %349 {offsets = [0, 0], sizes = [8, 128], strides = [1, 1]} : vector<8x384xf32> to vector<8x128xf32>
    %357 = vector.extract_strided_slice %355 {offsets = [0, 0], sizes = [8, 128], strides = [1, 1]} : vector<8x384xf32> to vector<8x128xf32>
    %358 = arith.addf %356, %357 : vector<8x128xf32>
    %359 = arith.negf %358 : vector<8x128xf32>
    %360 = math.exp %359 : vector<8x128xf32>
    %cst_124 = arith.constant 1.000000e+00 : f32
    %361 = vector.broadcast %cst_124 : f32 to vector<8x128xf32>
    %362 = arith.addf %361, %360 : vector<8x128xf32>
    %363 = arith.divf %361, %362 : vector<8x128xf32>
    %364 = vector.extract_strided_slice %349 {offsets = [0, 128], sizes = [8, 128], strides = [1, 1]} : vector<8x384xf32> to vector<8x128xf32>
    %365 = vector.extract_strided_slice %355 {offsets = [0, 128], sizes = [8, 128], strides = [1, 1]} : vector<8x384xf32> to vector<8x128xf32>
    %366 = arith.addf %364, %365 : vector<8x128xf32>
    %367 = arith.negf %366 : vector<8x128xf32>
    %368 = math.exp %367 : vector<8x128xf32>
    %cst_125 = arith.constant 1.000000e+00 : f32
    %369 = vector.broadcast %cst_125 : f32 to vector<8x128xf32>
    %370 = arith.addf %369, %368 : vector<8x128xf32>
    %371 = arith.divf %369, %370 : vector<8x128xf32>
    %372 = vector.extract_strided_slice %349 {offsets = [0, 256], sizes = [8, 128], strides = [1, 1]} : vector<8x384xf32> to vector<8x128xf32>
    %373 = vector.extract_strided_slice %355 {offsets = [0, 256], sizes = [8, 128], strides = [1, 1]} : vector<8x384xf32> to vector<8x128xf32>
    %374 = arith.mulf %363, %373 : vector<8x128xf32>
    %375 = arith.addf %372, %374 : vector<8x128xf32>
    %376 = math.tanh %375 : vector<8x128xf32>
    %cst_126 = arith.constant 1.000000e+00 : f32
    %377 = vector.broadcast %cst_126 : f32 to vector<8x128xf32>
    %378 = arith.subf %377, %371 : vector<8x128xf32>
    %379 = arith.mulf %378, %376 : vector<8x128xf32>
    %380 = arith.mulf %371, %307 : vector<8x128xf32>
    %381 = arith.addf %379, %380 : vector<8x128xf32>
    %c5_i32 = arith.constant 5 : i32
    %c8_i32_127 = arith.constant 8 : i32
    %382 = arith.muli %c5_i32, %c8_i32_127 : i32
    %383 = tpu.assume_multiple %382, 8 : i32
    %384 = arith.index_cast %383 : i32 to index
    %c0_128 = arith.constant 0 : index
    %385 = vector.load %arg16[%384, %c0_128] : memref<64x384xf32, #tpu.memory_space<vmem>>, vector<8x384xf32>
    %386 = arith.truncf %343 : vector<8x128xf32> to vector<8x128xbf16>
    %c0_129 = arith.constant 0 : index
    %c0_130 = arith.constant 0 : index
    %387 = vector.load %arg3[%c0_129, %c0_130] : memref<128x384xbf16, #tpu.memory_space<vmem>>, vector<128x384xbf16>
    %cst_131 = arith.constant dense<0.000000e+00> : vector<8x384xf32>
    %388 = tpu.matmul %386, %387, %cst_131 {dimension_numbers = #tpu.dot_dimension_numbers<[1], [0], [0], [1], [0, 0, 1, 1], [], []>} : vector<8x128xbf16>, vector<128x384xbf16>, vector<8x384xf32> -> vector<8x384xf32>
    %c0_132 = arith.constant 0 : index
    %c0_133 = arith.constant 0 : index
    %389 = vector.load %arg5[%c0_132, %c0_133] : memref<1x384xf32, #tpu.memory_space<vmem>>, vector<1x384xf32>
    %390 = vector.broadcast %389 : vector<1x384xf32> to vector<8x384xf32>
    %391 = arith.addf %388, %390 : vector<8x384xf32>
    %392 = vector.extract_strided_slice %385 {offsets = [0, 0], sizes = [8, 128], strides = [1, 1]} : vector<8x384xf32> to vector<8x128xf32>
    %393 = vector.extract_strided_slice %391 {offsets = [0, 0], sizes = [8, 128], strides = [1, 1]} : vector<8x384xf32> to vector<8x128xf32>
    %394 = arith.addf %392, %393 : vector<8x128xf32>
    %395 = arith.negf %394 : vector<8x128xf32>
    %396 = math.exp %395 : vector<8x128xf32>
    %cst_134 = arith.constant 1.000000e+00 : f32
    %397 = vector.broadcast %cst_134 : f32 to vector<8x128xf32>
    %398 = arith.addf %397, %396 : vector<8x128xf32>
    %399 = arith.divf %397, %398 : vector<8x128xf32>
    %400 = vector.extract_strided_slice %385 {offsets = [0, 128], sizes = [8, 128], strides = [1, 1]} : vector<8x384xf32> to vector<8x128xf32>
    %401 = vector.extract_strided_slice %391 {offsets = [0, 128], sizes = [8, 128], strides = [1, 1]} : vector<8x384xf32> to vector<8x128xf32>
    %402 = arith.addf %400, %401 : vector<8x128xf32>
    %403 = arith.negf %402 : vector<8x128xf32>
    %404 = math.exp %403 : vector<8x128xf32>
    %cst_135 = arith.constant 1.000000e+00 : f32
    %405 = vector.broadcast %cst_135 : f32 to vector<8x128xf32>
    %406 = arith.addf %405, %404 : vector<8x128xf32>
    %407 = arith.divf %405, %406 : vector<8x128xf32>
    %408 = vector.extract_strided_slice %385 {offsets = [0, 256], sizes = [8, 128], strides = [1, 1]} : vector<8x384xf32> to vector<8x128xf32>
    %409 = vector.extract_strided_slice %391 {offsets = [0, 256], sizes = [8, 128], strides = [1, 1]} : vector<8x384xf32> to vector<8x128xf32>
    %410 = arith.mulf %399, %409 : vector<8x128xf32>
    %411 = arith.addf %408, %410 : vector<8x128xf32>
    %412 = math.tanh %411 : vector<8x128xf32>
    %cst_136 = arith.constant 1.000000e+00 : f32
    %413 = vector.broadcast %cst_136 : f32 to vector<8x128xf32>
    %414 = arith.subf %413, %407 : vector<8x128xf32>
    %415 = arith.mulf %414, %412 : vector<8x128xf32>
    %416 = arith.mulf %407, %343 : vector<8x128xf32>
    %417 = arith.addf %415, %416 : vector<8x128xf32>
    %418 = arith.truncf %417 : vector<8x128xf32> to vector<8x128xbf16>
    %c0_137 = arith.constant 0 : index
    %c0_138 = arith.constant 0 : index
    %419 = vector.load %arg6[%c0_137, %c0_138] : memref<128x384xbf16, #tpu.memory_space<vmem>>, vector<128x384xbf16>
    %cst_139 = arith.constant dense<0.000000e+00> : vector<8x384xf32>
    %420 = tpu.matmul %418, %419, %cst_139 {dimension_numbers = #tpu.dot_dimension_numbers<[1], [0], [0], [1], [0, 0, 1, 1], [], []>} : vector<8x128xbf16>, vector<128x384xbf16>, vector<8x384xf32> -> vector<8x384xf32>
    %c0_140 = arith.constant 0 : index
    %c0_141 = arith.constant 0 : index
    %421 = vector.load %arg8[%c0_140, %c0_141] : memref<1x384xf32, #tpu.memory_space<vmem>>, vector<1x384xf32>
    %422 = vector.broadcast %421 : vector<1x384xf32> to vector<8x384xf32>
    %423 = arith.addf %420, %422 : vector<8x384xf32>
    %424 = arith.truncf %381 : vector<8x128xf32> to vector<8x128xbf16>
    %c0_142 = arith.constant 0 : index
    %c0_143 = arith.constant 0 : index
    %425 = vector.load %arg7[%c0_142, %c0_143] : memref<128x384xbf16, #tpu.memory_space<vmem>>, vector<128x384xbf16>
    %cst_144 = arith.constant dense<0.000000e+00> : vector<8x384xf32>
    %426 = tpu.matmul %424, %425, %cst_144 {dimension_numbers = #tpu.dot_dimension_numbers<[1], [0], [0], [1], [0, 0, 1, 1], [], []>} : vector<8x128xbf16>, vector<128x384xbf16>, vector<8x384xf32> -> vector<8x384xf32>
    %c0_145 = arith.constant 0 : index
    %c0_146 = arith.constant 0 : index
    %427 = vector.load %arg9[%c0_145, %c0_146] : memref<1x384xf32, #tpu.memory_space<vmem>>, vector<1x384xf32>
    %428 = vector.broadcast %427 : vector<1x384xf32> to vector<8x384xf32>
    %429 = arith.addf %426, %428 : vector<8x384xf32>
    %430 = vector.extract_strided_slice %423 {offsets = [0, 0], sizes = [8, 128], strides = [1, 1]} : vector<8x384xf32> to vector<8x128xf32>
    %431 = vector.extract_strided_slice %429 {offsets = [0, 0], sizes = [8, 128], strides = [1, 1]} : vector<8x384xf32> to vector<8x128xf32>
    %432 = arith.addf %430, %431 : vector<8x128xf32>
    %433 = arith.negf %432 : vector<8x128xf32>
    %434 = math.exp %433 : vector<8x128xf32>
    %cst_147 = arith.constant 1.000000e+00 : f32
    %435 = vector.broadcast %cst_147 : f32 to vector<8x128xf32>
    %436 = arith.addf %435, %434 : vector<8x128xf32>
    %437 = arith.divf %435, %436 : vector<8x128xf32>
    %438 = vector.extract_strided_slice %423 {offsets = [0, 128], sizes = [8, 128], strides = [1, 1]} : vector<8x384xf32> to vector<8x128xf32>
    %439 = vector.extract_strided_slice %429 {offsets = [0, 128], sizes = [8, 128], strides = [1, 1]} : vector<8x384xf32> to vector<8x128xf32>
    %440 = arith.addf %438, %439 : vector<8x128xf32>
    %441 = arith.negf %440 : vector<8x128xf32>
    %442 = math.exp %441 : vector<8x128xf32>
    %cst_148 = arith.constant 1.000000e+00 : f32
    %443 = vector.broadcast %cst_148 : f32 to vector<8x128xf32>
    %444 = arith.addf %443, %442 : vector<8x128xf32>
    %445 = arith.divf %443, %444 : vector<8x128xf32>
    %446 = vector.extract_strided_slice %423 {offsets = [0, 256], sizes = [8, 128], strides = [1, 1]} : vector<8x384xf32> to vector<8x128xf32>
    %447 = vector.extract_strided_slice %429 {offsets = [0, 256], sizes = [8, 128], strides = [1, 1]} : vector<8x384xf32> to vector<8x128xf32>
    %448 = arith.mulf %437, %447 : vector<8x128xf32>
    %449 = arith.addf %446, %448 : vector<8x128xf32>
    %450 = math.tanh %449 : vector<8x128xf32>
    %cst_149 = arith.constant 1.000000e+00 : f32
    %451 = vector.broadcast %cst_149 : f32 to vector<8x128xf32>
    %452 = arith.subf %451, %445 : vector<8x128xf32>
    %453 = arith.mulf %452, %450 : vector<8x128xf32>
    %454 = arith.mulf %445, %381 : vector<8x128xf32>
    %455 = arith.addf %453, %454 : vector<8x128xf32>
    %c6_i32 = arith.constant 6 : i32
    %c8_i32_150 = arith.constant 8 : i32
    %456 = arith.muli %c6_i32, %c8_i32_150 : i32
    %457 = tpu.assume_multiple %456, 8 : i32
    %458 = arith.index_cast %457 : i32 to index
    %c0_151 = arith.constant 0 : index
    %459 = vector.load %arg16[%458, %c0_151] : memref<64x384xf32, #tpu.memory_space<vmem>>, vector<8x384xf32>
    %460 = arith.truncf %417 : vector<8x128xf32> to vector<8x128xbf16>
    %c0_152 = arith.constant 0 : index
    %c0_153 = arith.constant 0 : index
    %461 = vector.load %arg3[%c0_152, %c0_153] : memref<128x384xbf16, #tpu.memory_space<vmem>>, vector<128x384xbf16>
    %cst_154 = arith.constant dense<0.000000e+00> : vector<8x384xf32>
    %462 = tpu.matmul %460, %461, %cst_154 {dimension_numbers = #tpu.dot_dimension_numbers<[1], [0], [0], [1], [0, 0, 1, 1], [], []>} : vector<8x128xbf16>, vector<128x384xbf16>, vector<8x384xf32> -> vector<8x384xf32>
    %c0_155 = arith.constant 0 : index
    %c0_156 = arith.constant 0 : index
    %463 = vector.load %arg5[%c0_155, %c0_156] : memref<1x384xf32, #tpu.memory_space<vmem>>, vector<1x384xf32>
    %464 = vector.broadcast %463 : vector<1x384xf32> to vector<8x384xf32>
    %465 = arith.addf %462, %464 : vector<8x384xf32>
    %466 = vector.extract_strided_slice %459 {offsets = [0, 0], sizes = [8, 128], strides = [1, 1]} : vector<8x384xf32> to vector<8x128xf32>
    %467 = vector.extract_strided_slice %465 {offsets = [0, 0], sizes = [8, 128], strides = [1, 1]} : vector<8x384xf32> to vector<8x128xf32>
    %468 = arith.addf %466, %467 : vector<8x128xf32>
    %469 = arith.negf %468 : vector<8x128xf32>
    %470 = math.exp %469 : vector<8x128xf32>
    %cst_157 = arith.constant 1.000000e+00 : f32
    %471 = vector.broadcast %cst_157 : f32 to vector<8x128xf32>
    %472 = arith.addf %471, %470 : vector<8x128xf32>
    %473 = arith.divf %471, %472 : vector<8x128xf32>
    %474 = vector.extract_strided_slice %459 {offsets = [0, 128], sizes = [8, 128], strides = [1, 1]} : vector<8x384xf32> to vector<8x128xf32>
    %475 = vector.extract_strided_slice %465 {offsets = [0, 128], sizes = [8, 128], strides = [1, 1]} : vector<8x384xf32> to vector<8x128xf32>
    %476 = arith.addf %474, %475 : vector<8x128xf32>
    %477 = arith.negf %476 : vector<8x128xf32>
    %478 = math.exp %477 : vector<8x128xf32>
    %cst_158 = arith.constant 1.000000e+00 : f32
    %479 = vector.broadcast %cst_158 : f32 to vector<8x128xf32>
    %480 = arith.addf %479, %478 : vector<8x128xf32>
    %481 = arith.divf %479, %480 : vector<8x128xf32>
    %482 = vector.extract_strided_slice %459 {offsets = [0, 256], sizes = [8, 128], strides = [1, 1]} : vector<8x384xf32> to vector<8x128xf32>
    %483 = vector.extract_strided_slice %465 {offsets = [0, 256], sizes = [8, 128], strides = [1, 1]} : vector<8x384xf32> to vector<8x128xf32>
    %484 = arith.mulf %473, %483 : vector<8x128xf32>
    %485 = arith.addf %482, %484 : vector<8x128xf32>
    %486 = math.tanh %485 : vector<8x128xf32>
    %cst_159 = arith.constant 1.000000e+00 : f32
    %487 = vector.broadcast %cst_159 : f32 to vector<8x128xf32>
    %488 = arith.subf %487, %481 : vector<8x128xf32>
    %489 = arith.mulf %488, %486 : vector<8x128xf32>
    %490 = arith.mulf %481, %417 : vector<8x128xf32>
    %491 = arith.addf %489, %490 : vector<8x128xf32>
    %492 = arith.truncf %491 : vector<8x128xf32> to vector<8x128xbf16>
    %c0_160 = arith.constant 0 : index
    %c0_161 = arith.constant 0 : index
    %493 = vector.load %arg6[%c0_160, %c0_161] : memref<128x384xbf16, #tpu.memory_space<vmem>>, vector<128x384xbf16>
    %cst_162 = arith.constant dense<0.000000e+00> : vector<8x384xf32>
    %494 = tpu.matmul %492, %493, %cst_162 {dimension_numbers = #tpu.dot_dimension_numbers<[1], [0], [0], [1], [0, 0, 1, 1], [], []>} : vector<8x128xbf16>, vector<128x384xbf16>, vector<8x384xf32> -> vector<8x384xf32>
    %c0_163 = arith.constant 0 : index
    %c0_164 = arith.constant 0 : index
    %495 = vector.load %arg8[%c0_163, %c0_164] : memref<1x384xf32, #tpu.memory_space<vmem>>, vector<1x384xf32>
    %496 = vector.broadcast %495 : vector<1x384xf32> to vector<8x384xf32>
    %497 = arith.addf %494, %496 : vector<8x384xf32>
    %498 = arith.truncf %455 : vector<8x128xf32> to vector<8x128xbf16>
    %c0_165 = arith.constant 0 : index
    %c0_166 = arith.constant 0 : index
    %499 = vector.load %arg7[%c0_165, %c0_166] : memref<128x384xbf16, #tpu.memory_space<vmem>>, vector<128x384xbf16>
    %cst_167 = arith.constant dense<0.000000e+00> : vector<8x384xf32>
    %500 = tpu.matmul %498, %499, %cst_167 {dimension_numbers = #tpu.dot_dimension_numbers<[1], [0], [0], [1], [0, 0, 1, 1], [], []>} : vector<8x128xbf16>, vector<128x384xbf16>, vector<8x384xf32> -> vector<8x384xf32>
    %c0_168 = arith.constant 0 : index
    %c0_169 = arith.constant 0 : index
    %501 = vector.load %arg9[%c0_168, %c0_169] : memref<1x384xf32, #tpu.memory_space<vmem>>, vector<1x384xf32>
    %502 = vector.broadcast %501 : vector<1x384xf32> to vector<8x384xf32>
    %503 = arith.addf %500, %502 : vector<8x384xf32>
    %504 = vector.extract_strided_slice %497 {offsets = [0, 0], sizes = [8, 128], strides = [1, 1]} : vector<8x384xf32> to vector<8x128xf32>
    %505 = vector.extract_strided_slice %503 {offsets = [0, 0], sizes = [8, 128], strides = [1, 1]} : vector<8x384xf32> to vector<8x128xf32>
    %506 = arith.addf %504, %505 : vector<8x128xf32>
    %507 = arith.negf %506 : vector<8x128xf32>
    %508 = math.exp %507 : vector<8x128xf32>
    %cst_170 = arith.constant 1.000000e+00 : f32
    %509 = vector.broadcast %cst_170 : f32 to vector<8x128xf32>
    %510 = arith.addf %509, %508 : vector<8x128xf32>
    %511 = arith.divf %509, %510 : vector<8x128xf32>
    %512 = vector.extract_strided_slice %497 {offsets = [0, 128], sizes = [8, 128], strides = [1, 1]} : vector<8x384xf32> to vector<8x128xf32>
    %513 = vector.extract_strided_slice %503 {offsets = [0, 128], sizes = [8, 128], strides = [1, 1]} : vector<8x384xf32> to vector<8x128xf32>
    %514 = arith.addf %512, %513 : vector<8x128xf32>
    %515 = arith.negf %514 : vector<8x128xf32>
    %516 = math.exp %515 : vector<8x128xf32>
    %cst_171 = arith.constant 1.000000e+00 : f32
    %517 = vector.broadcast %cst_171 : f32 to vector<8x128xf32>
    %518 = arith.addf %517, %516 : vector<8x128xf32>
    %519 = arith.divf %517, %518 : vector<8x128xf32>
    %520 = vector.extract_strided_slice %497 {offsets = [0, 256], sizes = [8, 128], strides = [1, 1]} : vector<8x384xf32> to vector<8x128xf32>
    %521 = vector.extract_strided_slice %503 {offsets = [0, 256], sizes = [8, 128], strides = [1, 1]} : vector<8x384xf32> to vector<8x128xf32>
    %522 = arith.mulf %511, %521 : vector<8x128xf32>
    %523 = arith.addf %520, %522 : vector<8x128xf32>
    %524 = math.tanh %523 : vector<8x128xf32>
    %cst_172 = arith.constant 1.000000e+00 : f32
    %525 = vector.broadcast %cst_172 : f32 to vector<8x128xf32>
    %526 = arith.subf %525, %519 : vector<8x128xf32>
    %527 = arith.mulf %526, %524 : vector<8x128xf32>
    %528 = arith.mulf %519, %455 : vector<8x128xf32>
    %529 = arith.addf %527, %528 : vector<8x128xf32>
    %c7_i32 = arith.constant 7 : i32
    %c8_i32_173 = arith.constant 8 : i32
    %530 = arith.muli %c7_i32, %c8_i32_173 : i32
    %531 = tpu.assume_multiple %530, 8 : i32
    %532 = arith.index_cast %531 : i32 to index
    %c0_174 = arith.constant 0 : index
    %533 = vector.load %arg16[%532, %c0_174] : memref<64x384xf32, #tpu.memory_space<vmem>>, vector<8x384xf32>
    %534 = arith.truncf %491 : vector<8x128xf32> to vector<8x128xbf16>
    %c0_175 = arith.constant 0 : index
    %c0_176 = arith.constant 0 : index
    %535 = vector.load %arg3[%c0_175, %c0_176] : memref<128x384xbf16, #tpu.memory_space<vmem>>, vector<128x384xbf16>
    %cst_177 = arith.constant dense<0.000000e+00> : vector<8x384xf32>
    %536 = tpu.matmul %534, %535, %cst_177 {dimension_numbers = #tpu.dot_dimension_numbers<[1], [0], [0], [1], [0, 0, 1, 1], [], []>} : vector<8x128xbf16>, vector<128x384xbf16>, vector<8x384xf32> -> vector<8x384xf32>
    %c0_178 = arith.constant 0 : index
    %c0_179 = arith.constant 0 : index
    %537 = vector.load %arg5[%c0_178, %c0_179] : memref<1x384xf32, #tpu.memory_space<vmem>>, vector<1x384xf32>
    %538 = vector.broadcast %537 : vector<1x384xf32> to vector<8x384xf32>
    %539 = arith.addf %536, %538 : vector<8x384xf32>
    %540 = vector.extract_strided_slice %533 {offsets = [0, 0], sizes = [8, 128], strides = [1, 1]} : vector<8x384xf32> to vector<8x128xf32>
    %541 = vector.extract_strided_slice %539 {offsets = [0, 0], sizes = [8, 128], strides = [1, 1]} : vector<8x384xf32> to vector<8x128xf32>
    %542 = arith.addf %540, %541 : vector<8x128xf32>
    %543 = arith.negf %542 : vector<8x128xf32>
    %544 = math.exp %543 : vector<8x128xf32>
    %cst_180 = arith.constant 1.000000e+00 : f32
    %545 = vector.broadcast %cst_180 : f32 to vector<8x128xf32>
    %546 = arith.addf %545, %544 : vector<8x128xf32>
    %547 = arith.divf %545, %546 : vector<8x128xf32>
    %548 = vector.extract_strided_slice %533 {offsets = [0, 128], sizes = [8, 128], strides = [1, 1]} : vector<8x384xf32> to vector<8x128xf32>
    %549 = vector.extract_strided_slice %539 {offsets = [0, 128], sizes = [8, 128], strides = [1, 1]} : vector<8x384xf32> to vector<8x128xf32>
    %550 = arith.addf %548, %549 : vector<8x128xf32>
    %551 = arith.negf %550 : vector<8x128xf32>
    %552 = math.exp %551 : vector<8x128xf32>
    %cst_181 = arith.constant 1.000000e+00 : f32
    %553 = vector.broadcast %cst_181 : f32 to vector<8x128xf32>
    %554 = arith.addf %553, %552 : vector<8x128xf32>
    %555 = arith.divf %553, %554 : vector<8x128xf32>
    %556 = vector.extract_strided_slice %533 {offsets = [0, 256], sizes = [8, 128], strides = [1, 1]} : vector<8x384xf32> to vector<8x128xf32>
    %557 = vector.extract_strided_slice %539 {offsets = [0, 256], sizes = [8, 128], strides = [1, 1]} : vector<8x384xf32> to vector<8x128xf32>
    %558 = arith.mulf %547, %557 : vector<8x128xf32>
    %559 = arith.addf %556, %558 : vector<8x128xf32>
    %560 = math.tanh %559 : vector<8x128xf32>
    %cst_182 = arith.constant 1.000000e+00 : f32
    %561 = vector.broadcast %cst_182 : f32 to vector<8x128xf32>
    %562 = arith.subf %561, %555 : vector<8x128xf32>
    %563 = arith.mulf %562, %560 : vector<8x128xf32>
    %564 = arith.mulf %555, %491 : vector<8x128xf32>
    %565 = arith.addf %563, %564 : vector<8x128xf32>
    %566 = arith.truncf %565 : vector<8x128xf32> to vector<8x128xbf16>
    %c0_183 = arith.constant 0 : index
    %c0_184 = arith.constant 0 : index
    %567 = vector.load %arg6[%c0_183, %c0_184] : memref<128x384xbf16, #tpu.memory_space<vmem>>, vector<128x384xbf16>
    %cst_185 = arith.constant dense<0.000000e+00> : vector<8x384xf32>
    %568 = tpu.matmul %566, %567, %cst_185 {dimension_numbers = #tpu.dot_dimension_numbers<[1], [0], [0], [1], [0, 0, 1, 1], [], []>} : vector<8x128xbf16>, vector<128x384xbf16>, vector<8x384xf32> -> vector<8x384xf32>
    %c0_186 = arith.constant 0 : index
    %c0_187 = arith.constant 0 : index
    %569 = vector.load %arg8[%c0_186, %c0_187] : memref<1x384xf32, #tpu.memory_space<vmem>>, vector<1x384xf32>
    %570 = vector.broadcast %569 : vector<1x384xf32> to vector<8x384xf32>
    %571 = arith.addf %568, %570 : vector<8x384xf32>
    %572 = arith.truncf %529 : vector<8x128xf32> to vector<8x128xbf16>
    %c0_188 = arith.constant 0 : index
    %c0_189 = arith.constant 0 : index
    %573 = vector.load %arg7[%c0_188, %c0_189] : memref<128x384xbf16, #tpu.memory_space<vmem>>, vector<128x384xbf16>
    %cst_190 = arith.constant dense<0.000000e+00> : vector<8x384xf32>
    %574 = tpu.matmul %572, %573, %cst_190 {dimension_numbers = #tpu.dot_dimension_numbers<[1], [0], [0], [1], [0, 0, 1, 1], [], []>} : vector<8x128xbf16>, vector<128x384xbf16>, vector<8x384xf32> -> vector<8x384xf32>
    %c0_191 = arith.constant 0 : index
    %c0_192 = arith.constant 0 : index
    %575 = vector.load %arg9[%c0_191, %c0_192] : memref<1x384xf32, #tpu.memory_space<vmem>>, vector<1x384xf32>
    %576 = vector.broadcast %575 : vector<1x384xf32> to vector<8x384xf32>
    %577 = arith.addf %574, %576 : vector<8x384xf32>
    %578 = vector.extract_strided_slice %571 {offsets = [0, 0], sizes = [8, 128], strides = [1, 1]} : vector<8x384xf32> to vector<8x128xf32>
    %579 = vector.extract_strided_slice %577 {offsets = [0, 0], sizes = [8, 128], strides = [1, 1]} : vector<8x384xf32> to vector<8x128xf32>
    %580 = arith.addf %578, %579 : vector<8x128xf32>
    %581 = arith.negf %580 : vector<8x128xf32>
    %582 = math.exp %581 : vector<8x128xf32>
    %cst_193 = arith.constant 1.000000e+00 : f32
    %583 = vector.broadcast %cst_193 : f32 to vector<8x128xf32>
    %584 = arith.addf %583, %582 : vector<8x128xf32>
    %585 = arith.divf %583, %584 : vector<8x128xf32>
    %586 = vector.extract_strided_slice %571 {offsets = [0, 128], sizes = [8, 128], strides = [1, 1]} : vector<8x384xf32> to vector<8x128xf32>
    %587 = vector.extract_strided_slice %577 {offsets = [0, 128], sizes = [8, 128], strides = [1, 1]} : vector<8x384xf32> to vector<8x128xf32>
    %588 = arith.addf %586, %587 : vector<8x128xf32>
    %589 = arith.negf %588 : vector<8x128xf32>
    %590 = math.exp %589 : vector<8x128xf32>
    %cst_194 = arith.constant 1.000000e+00 : f32
    %591 = vector.broadcast %cst_194 : f32 to vector<8x128xf32>
    %592 = arith.addf %591, %590 : vector<8x128xf32>
    %593 = arith.divf %591, %592 : vector<8x128xf32>
    %594 = vector.extract_strided_slice %571 {offsets = [0, 256], sizes = [8, 128], strides = [1, 1]} : vector<8x384xf32> to vector<8x128xf32>
    %595 = vector.extract_strided_slice %577 {offsets = [0, 256], sizes = [8, 128], strides = [1, 1]} : vector<8x384xf32> to vector<8x128xf32>
    %596 = arith.mulf %585, %595 : vector<8x128xf32>
    %597 = arith.addf %594, %596 : vector<8x128xf32>
    %598 = math.tanh %597 : vector<8x128xf32>
    %cst_195 = arith.constant 1.000000e+00 : f32
    %599 = vector.broadcast %cst_195 : f32 to vector<8x128xf32>
    %600 = arith.subf %599, %593 : vector<8x128xf32>
    %601 = arith.mulf %600, %598 : vector<8x128xf32>
    %602 = arith.mulf %593, %529 : vector<8x128xf32>
    %603 = arith.addf %601, %602 : vector<8x128xf32>
    %c8_i32_196 = arith.constant 8 : i32
    %c0_197 = arith.constant 0 : index
    %c0_198 = arith.constant 0 : index
    %604 = vector.load %arg17[%c0_197, %c0_198] : memref<8x128xf32, #tpu.memory_space<vmem>>, vector<8x128xf32>
    tpu.vector_store %arg17[%c0_197, %c0_198], %565 {strides = array<i32>} : memref<8x128xf32, #tpu.memory_space<vmem>>, vector<8x128xf32>,
    %c0_199 = arith.constant 0 : index
    %c0_200 = arith.constant 0 : index
    %605 = vector.load %arg18[%c0_199, %c0_200] : memref<8x128xf32, #tpu.memory_space<vmem>>, vector<8x128xf32>
    tpu.vector_store %arg18[%c0_199, %c0_200], %603 {strides = array<i32>} : memref<8x128xf32, #tpu.memory_space<vmem>>, vector<8x128xf32>,
    %c0_i32_201 = arith.constant 0 : i32
    %606 = arith.cmpi eq, %arg0, %c0_i32_201 : i32
    %607 = arith.extui %606 : i1 to i32
    %c0_i32_202 = arith.constant 0 : i32
    %608 = arith.cmpi ne, %607, %c0_i32_202 : i32
    scf.if %608 {
      %609 = arith.truncf %603 : vector<8x128xf32> to vector<8x128xbf16>
      %c0_203 = arith.constant 0 : index
      %c0_204 = arith.constant 0 : index
      %610 = vector.load %arg10[%c0_203, %c0_204] : memref<128x128xbf16, #tpu.memory_space<vmem>>, vector<128x128xbf16>
      %cst_205 = arith.constant dense<0.000000e+00> : vector<8x128xf32>
      %611 = tpu.matmul %609, %610, %cst_205 {dimension_numbers = #tpu.dot_dimension_numbers<[1], [0], [0], [1], [0, 0, 1, 1], [], []>} : vector<8x128xbf16>, vector<128x128xbf16>, vector<8x128xf32> -> vector<8x128xf32>
      %c0_206 = arith.constant 0 : index
      %c0_207 = arith.constant 0 : index
      %612 = vector.load %arg11[%c0_206, %c0_207] : memref<1x128xf32, #tpu.memory_space<vmem>>, vector<1x128xf32>
      %613 = vector.broadcast %612 : vector<1x128xf32> to vector<8x128xf32>
      %614 = arith.addf %611, %613 : vector<8x128xf32>
      %c0_208 = arith.constant 0 : index
      %c0_209 = arith.constant 0 : index
      %615 = vector.load %arg14[%c0_208, %c0_209] : memref<8x128xf32, #tpu.memory_space<vmem>>, vector<8x128xf32>
      tpu.vector_store %arg14[%c0_208, %c0_209], %614 {strides = array<i32>} : memref<8x128xf32, #tpu.memory_space<vmem>>, vector<8x128xf32>,
      %616 = arith.truncf %614 : vector<8x128xf32> to vector<8x128xbf16>
      %c0_210 = arith.constant 0 : index
      %c0_211 = arith.constant 0 : index
      %617 = vector.load %arg12[%c0_210, %c0_211] : memref<128x256xbf16, #tpu.memory_space<vmem>>, vector<128x256xbf16>
      %cst_212 = arith.constant dense<0.000000e+00> : vector<8x256xf32>
      %618 = tpu.matmul %616, %617, %cst_212 {dimension_numbers = #tpu.dot_dimension_numbers<[1], [0], [0], [1], [0, 0, 1, 1], [], []>} : vector<8x128xbf16>, vector<128x256xbf16>, vector<8x256xf32> -> vector<8x256xf32>
      %c0_213 = arith.constant 0 : index
      %c0_214 = arith.constant 0 : index
      %619 = vector.load %arg13[%c0_213, %c0_214] : memref<1x256xf32, #tpu.memory_space<vmem>>, vector<1x256xf32>
      %620 = vector.broadcast %619 : vector<1x256xf32> to vector<8x256xf32>
      %621 = arith.addf %618, %620 : vector<8x256xf32>
      %c0_215 = arith.constant 0 : index
      %c0_216 = arith.constant 0 : index
      %622 = vector.load %arg15[%c0_215, %c0_216] : memref<8x256xf32, #tpu.memory_space<vmem>>, vector<8x256xf32>
      tpu.vector_store %arg15[%c0_215, %c0_216], %621 {strides = array<i32>} : memref<8x256xf32, #tpu.memory_space<vmem>>, vector<8x256xf32>,
    } else {
    }
    return
  }
  func.func @transform_0(%arg0: i32) -> (i32, i32) {
    %c0_i32 = arith.constant 0 : i32
    %c0_i32_0 = arith.constant 0 : i32
    return %arg0, %c0_i32 : i32, i32
  }
  func.func @transform_1(%arg0: i32) -> (i32, i32) {
    %c0_i32 = arith.constant 0 : i32
    %c0_i32_0 = arith.constant 0 : i32
    %c0_i32_1 = arith.constant 0 : i32
    return %c0_i32, %c0_i32_0 : i32, i32
  }
  func.func @transform_2(%arg0: i32) -> (i32, i32) {
    %c0_i32 = arith.constant 0 : i32
    %c0_i32_0 = arith.constant 0 : i32
    %c0_i32_1 = arith.constant 0 : i32
    return %c0_i32, %c0_i32_0 : i32, i32
  }
  func.func @transform_3(%arg0: i32) -> (i32, i32) {
    %c0_i32 = arith.constant 0 : i32
    %c0_i32_0 = arith.constant 0 : i32
    %c0_i32_1 = arith.constant 0 : i32
    return %c0_i32, %c0_i32_0 : i32, i32
  }
  func.func @transform_4(%arg0: i32) -> (i32, i32) {
    %c0_i32 = arith.constant 0 : i32
    %c0_i32_0 = arith.constant 0 : i32
    %c0_i32_1 = arith.constant 0 : i32
    return %c0_i32, %c0_i32_0 : i32, i32
  }
  func.func @transform_5(%arg0: i32) -> (i32, i32) {
    %c0_i32 = arith.constant 0 : i32
    %c0_i32_0 = arith.constant 0 : i32
    %c0_i32_1 = arith.constant 0 : i32
    return %c0_i32, %c0_i32_0 : i32, i32
  }
  func.func @transform_6(%arg0: i32) -> (i32, i32) {
    %c0_i32 = arith.constant 0 : i32
    %c0_i32_0 = arith.constant 0 : i32
    %c0_i32_1 = arith.constant 0 : i32
    return %c0_i32, %c0_i32_0 : i32, i32
  }
  func.func @transform_7(%arg0: i32) -> (i32, i32) {
    %c0_i32 = arith.constant 0 : i32
    %c0_i32_0 = arith.constant 0 : i32
    %c0_i32_1 = arith.constant 0 : i32
    return %c0_i32, %c0_i32_0 : i32, i32
  }
  func.func @transform_8(%arg0: i32) -> (i32, i32) {
    %c0_i32 = arith.constant 0 : i32
    %c0_i32_0 = arith.constant 0 : i32
    %c0_i32_1 = arith.constant 0 : i32
    return %c0_i32, %c0_i32_0 : i32, i32
  }
  func.func @transform_9(%arg0: i32) -> (i32, i32) {
    %c0_i32 = arith.constant 0 : i32
    %c0_i32_0 = arith.constant 0 : i32
    %c0_i32_1 = arith.constant 0 : i32
    return %c0_i32, %c0_i32_0 : i32, i32
  }
  func.func @transform_10(%arg0: i32) -> (i32, i32) {
    %c0_i32 = arith.constant 0 : i32
    %c0_i32_0 = arith.constant 0 : i32
    %c0_i32_1 = arith.constant 0 : i32
    return %c0_i32, %c0_i32_0 : i32, i32
  }
  func.func @transform_11(%arg0: i32) -> (i32, i32) {
    %c0_i32 = arith.constant 0 : i32
    %c0_i32_0 = arith.constant 0 : i32
    %c0_i32_1 = arith.constant 0 : i32
    return %c0_i32, %c0_i32_0 : i32, i32
  }
  func.func @transform_12(%arg0: i32) -> (i32, i32) {
    %c0_i32 = arith.constant 0 : i32
    %c0_i32_0 = arith.constant 0 : i32
    %c0_i32_1 = arith.constant 0 : i32
    return %c0_i32, %c0_i32_0 : i32, i32
  }
  func.func @transform_13(%arg0: i32) -> (i32, i32) {
    %c0_i32 = arith.constant 0 : i32
    %c0_i32_0 = arith.constant 0 : i32
    %c0_i32_1 = arith.constant 0 : i32
    return %c0_i32, %c0_i32_0 : i32, i32
  }
  func.func @transform_14(%arg0: i32) -> (i32, i32) {
    %c0_i32 = arith.constant 0 : i32
    %c0_i32_0 = arith.constant 0 : i32
    %c0_i32_1 = arith.constant 0 : i32
    return %c0_i32, %c0_i32_0 : i32, i32
  }
}

</mosaic_0001>

<llo_original>
// kernel: tpu_custom_call.1
$region0: #{tpu_custom_call.1}
  #allocation0 [shape = 'u32[]', space=smem, size = 0x4, offset = 0x4, fixed_abs, tag = 'smem constant byte address 0x4 - core index']
  #allocation1 [shape = 'u32[72,128]{1,0:T(1,128)}', space=vmem, size = 0x9000, scoped, tag = 'internal scratch']
  #allocation2 [shape = 'f32[64,384]{1,0:T(8,128)}', space=vmem, size = 0x18000, scoped, tag = 'scratch operand']
  #allocation3 [shape = 'f32[8,128]{1,0:T(8,128)}', space=vmem, size = 0x1000, scoped, tag = 'scratch operand']
  #allocation4 [shape = 'f32[8,128]{1,0:T(8,128)}', space=vmem, size = 0x1000, scoped, tag = 'scratch operand']
  #allocation5 [shape = 'f32[8,128]{1,0:T(8,128)}', space=vmem, size = 0x1000, scoped, tag = 'scratch operand']
  %s0 = inlined_call_operand.hbm [shape: bf16[64,128], index: 0, kind: input, shape index: {}]
  %s1 = inlined_call_operand.hbm [shape: bf16[128,384], index: 1, kind: input, shape index: {}]
  %s2 = inlined_call_operand.hbm [shape: bf16[128,384], index: 2, kind: input, shape index: {}]
  %s3 = inlined_call_operand.hbm [shape: f32[1,384], index: 3, kind: input, shape index: {}]
  %s4 = inlined_call_operand.vmem [shape: f32[1,384], index: 4, kind: input, shape index: {}]
  %s5 = inlined_call_operand.hbm [shape: bf16[128,384], index: 5, kind: input, shape index: {}]
  %s6 = inlined_call_operand.hbm [shape: bf16[128,384], index: 6, kind: input, shape index: {}]
  %s7 = inlined_call_operand.vmem [shape: f32[1,384], index: 7, kind: input, shape index: {}]
  %s8 = inlined_call_operand.hbm [shape: f32[1,384], index: 8, kind: input, shape index: {}]
  %s9 = inlined_call_operand.hbm [shape: bf16[128,128], index: 9, kind: input, shape index: {}]
  %s10 = inlined_call_operand.vmem [shape: f32[1,128], index: 10, kind: input, shape index: {}]
  %s11 = inlined_call_operand.hbm [shape: bf16[128,256], index: 11, kind: input, shape index: {}]
  %s12 = inlined_call_operand.vmem [shape: f32[1,256], index: 12, kind: input, shape index: {}]
  %s13 = inlined_call_operand.hbm [shape: f32[8,128], index: 13, kind: output, shape index: {0}]
  %s14 = inlined_call_operand.hbm [shape: f32[8,256], index: 14, kind: output, shape index: {1}]
  %15 = xla_tuple %s13, %s14
  %s16 = sld [smem:[#allocation0]]
  $region114: #{tpu_custom_call.1} parent=0
    _
  %s18 = ssub.s32 1, %s16
  %s19 = scalar_select 0, %s18, %s16
  $region1: #{tpu_custom_call.1} parent=0
    #allocation6 [shape = 'u8[16384]{0}', space=vmem, size = 0x4000, scoped, tag = 'input window, operand 0, single buffered']
    #allocation7 [shape = 's32[1]{0}', space=sflag, size = 0x4, scoped, tag = 'scoped memory for tpu_custom_call.1']
    #allocation8 [shape = 's32[1]{0}', space=sflag, size = 0x4, scoped, tag = 'scoped memory for tpu_custom_call.1']
    #allocation9 [shape = 'u8[98304]{0}', space=vmem, size = 0x18000, scoped, tag = 'input window, operand 1, single buffered']
    #allocation10 [shape = 's32[1]{0}', space=sflag, size = 0x4, scoped, tag = 'scoped memory for tpu_custom_call.1']
    #allocation11 [shape = 'u8[98304]{0}', space=vmem, size = 0x18000, scoped, tag = 'input window, operand 2, single buffered']
    #allocation12 [shape = 'u8[1536]{0}', space=vmem, size = 0x800, scoped, tag = 'input window, operand 3, single buffered']
    #allocation13 [shape = 's32[1]{0}', space=sflag, size = 0x4, scoped, tag = 'scoped memory for tpu_custom_call.1']
    #allocation14 [shape = 'u8[98304]{0}', space=vmem, size = 0x18000, scoped, tag = 'input window, operand 5, single buffered']
    #allocation15 [shape = 'u8[98304]{0}', space=vmem, size = 0x18000, scoped, tag = 'input window, operand 6, single buffered']
    #allocation16 [shape = 's32[1]{0}', space=sflag, size = 0x4, scoped, tag = 'scoped memory for tpu_custom_call.1']
    #allocation17 [shape = 'u8[1536]{0}', space=vmem, size = 0x800, scoped, tag = 'input window, operand 8, single buffered']
    #allocation18 [shape = 'u8[32768]{0}', space=vmem, size = 0x8000, scoped, tag = 'input window, operand 9, single buffered']
    #allocation19 [shape = 's32[1]{0}', space=sflag, size = 0x4, scoped, tag = 'scoped memory for tpu_custom_call.1']
    #allocation20 [shape = 'u8[65536]{0}', space=vmem, size = 0x10000, scoped, tag = 'input window, operand 11, single buffered']
    #allocation21 [shape = 'u8[4096]{0}', space=vmem, size = 0x1000, scoped, tag = 'output window, operand 0, single buffered']
    #allocation22 [shape = 'u8[8192]{0}', space=vmem, size = 0x2000, scoped, tag = 'output window, operand 1, single buffered']
    #allocation23 [shape = 's32[1]{0}', space=sflag, size = 0x4, scoped, tag = 'scoped memory for tpu_custom_call.1']
    %20 = vsyncpa [#allocation7], 0
    %21 = vsyncpa [#allocation10], 0
    %22 = vsyncpa [#allocation13], 0
    %23 = vsyncpa [#allocation16], 0
    %24 = vsyncpa [#allocation19], 0
    %25 = vsyncpa [#allocation8], 0
    %26 = vsyncpa [#allocation23], 0
    // Predicated region
    $region2: #{tpu_custom_call.1} parent=1 // pred_check
      _
    $region3: #{tpu_custom_call.1} parent=1 // pred_check_branch
      %28 = sbr.rel (0) target = $region5
    $region4: #{tpu_custom_call.1} parent=1 // pred_region
      %30 = vsyncadd [#allocation7], 0
      %s31 = sshll.u32 %s0, 4
      %s32 = int_to_ptr.hbm [resolvable:$true] %s31
      %s33 = sshll.u32 [#allocation6], 4
      %s34 = int_to_ptr.vmem [resolvable:$true] %s33
      %39 = dma.hbm_to_vmem [thread:$0]  %s32, 512, %s34, [#allocation7], 64, 64, 4
    $region5: #{tpu_custom_call.1} parent=1 // pred_fallthru
      _
    // Predicated region
    $region6: #{tpu_custom_call.1} parent=1 // pred_check
      _
    $region7: #{tpu_custom_call.1} parent=1 // pred_check_branch
      %41 = sbr.rel (0) target = $region9
    $region8: #{tpu_custom_call.1} parent=1 // pred_region
      %43 = vsyncadd [#allocation10], 0
      %s44 = sshll.u32 %s1, 4
      %s45 = int_to_ptr.hbm [resolvable:$true] %s44
      %s46 = sshll.u32 [#allocation9], 4
      %s47 = int_to_ptr.vmem [resolvable:$true] %s46
      %52 = dma.hbm_to_vmem [thread:$0]  %s45, 3072, %s47, [#allocation10], 192, 192, 12
    $region9: #{tpu_custom_call.1} parent=1 // pred_fallthru
      _
    // Predicated region
    $region10: #{tpu_custom_call.1} parent=1 // pred_check
      _
    $region11: #{tpu_custom_call.1} parent=1 // pred_check_branch
      %54 = sbr.rel (0) target = $region13
    $region12: #{tpu_custom_call.1} parent=1 // pred_region
      %56 = vsyncadd [#allocation10], 0
      %s57 = sshll.u32 %s2, 4
      %s58 = int_to_ptr.hbm [resolvable:$true] %s57
      %s59 = sshll.u32 [#allocation11], 4
      %s60 = int_to_ptr.vmem [resolvable:$true] %s59
      %65 = dma.hbm_to_vmem [thread:$0]  %s58, 3072, %s60, [#allocation10], 192, 192, 12
    $region13: #{tpu_custom_call.1} parent=1 // pred_fallthru
      _
    // Predicated region
    $region14: #{tpu_custom_call.1} parent=1 // pred_check
      _
    $region15: #{tpu_custom_call.1} parent=1 // pred_check_branch
      %67 = sbr.rel (0) target = $region17
    $region16: #{tpu_custom_call.1} parent=1 // pred_region
      %69 = vsyncadd [#allocation13], 0
      %s71 = sshll.u32 %s3, 4
      %s72 = int_to_ptr.hbm [resolvable:$true] %s71
      %s73 = sshll.u32 [#allocation12], 4
      %s74 = int_to_ptr.vmem [resolvable:$true] %s73
      %76 = dma.hbm_to_vmem [thread:$0]  %s72, 48, %s74, [#allocation13]
    $region17: #{tpu_custom_call.1} parent=1 // pred_fallthru
      _
    // Predicated region
    $region18: #{tpu_custom_call.1} parent=1 // pred_check
      _
    $region19: #{tpu_custom_call.1} parent=1 // pred_check_branch
      %78 = sbr.rel (0) target = $region21
    $region20: #{tpu_custom_call.1} parent=1 // pred_region
      _
    $region21: #{tpu_custom_call.1} parent=1 // pred_fallthru
      _
    // Predicated region
    $region22: #{tpu_custom_call.1} parent=1 // pred_check
      _
    $region23: #{tpu_custom_call.1} parent=1 // pred_check_branch
      %80 = sbr.rel (0) target = $region25
    $region24: #{tpu_custom_call.1} parent=1 // pred_region
      %82 = vsyncadd [#allocation13], 0
      %s83 = sshll.u32 %s5, 4
      %s84 = int_to_ptr.hbm [resolvable:$true] %s83
      %s85 = sshll.u32 [#allocation14], 4
      %s86 = int_to_ptr.vmem [resolvable:$true] %s85
      %91 = dma.hbm_to_vmem [thread:$0]  %s84, 3072, %s86, [#allocation13], 192, 192, 12
    $region25: #{tpu_custom_call.1} parent=1 // pred_fallthru
      _
    // Predicated region
    $region26: #{tpu_custom_call.1} parent=1 // pred_check
      _
    $region27: #{tpu_custom_call.1} parent=1 // pred_check_branch
      %93 = sbr.rel (0) target = $region29
    $region28: #{tpu_custom_call.1} parent=1 // pred_region
      %95 = vsyncadd [#allocation16], 0
      %s96 = sshll.u32 %s6, 4
      %s97 = int_to_ptr.hbm [resolvable:$true] %s96
      %s98 = sshll.u32 [#allocation15], 4
      %s99 = int_to_ptr.vmem [resolvable:$true] %s98
      %104 = dma.hbm_to_vmem [thread:$0]  %s97, 3072, %s99, [#allocation16], 192, 192, 12
    $region29: #{tpu_custom_call.1} parent=1 // pred_fallthru
      _
    // Predicated region
    $region30: #{tpu_custom_call.1} parent=1 // pred_check
      _
    $region31: #{tpu_custom_call.1} parent=1 // pred_check_branch
      %106 = sbr.rel (0) target = $region33
    $region32: #{tpu_custom_call.1} parent=1 // pred_region
      _
    $region33: #{tpu_custom_call.1} parent=1 // pred_fallthru
      _
    // Predicated region
    $region34: #{tpu_custom_call.1} parent=1 // pred_check
      _
    $region35: #{tpu_custom_call.1} parent=1 // pred_check_branch
      %108 = sbr.rel (0) target = $region37
    $region36: #{tpu_custom_call.1} parent=1 // pred_region
      %110 = vsyncadd [#allocation16], 0
      %s112 = sshll.u32 %s8, 4
      %s113 = int_to_ptr.hbm [resolvable:$true] %s112
      %s114 = sshll.u32 [#allocation17], 4
      %s115 = int_to_ptr.vmem [resolvable:$true] %s114
      %117 = dma.hbm_to_vmem [thread:$0]  %s113, 48, %s115, [#allocation16]
    $region37: #{tpu_custom_call.1} parent=1 // pred_fallthru
      _
    // Predicated region
    $region38: #{tpu_custom_call.1} parent=1 // pred_check
      _
    $region39: #{tpu_custom_call.1} parent=1 // pred_check_branch
      %119 = sbr.rel (0) target = $region41
    $region40: #{tpu_custom_call.1} parent=1 // pred_region
      %121 = vsyncadd [#allocation19], 0
      %s122 = sshll.u32 %s9, 4
      %s123 = int_to_ptr.hbm [resolvable:$true] %s122
      %s124 = sshll.u32 [#allocation18], 4
      %s125 = int_to_ptr.vmem [resolvable:$true] %s124
      %130 = dma.hbm_to_vmem [thread:$0]  %s123, 1024, %s125, [#allocation19], 64, 64, 4
    $region41: #{tpu_custom_call.1} parent=1 // pred_fallthru
      _
    // Predicated region
    $region42: #{tpu_custom_call.1} parent=1 // pred_check
      _
    $region43: #{tpu_custom_call.1} parent=1 // pred_check_branch
      %132 = sbr.rel (0) target = $region45
    $region44: #{tpu_custom_call.1} parent=1 // pred_region
      _
    $region45: #{tpu_custom_call.1} parent=1 // pred_fallthru
      _
    // Predicated region
    $region46: #{tpu_custom_call.1} parent=1 // pred_check
      _
    $region47: #{tpu_custom_call.1} parent=1 // pred_check_branch
      %134 = sbr.rel (0) target = $region49
    $region48: #{tpu_custom_call.1} parent=1 // pred_region
      %136 = vsyncadd [#allocation19], 0
      %s137 = sshll.u32 %s11, 4
      %s138 = int_to_ptr.hbm [resolvable:$true] %s137
      %s139 = sshll.u32 [#allocation20], 4
      %s140 = int_to_ptr.vmem [resolvable:$true] %s139
      %145 = dma.hbm_to_vmem [thread:$0]  %s138, 2048, %s140, [#allocation19], 128, 128, 8
    $region49: #{tpu_custom_call.1} parent=1 // pred_fallthru
      _
    // Predicated region
    $region50: #{tpu_custom_call.1} parent=1 // pred_check
      _
    $region51: #{tpu_custom_call.1} parent=1 // pred_check_branch
      %147 = sbr.rel (0) target = $region53
    $region52: #{tpu_custom_call.1} parent=1 // pred_region
      _
    $region53: #{tpu_custom_call.1} parent=1 // pred_fallthru
      _
    // Predicated region
    $region54: #{tpu_custom_call.1} parent=1 // pred_check
      _
    $region55: #{tpu_custom_call.1} parent=1 // pred_check_branch
      %149 = sbr.rel (0) target = $region57
    $region56: #{tpu_custom_call.1} parent=1 // pred_region
      %151 = dma.done [#allocation7], 512
    $region57: #{tpu_custom_call.1} parent=1 // pred_fallthru
      _
    // Predicated region
    $region58: #{tpu_custom_call.1} parent=1 // pred_check
      _
    $region59: #{tpu_custom_call.1} parent=1 // pred_check_branch
      %153 = sbr.rel (0) target = $region61
    $region60: #{tpu_custom_call.1} parent=1 // pred_region
      %155 = dma.done [#allocation10], 3072
    $region61: #{tpu_custom_call.1} parent=1 // pred_fallthru
      _
    // Predicated region
    $region62: #{tpu_custom_call.1} parent=1 // pred_check
      _
    $region63: #{tpu_custom_call.1} parent=1 // pred_check_branch
      %157 = sbr.rel (0) target = $region65
    $region64: #{tpu_custom_call.1} parent=1 // pred_region
      %159 = dma.done [#allocation10], 3072
    $region65: #{tpu_custom_call.1} parent=1 // pred_fallthru
      _
    // Predicated region
    $region66: #{tpu_custom_call.1} parent=1 // pred_check
      _
    $region67: #{tpu_custom_call.1} parent=1 // pred_check_branch
      %161 = sbr.rel (0) target = $region69
    $region68: #{tpu_custom_call.1} parent=1 // pred_region
      %163 = dma.done [#allocation13], 48
    $region69: #{tpu_custom_call.1} parent=1 // pred_fallthru
      _
    // Predicated region
    $region70: #{tpu_custom_call.1} parent=1 // pred_check
      _
    $region71: #{tpu_custom_call.1} parent=1 // pred_check_branch
      %165 = sbr.rel (0) target = $region73
    $region72: #{tpu_custom_call.1} parent=1 // pred_region
      %167 = dma.done [#allocation13], 3072
    $region73: #{tpu_custom_call.1} parent=1 // pred_fallthru
      _
    // Predicated region
    $region74: #{tpu_custom_call.1} parent=1 // pred_check
      _
    $region75: #{tpu_custom_call.1} parent=1 // pred_check_branch
      %169 = sbr.rel (0) target = $region77
    $region76: #{tpu_custom_call.1} parent=1 // pred_region
      %171 = dma.done [#allocation16], 3072
    $region77: #{tpu_custom_call.1} parent=1 // pred_fallthru
      _
    // Predicated region
    $region78: #{tpu_custom_call.1} parent=1 // pred_check
      _
    $region79: #{tpu_custom_call.1} parent=1 // pred_check_branch
      %173 = sbr.rel (0) target = $region81
    $region80: #{tpu_custom_call.1} parent=1 // pred_region
      %175 = dma.done [#allocation16], 48
    $region81: #{tpu_custom_call.1} parent=1 // pred_fallthru
      _
    // Predicated region
    $region82: #{tpu_custom_call.1} parent=1 // pred_check
      _
    $region83: #{tpu_custom_call.1} parent=1 // pred_check_branch
      %177 = sbr.rel (0) target = $region85
    $region84: #{tpu_custom_call.1} parent=1 // pred_region
      %179 = dma.done [#allocation19], 1024
    $region85: #{tpu_custom_call.1} parent=1 // pred_fallthru
      _
    // Predicated region
    $region86: #{tpu_custom_call.1} parent=1 // pred_check
      _
    $region87: #{tpu_custom_call.1} parent=1 // pred_check_branch
      %181 = sbr.rel (0) target = $region89
    $region88: #{tpu_custom_call.1} parent=1 // pred_region
      %183 = dma.done [#allocation19], 2048
    $region89: #{tpu_custom_call.1} parent=1 // pred_fallthru
      _
    %p184 = scmp.eq.s32.totalorder 0, 0
    // Predicated region
    $region90: #{tpu_custom_call.1} parent=1 // pred_check
      %p185 = pneg %p184
    $region91: #{tpu_custom_call.1} parent=1 // pred_check_branch
      %187 = sbr.rel (%p185) target = $region93
    $region92: #{tpu_custom_call.1} parent=1 // pred_region
      %188 = vst [vmem:[#allocation3] sm:$0xff] 0.0
      %189 = vst [vmem:[#allocation4] sm:$0xff] 0.0
    $region93: #{tpu_custom_call.1} parent=1 // pred_fallthru
      _
    %v190 = vld [vmem:[#allocation6] sm:$0xf]
    %v191 = vld [vmem:[#allocation6 + $0x4] sm:$0xf]
    %v192 = vld [vmem:[#allocation6 + $0x8] sm:$0xf]
    %v193 = vld [vmem:[#allocation6 + $0xc] sm:$0xf]
    %v194 = vld [vmem:[#allocation6 + $0x10] sm:$0xf]
    %v195 = vld [vmem:[#allocation6 + $0x14] sm:$0xf]
    %v196 = vld [vmem:[#allocation6 + $0x18] sm:$0xf]
    %v197 = vld [vmem:[#allocation6 + $0x1c] sm:$0xf]
    %v198 = vld [vmem:[#allocation9] sm:$0xff]
    %v199 = vld [vmem:[#allocation9 + $0x8] sm:$0xf]
    %v200 = vld [vmem:[#allocation9 + $0xc] sm:$0xff]
    %v201 = vld [vmem:[#allocation9 + $0x14] sm:$0xf]
    %v202 = vld [vmem:[#allocation9 + $0x18] sm:$0xff]
    %v203 = vld [vmem:[#allocation9 + $0x20] sm:$0xf]
    %v204 = vld [vmem:[#allocation9 + $0x24] sm:$0xff]
    %v205 = vld [vmem:[#allocation9 + $0x2c] sm:$0xf]
    %v206 = vld [vmem:[#allocation9 + $0x30] sm:$0xff]
    %v207 = vld [vmem:[#allocation9 + $0x38] sm:$0xf]
    %v208 = vld [vmem:[#allocation9 + $0x3c] sm:$0xff]
    %v209 = vld [vmem:[#allocation9 + $0x44] sm:$0xf]
    %v210 = vld [vmem:[#allocation9 + $0x48] sm:$0xff]
    %v211 = vld [vmem:[#allocation9 + $0x50] sm:$0xf]
    %v212 = vld [vmem:[#allocation9 + $0x54] sm:$0xff]
    %v213 = vld [vmem:[#allocation9 + $0x5c] sm:$0xf]
    %v214 = vld [vmem:[#allocation9 + $0x60] sm:$0xff]
    %v215 = vld [vmem:[#allocation9 + $0x68] sm:$0xf]
    %v216 = vld [vmem:[#allocation9 + $0x6c] sm:$0xff]
    %v217 = vld [vmem:[#allocation9 + $0x74] sm:$0xf]
    %v218 = vld [vmem:[#allocation9 + $0x78] sm:$0xff]
    %v219 = vld [vmem:[#allocation9 + $0x80] sm:$0xf]
    %v220 = vld [vmem:[#allocation9 + $0x84] sm:$0xff]
    %v221 = vld [vmem:[#allocation9 + $0x8c] sm:$0xf]
    %v222 = vld [vmem:[#allocation9 + $0x90] sm:$0xff]
    %v223 = vld [vmem:[#allocation9 + $0x98] sm:$0xf]
    %v224 = vld [vmem:[#allocation9 + $0x9c] sm:$0xff]
    %v225 = vld [vmem:[#allocation9 + $0xa4] sm:$0xf]
    %v226 = vld [vmem:[#allocation9 + $0xa8] sm:$0xff]
    %v227 = vld [vmem:[#allocation9 + $0xb0] sm:$0xf]
    %v228 = vld [vmem:[#allocation9 + $0xb4] sm:$0xff]
    %v229 = vld [vmem:[#allocation9 + $0xbc] sm:$0xf]
    %v230 = vld [vmem:[#allocation12] sm:$0x7]
    %v232 = vperm.slane %v230, 0
    %v233 = vperm.slane %v230, 1
    %v234 = vperm.slane %v230, 2
    %v246 = vunpack.c.l.b16 %v190
    %v247 = vunpack.c.l.b16 %v191
    %v248 = vunpack.c.l.b16 %v192
    %v249 = vunpack.c.l.b16 %v193
    %v250 = vunpack.c.l.b16 %v194
    %v251 = vunpack.c.l.b16 %v195
    %v252 = vunpack.c.l.b16 %v196
    %v253 = vunpack.c.l.b16 %v197
    %v254 = vpack.c.b16 %v247, %v246
    %v255 = vpack.c.b16 %v249, %v248
    %v256 = vpack.c.b16 %v251, %v250
    %v257 = vpack.c.b16 %v253, %v252
    %v294 = vunpack.c.l.b16 %v198
    %v295 = vunpack.c.h.b16 %v198
    %v296 = vunpack.c.l.b16 %v199
    %v297 = vunpack.c.l.b16 %v200
    %v298 = vunpack.c.h.b16 %v200
    %v299 = vunpack.c.l.b16 %v201
    %v300 = vunpack.c.l.b16 %v202
    %v301 = vunpack.c.h.b16 %v202
    %v302 = vunpack.c.l.b16 %v203
    %v303 = vunpack.c.l.b16 %v204
    %v304 = vunpack.c.h.b16 %v204
    %v305 = vunpack.c.l.b16 %v205
    %v306 = vunpack.c.l.b16 %v206
    %v307 = vunpack.c.h.b16 %v206
    %v308 = vunpack.c.l.b16 %v207
    %v309 = vunpack.c.l.b16 %v208
    %v310 = vunpack.c.h.b16 %v208
    %v311 = vunpack.c.l.b16 %v209
    %v312 = vunpack.c.l.b16 %v210
    %v313 = vunpack.c.h.b16 %v210
    %v314 = vunpack.c.l.b16 %v211
    %v315 = vunpack.c.l.b16 %v212
    %v316 = vunpack.c.h.b16 %v212
    %v317 = vunpack.c.l.b16 %v213
    %v318 = vunpack.c.l.b16 %v214
    %v319 = vunpack.c.h.b16 %v214
    %v320 = vunpack.c.l.b16 %v215
    %v321 = vunpack.c.l.b16 %v216
    %v322 = vunpack.c.h.b16 %v216
    %v323 = vunpack.c.l.b16 %v217
    %v324 = vunpack.c.l.b16 %v218
    %v325 = vunpack.c.h.b16 %v218
    %v326 = vunpack.c.l.b16 %v219
    %v327 = vunpack.c.l.b16 %v220
    %v328 = vunpack.c.h.b16 %v220
    %v329 = vunpack.c.l.b16 %v221
    %v330 = vunpack.c.l.b16 %v222
    %v331 = vunpack.c.h.b16 %v222
    %v332 = vunpack.c.l.b16 %v223
    %v333 = vunpack.c.l.b16 %v224
    %v334 = vunpack.c.h.b16 %v224
    %v335 = vunpack.c.l.b16 %v225
    %v336 = vunpack.c.l.b16 %v226
    %v337 = vunpack.c.h.b16 %v226
    %v338 = vunpack.c.l.b16 %v227
    %v339 = vunpack.c.l.b16 %v228
    %v340 = vunpack.c.h.b16 %v228
    %v341 = vunpack.c.l.b16 %v229
    %v342 = vpack.c.b16 %v297, %v294
    %v343 = vpack.c.b16 %v298, %v295
    %v344 = vpack.c.b16 %v299, %v296
    %v345 = vpack.c.b16 %v303, %v300
    %v346 = vpack.c.b16 %v304, %v301
    %v347 = vpack.c.b16 %v305, %v302
    %v348 = vpack.c.b16 %v309, %v306
    %v349 = vpack.c.b16 %v310, %v307
    %v350 = vpack.c.b16 %v311, %v308
    %v351 = vpack.c.b16 %v315, %v312
    %v352 = vpack.c.b16 %v316, %v313
    %v353 = vpack.c.b16 %v317, %v314
    %v354 = vpack.c.b16 %v321, %v318
    %v355 = vpack.c.b16 %v322, %v319
    %v356 = vpack.c.b16 %v323, %v320
    %v357 = vpack.c.b16 %v327, %v324
    %v358 = vpack.c.b16 %v328, %v325
    %v359 = vpack.c.b16 %v329, %v326
    %v360 = vpack.c.b16 %v333, %v330
    %v361 = vpack.c.b16 %v334, %v331
    %v362 = vpack.c.b16 %v335, %v332
    %v363 = vpack.c.b16 %v339, %v336
    %v364 = vpack.c.b16 %v340, %v337
    %v365 = vpack.c.b16 %v341, %v338
    %390 = vmatpush.bf16.msra.mxu0 %v363
    %391 = vmatpush.bf16.msra.mxu0 %v360
    %392 = vmatpush.bf16.msra.mxu0 %v357
    %393 = vmatpush.bf16.msra.mxu0 %v354
    %394 = vmatpush.bf16.msra.mxu0 %v351
    %395 = vmatpush.bf16.msra.mxu0 %v348
    %396 = vmatpush.bf16.msra.mxu0 %v345
    %397 = vmatpush.bf16.msra.mxu0 %v342
    %398 = vmatmul.bf16.gmra.mxu0 %v254
    %v399 = vpop.f32.mrf.mxu0
    %v400 = vadd.f32 %v232, %v399
    %v401 = vpop.f32.mrf.mxu0
    %v402 = vadd.f32 %v232, %v401
    %403 = vmatmul.bf16.gmra.mxu0 %v255
    %v404 = vpop.f32.mrf.mxu0
    %v405 = vadd.f32 %v232, %v404
    %v406 = vpop.f32.mrf.mxu0
    %v407 = vadd.f32 %v232, %v406
    %408 = vmatmul.bf16.gmra.mxu0 %v256
    %v409 = vpop.f32.mrf.mxu0
    %v410 = vadd.f32 %v232, %v409
    %v411 = vpop.f32.mrf.mxu0
    %v412 = vadd.f32 %v232, %v411
    %413 = vmatmul.bf16.gmra.mxu0 %v257
    %v414 = vpop.f32.mrf.mxu0
    %v415 = vadd.f32 %v232, %v414
    %v416 = vpop.f32.mrf.mxu0
    %v417 = vadd.f32 %v232, %v416
    %418 = vdwg.mxu0
    %419 = vmatpush.bf16.msra.mxu0 %v364
    %420 = vmatpush.bf16.msra.mxu0 %v361
    %421 = vmatpush.bf16.msra.mxu0 %v358
    %422 = vmatpush.bf16.msra.mxu0 %v355
    %423 = vmatpush.bf16.msra.mxu0 %v352
    %424 = vmatpush.bf16.msra.mxu0 %v349
    %425 = vmatpush.bf16.msra.mxu0 %v346
    %426 = vmatpush.bf16.msra.mxu0 %v343
    %427 = vmatmul.bf16.gmra.mxu0 %v254
    %v428 = vpop.f32.mrf.mxu0
    %v429 = vadd.f32 %v233, %v428
    %v430 = vpop.f32.mrf.mxu0
    %v431 = vadd.f32 %v233, %v430
    %432 = vmatmul.bf16.gmra.mxu0 %v255
    %v433 = vpop.f32.mrf.mxu0
    %v434 = vadd.f32 %v233, %v433
    %v435 = vpop.f32.mrf.mxu0
    %v436 = vadd.f32 %v233, %v435
    %437 = vmatmul.bf16.gmra.mxu0 %v256
    %v438 = vpop.f32.mrf.mxu0
    %v439 = vadd.f32 %v233, %v438
    %v440 = vpop.f32.mrf.mxu0
    %v441 = vadd.f32 %v233, %v440
    %442 = vmatmul.bf16.gmra.mxu0 %v257
    %v443 = vpop.f32.mrf.mxu0
    %v444 = vadd.f32 %v233, %v443
    %v445 = vpop.f32.mrf.mxu0
    %v446 = vadd.f32 %v233, %v445
    %447 = vdwg.mxu0
    %448 = vmatpush.bf16.msra.mxu0 %v365
    %449 = vmatpush.bf16.msra.mxu0 %v362
    %450 = vmatpush.bf16.msra.mxu0 %v359
    %451 = vmatpush.bf16.msra.mxu0 %v356
    %452 = vmatpush.bf16.msra.mxu0 %v353
    %453 = vmatpush.bf16.msra.mxu0 %v350
    %454 = vmatpush.bf16.msra.mxu0 %v347
    %455 = vmatpush.bf16.msra.mxu0 %v344
    %456 = vmatmul.bf16.gmra.mxu0 %v254
    %v457 = vpop.f32.mrf.mxu0
    %v458 = vadd.f32 %v234, %v457
    %v459 = vpop.f32.mrf.mxu0
    %v460 = vadd.f32 %v234, %v459
    %461 = vmatmul.bf16.gmra.mxu0 %v255
    %v462 = vpop.f32.mrf.mxu0
    %v463 = vadd.f32 %v234, %v462
    %v464 = vpop.f32.mrf.mxu0
    %v465 = vadd.f32 %v234, %v464
    %466 = vmatmul.bf16.gmra.mxu0 %v256
    %v467 = vpop.f32.mrf.mxu0
    %v468 = vadd.f32 %v234, %v467
    %v469 = vpop.f32.mrf.mxu0
    %v470 = vadd.f32 %v234, %v469
    %471 = vmatmul.bf16.gmra.mxu0 %v257
    %v472 = vpop.f32.mrf.mxu0
    %v473 = vadd.f32 %v234, %v472
    %v474 = vpop.f32.mrf.mxu0
    %v475 = vadd.f32 %v234, %v474
    %476 = vdwg.mxu0
    %477 = vst [vmem:[#allocation2] sm:$0xff] %v400
    %478 = vst [vmem:[#allocation2 + $0x8] sm:$0xff] %v429
    %479 = vst [vmem:[#allocation2 + $0x10] sm:$0xff] %v458
    %480 = vst [vmem:[#allocation2 + $0x18] sm:$0xff] %v402
    %481 = vst [vmem:[#allocation2 + $0x20] sm:$0xff] %v431
    %482 = vst [vmem:[#allocation2 + $0x28] sm:$0xff] %v460
    %483 = vst [vmem:[#allocation2 + $0x30] sm:$0xff] %v405
    %484 = vst [vmem:[#allocation2 + $0x38] sm:$0xff] %v434
    %485 = vst [vmem:[#allocation2 + $0x40] sm:$0xff] %v463
    %486 = vst [vmem:[#allocation2 + $0x48] sm:$0xff] %v407
    %487 = vst [vmem:[#allocation2 + $0x50] sm:$0xff] %v436
    %488 = vst [vmem:[#allocation2 + $0x58] sm:$0xff] %v465
    %489 = vst [vmem:[#allocation2 + $0x60] sm:$0xff] %v410
    %490 = vst [vmem:[#allocation2 + $0x68] sm:$0xff] %v439
    %491 = vst [vmem:[#allocation2 + $0x70] sm:$0xff] %v468
    %492 = vst [vmem:[#allocation2 + $0x78] sm:$0xff] %v412
    %493 = vst [vmem:[#allocation2 + $0x80] sm:$0xff] %v441
    %494 = vst [vmem:[#allocation2 + $0x88] sm:$0xff] %v470
    %495 = vst [vmem:[#allocation2 + $0x90] sm:$0xff] %v415
    %496 = vst [vmem:[#allocation2 + $0x98] sm:$0xff] %v444
    %497 = vst [vmem:[#allocation2 + $0xa0] sm:$0xff] %v473
    %498 = vst [vmem:[#allocation2 + $0xa8] sm:$0xff] %v417
    %499 = vst [vmem:[#allocation2 + $0xb0] sm:$0xff] %v446
    %500 = vst [vmem:[#allocation2 + $0xb8] sm:$0xff] %v475
    %v501 = vld [vmem:[#allocation3] sm:$0xff]
    %v502 = vld [vmem:[#allocation4] sm:$0xff]
    %s503 = smul.u32 0, 3
    %s504 = smul.addr %s503, 8
    %s505 = scalar_lea.vmem [#allocation2], %s504
    %v506 = vld [vmem:[%s505] sm:$0xff]
    %v507 = vld [vmem:[%s505 + $0x8] sm:$0xff]
    %v508 = vld [vmem:[%s505 + $0x10] sm:$0xff]
    %v509 = vpack.c.bf16 %v501, %v501
    %v510 = vld [vmem:[#allocation11] sm:$0xff]
    %v511 = vld [vmem:[#allocation11 + $0x8] sm:$0xf]
    %v512 = vld [vmem:[#allocation11 + $0xc] sm:$0xff]
    %v513 = vld [vmem:[#allocation11 + $0x14] sm:$0xf]
    %v514 = vld [vmem:[#allocation11 + $0x18] sm:$0xff]
    %v515 = vld [vmem:[#allocation11 + $0x20] sm:$0xf]
    %v516 = vld [vmem:[#allocation11 + $0x24] sm:$0xff]
    %v517 = vld [vmem:[#allocation11 + $0x2c] sm:$0xf]
    %v518 = vld [vmem:[#allocation11 + $0x30] sm:$0xff]
    %v519 = vld [vmem:[#allocation11 + $0x38] sm:$0xf]
    %v520 = vld [vmem:[#allocation11 + $0x3c] sm:$0xff]
    %v521 = vld [vmem:[#allocation11 + $0x44] sm:$0xf]
    %v522 = vld [vmem:[#allocation11 + $0x48] sm:$0xff]
    %v523 = vld [vmem:[#allocation11 + $0x50] sm:$0xf]
    %v524 = vld [vmem:[#allocation11 + $0x54] sm:$0xff]
    %v525 = vld [vmem:[#allocation11 + $0x5c] sm:$0xf]
    %v526 = vld [vmem:[#allocation11 + $0x60] sm:$0xff]
    %v527 = vld [vmem:[#allocation11 + $0x68] sm:$0xf]
    %v528 = vld [vmem:[#allocation11 + $0x6c] sm:$0xff]
    %v529 = vld [vmem:[#allocation11 + $0x74] sm:$0xf]
    %v530 = vld [vmem:[#allocation11 + $0x78] sm:$0xff]
    %v531 = vld [vmem:[#allocation11 + $0x80] sm:$0xf]
    %v532 = vld [vmem:[#allocation11 + $0x84] sm:$0xff]
    %v533 = vld [vmem:[#allocation11 + $0x8c] sm:$0xf]
    %v534 = vld [vmem:[#allocation11 + $0x90] sm:$0xff]
    %v535 = vld [vmem:[#allocation11 + $0x98] sm:$0xf]
    %v536 = vld [vmem:[#allocation11 + $0x9c] sm:$0xff]
    %v537 = vld [vmem:[#allocation11 + $0xa4] sm:$0xf]
    %v538 = vld [vmem:[#allocation11 + $0xa8] sm:$0xff]
    %v539 = vld [vmem:[#allocation11 + $0xb0] sm:$0xf]
    %v540 = vld [vmem:[#allocation11 + $0xb4] sm:$0xff]
    %v541 = vld [vmem:[#allocation11 + $0xbc] sm:$0xf]
    %v542 = vld [vmem:[%s4] sm:$0x7]
    %v544 = vperm.slane %v542, 0
    %v545 = vperm.slane %v542, 1
    %v546 = vperm.slane %v542, 2
    %v582 = vunpack.c.l.b16 %v510
    %v583 = vunpack.c.h.b16 %v510
    %v584 = vunpack.c.l.b16 %v511
    %v585 = vunpack.c.l.b16 %v512
    %v586 = vunpack.c.h.b16 %v512
    %v587 = vunpack.c.l.b16 %v513
    %v588 = vunpack.c.l.b16 %v514
    %v589 = vunpack.c.h.b16 %v514
    %v590 = vunpack.c.l.b16 %v515
    %v591 = vunpack.c.l.b16 %v516
    %v592 = vunpack.c.h.b16 %v516
    %v593 = vunpack.c.l.b16 %v517
    %v594 = vunpack.c.l.b16 %v518
    %v595 = vunpack.c.h.b16 %v518
    %v596 = vunpack.c.l.b16 %v519
    %v597 = vunpack.c.l.b16 %v520
    %v598 = vunpack.c.h.b16 %v520
    %v599 = vunpack.c.l.b16 %v521
    %v600 = vunpack.c.l.b16 %v522
    %v601 = vunpack.c.h.b16 %v522
    %v602 = vunpack.c.l.b16 %v523
    %v603 = vunpack.c.l.b16 %v524
    %v604 = vunpack.c.h.b16 %v524
    %v605 = vunpack.c.l.b16 %v525
    %v606 = vunpack.c.l.b16 %v526
    %v607 = vunpack.c.h.b16 %v526
    %v608 = vunpack.c.l.b16 %v527
    %v609 = vunpack.c.l.b16 %v528
    %v610 = vunpack.c.h.b16 %v528
    %v611 = vunpack.c.l.b16 %v529
    %v612 = vunpack.c.l.b16 %v530
    %v613 = vunpack.c.h.b16 %v530
    %v614 = vunpack.c.l.b16 %v531
    %v615 = vunpack.c.l.b16 %v532
    %v616 = vunpack.c.h.b16 %v532
    %v617 = vunpack.c.l.b16 %v533
    %v618 = vunpack.c.l.b16 %v534
    %v619 = vunpack.c.h.b16 %v534
    %v620 = vunpack.c.l.b16 %v535
    %v621 = vunpack.c.l.b16 %v536
    %v622 = vunpack.c.h.b16 %v536
    %v623 = vunpack.c.l.b16 %v537
    %v624 = vunpack.c.l.b16 %v538
    %v625 = vunpack.c.h.b16 %v538
    %v626 = vunpack.c.l.b16 %v539
    %v627 = vunpack.c.l.b16 %v540
    %v628 = vunpack.c.h.b16 %v540
    %v629 = vunpack.c.l.b16 %v541
    %v630 = vpack.c.b16 %v585, %v582
    %v631 = vpack.c.b16 %v586, %v583
    %v632 = vpack.c.b16 %v587, %v584
    %v633 = vpack.c.b16 %v591, %v588
    %v634 = vpack.c.b16 %v592, %v589
    %v635 = vpack.c.b16 %v593, %v590
    %v636 = vpack.c.b16 %v597, %v594
    %v637 = vpack.c.b16 %v598, %v595
    %v638 = vpack.c.b16 %v599, %v596
    %v639 = vpack.c.b16 %v603, %v600
    %v640 = vpack.c.b16 %v604, %v601
    %v641 = vpack.c.b16 %v605, %v602
    %v642 = vpack.c.b16 %v609, %v606
    %v643 = vpack.c.b16 %v610, %v607
    %v644 = vpack.c.b16 %v611, %v608
    %v645 = vpack.c.b16 %v615, %v612
    %v646 = vpack.c.b16 %v616, %v613
    %v647 = vpack.c.b16 %v617, %v614
    %v648 = vpack.c.b16 %v621, %v618
    %v649 = vpack.c.b16 %v622, %v619
    %v650 = vpack.c.b16 %v623, %v620
    %v651 = vpack.c.b16 %v627, %v624
    %v652 = vpack.c.b16 %v628, %v625
    %v653 = vpack.c.b16 %v629, %v626
    %678 = vmatpush.bf16.msra.mxu0 %v651
    %679 = vmatpush.bf16.msra.mxu0 %v648
    %680 = vmatpush.bf16.msra.mxu0 %v645
    %681 = vmatpush.bf16.msra.mxu0 %v642
    %682 = vmatpush.bf16.msra.mxu0 %v639
    %683 = vmatpush.bf16.msra.mxu0 %v636
    %684 = vmatpush.bf16.msra.mxu0 %v633
    %685 = vmatpush.bf16.msra.mxu0 %v630
    %686 = vmatmul.bf16.gmra.mxu0 %v509
    %v687 = vpop.f32.mrf.mxu0
    %v688 = vadd.f32 %v544, %v687
    %v689 = vpop.f32.mrf.mxu0
    %690 = vdwg.mxu0
    %691 = vmatpush.bf16.msra.mxu0 %v652
    %692 = vmatpush.bf16.msra.mxu0 %v649
    %693 = vmatpush.bf16.msra.mxu0 %v646
    %694 = vmatpush.bf16.msra.mxu0 %v643
    %695 = vmatpush.bf16.msra.mxu0 %v640
    %696 = vmatpush.bf16.msra.mxu0 %v637
    %697 = vmatpush.bf16.msra.mxu0 %v634
    %698 = vmatpush.bf16.msra.mxu0 %v631
    %699 = vmatmul.bf16.gmra.mxu0 %v509
    %v700 = vpop.f32.mrf.mxu0
    %v701 = vadd.f32 %v545, %v700
    %v702 = vpop.f32.mrf.mxu0
    %703 = vdwg.mxu0
    %704 = vmatpush.bf16.msra.mxu0 %v653
    %705 = vmatpush.bf16.msra.mxu0 %v650
    %706 = vmatpush.bf16.msra.mxu0 %v647
    %707 = vmatpush.bf16.msra.mxu0 %v644
    %708 = vmatpush.bf16.msra.mxu0 %v641
    %709 = vmatpush.bf16.msra.mxu0 %v638
    %710 = vmatpush.bf16.msra.mxu0 %v635
    %711 = vmatpush.bf16.msra.mxu0 %v632
    %712 = vmatmul.bf16.gmra.mxu0 %v509
    %v713 = vpop.f32.mrf.mxu0
    %v714 = vadd.f32 %v546, %v713
    %v715 = vpop.f32.mrf.mxu0
    %716 = vdwg.mxu0
    %v717 = vadd.f32 %v506, %v688
    %v718 = vxor.u32 %v717, 2147483648
    %v719 = vmul.f32 %v718, 1.442695
    %v720 = vpow.pop %v719
    %v721 = vadd.f32 %v720, 1.0
    %v722 = vrcp.pop %v721
    %v723 = vmul.f32 %v721, %v722
    %v724 = vsub.f32 1.0, %v723
    %v725 = vmul.f32 %v722, %v724
    %v726 = vadd.f32 %v722, %v725
    %vm727 = vweird.f32 %v721
    %vm728 = vweird.f32 %v722
    %vm729 = vmor %vm727, %vm728
    %v730 = vsel %vm729, %v722, %v726
    %v731 = vand.u32 2147483647, %v721
    %vm732 = vcmp.eq.f32.partialorder %v731, 8.507059e+37
    %v733 = vand.u32 %v721, 2147483648
    %v734 = vor.u32 1.1754944e-38, %v733
    %v735 = vsel %vm732, %v734, %v730
    %v736 = vmul.f32 1.0, %v735
    %v737 = vadd.f32 %v507, %v701
    %v738 = vxor.u32 %v737, 2147483648
    %v739 = vmul.f32 %v738, 1.442695
    %v740 = vpow.pop %v739
    %v741 = vadd.f32 %v740, 1.0
    %v742 = vrcp.pop %v741
    %v743 = vmul.f32 %v741, %v742
    %v744 = vsub.f32 1.0, %v743
    %v745 = vmul.f32 %v742, %v744
    %v746 = vadd.f32 %v742, %v745
    %vm747 = vweird.f32 %v741
    %vm748 = vweird.f32 %v742
    %vm749 = vmor %vm747, %vm748
    %v750 = vsel %vm749, %v742, %v746
    %v751 = vand.u32 2147483647, %v741
    %vm752 = vcmp.eq.f32.partialorder %v751, 8.507059e+37
    %v753 = vand.u32 %v741, 2147483648
    %v754 = vor.u32 1.1754944e-38, %v753
    %v755 = vsel %vm752, %v754, %v750
    %v756 = vmul.f32 1.0, %v755
    %v757 = vmul.f32 %v736, %v714
    %v758 = vadd.f32 %v508, %v757
    %v759 = vtanh.pop %v758
    %v760 = vsub.f32 1.0, %v756
    %v761 = vmul.f32 %v760, %v759
    %v762 = vmul.f32 %v756, %v501
    %v763 = vadd.f32 %v761, %v762
    %v764 = vpack.c.bf16 %v763, %v763
    %v765 = vld [vmem:[#allocation14] sm:$0xff]
    %v766 = vld [vmem:[#allocation14 + $0x8] sm:$0xf]
    %v767 = vld [vmem:[#allocation14 + $0xc] sm:$0xff]
    %v768 = vld [vmem:[#allocation14 + $0x14] sm:$0xf]
    %v769 = vld [vmem:[#allocation14 + $0x18] sm:$0xff]
    %v770 = vld [vmem:[#allocation14 + $0x20] sm:$0xf]
    %v771 = vld [vmem:[#allocation14 + $0x24] sm:$0xff]
    %v772 = vld [vmem:[#allocation14 + $0x2c] sm:$0xf]
    %v773 = vld [vmem:[#allocation14 + $0x30] sm:$0xff]
    %v774 = vld [vmem:[#allocation14 + $0x38] sm:$0xf]
    %v775 = vld [vmem:[#allocation14 + $0x3c] sm:$0xff]
    %v776 = vld [vmem:[#allocation14 + $0x44] sm:$0xf]
    %v777 = vld [vmem:[#allocation14 + $0x48] sm:$0xff]
    %v778 = vld [vmem:[#allocation14 + $0x50] sm:$0xf]
    %v779 = vld [vmem:[#allocation14 + $0x54] sm:$0xff]
    %v780 = vld [vmem:[#allocation14 + $0x5c] sm:$0xf]
    %v781 = vld [vmem:[#allocation14 + $0x60] sm:$0xff]
    %v782 = vld [vmem:[#allocation14 + $0x68] sm:$0xf]
    %v783 = vld [vmem:[#allocation14 + $0x6c] sm:$0xff]
    %v784 = vld [vmem:[#allocation14 + $0x74] sm:$0xf]
    %v785 = vld [vmem:[#allocation14 + $0x78] sm:$0xff]
    %v786 = vld [vmem:[#allocation14 + $0x80] sm:$0xf]
    %v787 = vld [vmem:[#allocation14 + $0x84] sm:$0xff]
    %v788 = vld [vmem:[#allocation14 + $0x8c] sm:$0xf]
    %v789 = vld [vmem:[#allocation14 + $0x90] sm:$0xff]
    %v790 = vld [vmem:[#allocation14 + $0x98] sm:$0xf]
    %v791 = vld [vmem:[#allocation14 + $0x9c] sm:$0xff]
    %v792 = vld [vmem:[#allocation14 + $0xa4] sm:$0xf]
    %v793 = vld [vmem:[#allocation14 + $0xa8] sm:$0xff]
    %v794 = vld [vmem:[#allocation14 + $0xb0] sm:$0xf]
    %v795 = vld [vmem:[#allocation14 + $0xb4] sm:$0xff]
    %v796 = vld [vmem:[#allocation14 + $0xbc] sm:$0xf]
    %v797 = vld [vmem:[%s7] sm:$0x7]
    %v799 = vperm.slane %v797, 0
    %v800 = vperm.slane %v797, 1
    %v801 = vperm.slane %v797, 2
    %v837 = vunpack.c.l.b16 %v765
    %v838 = vunpack.c.h.b16 %v765
    %v839 = vunpack.c.l.b16 %v766
    %v840 = vunpack.c.l.b16 %v767
    %v841 = vunpack.c.h.b16 %v767
    %v842 = vunpack.c.l.b16 %v768
    %v843 = vunpack.c.l.b16 %v769
    %v844 = vunpack.c.h.b16 %v769
    %v845 = vunpack.c.l.b16 %v770
    %v846 = vunpack.c.l.b16 %v771
    %v847 = vunpack.c.h.b16 %v771
    %v848 = vunpack.c.l.b16 %v772
    %v849 = vunpack.c.l.b16 %v773
    %v850 = vunpack.c.h.b16 %v773
    %v851 = vunpack.c.l.b16 %v774
    %v852 = vunpack.c.l.b16 %v775
    %v853 = vunpack.c.h.b16 %v775
    %v854 = vunpack.c.l.b16 %v776
    %v855 = vunpack.c.l.b16 %v777
    %v856 = vunpack.c.h.b16 %v777
    %v857 = vunpack.c.l.b16 %v778
    %v858 = vunpack.c.l.b16 %v779
    %v859 = vunpack.c.h.b16 %v779
    %v860 = vunpack.c.l.b16 %v780
    %v861 = vunpack.c.l.b16 %v781
    %v862 = vunpack.c.h.b16 %v781
    %v863 = vunpack.c.l.b16 %v782
    %v864 = vunpack.c.l.b16 %v783
    %v865 = vunpack.c.h.b16 %v783
    %v866 = vunpack.c.l.b16 %v784
    %v867 = vunpack.c.l.b16 %v785
    %v868 = vunpack.c.h.b16 %v785
    %v869 = vunpack.c.l.b16 %v786
    %v870 = vunpack.c.l.b16 %v787
    %v871 = vunpack.c.h.b16 %v787
    %v872 = vunpack.c.l.b16 %v788
    %v873 = vunpack.c.l.b16 %v789
    %v874 = vunpack.c.h.b16 %v789
    %v875 = vunpack.c.l.b16 %v790
    %v876 = vunpack.c.l.b16 %v791
    %v877 = vunpack.c.h.b16 %v791
    %v878 = vunpack.c.l.b16 %v792
    %v879 = vunpack.c.l.b16 %v793
    %v880 = vunpack.c.h.b16 %v793
    %v881 = vunpack.c.l.b16 %v794
    %v882 = vunpack.c.l.b16 %v795
    %v883 = vunpack.c.h.b16 %v795
    %v884 = vunpack.c.l.b16 %v796
    %v885 = vpack.c.b16 %v840, %v837
    %v886 = vpack.c.b16 %v841, %v838
    %v887 = vpack.c.b16 %v842, %v839
    %v888 = vpack.c.b16 %v846, %v843
    %v889 = vpack.c.b16 %v847, %v844
    %v890 = vpack.c.b16 %v848, %v845
    %v891 = vpack.c.b16 %v852, %v849
    %v892 = vpack.c.b16 %v853, %v850
    %v893 = vpack.c.b16 %v854, %v851
    %v894 = vpack.c.b16 %v858, %v855
    %v895 = vpack.c.b16 %v859, %v856
    %v896 = vpack.c.b16 %v860, %v857
    %v897 = vpack.c.b16 %v864, %v861
    %v898 = vpack.c.b16 %v865, %v862
    %v899 = vpack.c.b16 %v866, %v863
    %v900 = vpack.c.b16 %v870, %v867
    %v901 = vpack.c.b16 %v871, %v868
    %v902 = vpack.c.b16 %v872, %v869
    %v903 = vpack.c.b16 %v876, %v873
    %v904 = vpack.c.b16 %v877, %v874
    %v905 = vpack.c.b16 %v878, %v875
    %v906 = vpack.c.b16 %v882, %v879
    %v907 = vpack.c.b16 %v883, %v880
    %v908 = vpack.c.b16 %v884, %v881
    %933 = vmatpush.bf16.msra.mxu0 %v906
    %934 = vmatpush.bf16.msra.mxu0 %v903
    %935 = vmatpush.bf16.msra.mxu0 %v900
    %936 = vmatpush.bf16.msra.mxu0 %v897
    %937 = vmatpush.bf16.msra.mxu0 %v894
    %938 = vmatpush.bf16.msra.mxu0 %v891
    %939 = vmatpush.bf16.msra.mxu0 %v888
    %940 = vmatpush.bf16.msra.mxu0 %v885
    %941 = vmatmul.bf16.gmra.mxu0 %v764
    %v942 = vpop.f32.mrf.mxu0
    %v943 = vadd.f32 %v799, %v942
    %v944 = vpop.f32.mrf.mxu0
    %945 = vdwg.mxu0
    %946 = vmatpush.bf16.msra.mxu0 %v907
    %947 = vmatpush.bf16.msra.mxu0 %v904
    %948 = vmatpush.bf16.msra.mxu0 %v901
    %949 = vmatpush.bf16.msra.mxu0 %v898
    %950 = vmatpush.bf16.msra.mxu0 %v895
    %951 = vmatpush.bf16.msra.mxu0 %v892
    %952 = vmatpush.bf16.msra.mxu0 %v889
    %953 = vmatpush.bf16.msra.mxu0 %v886
    %954 = vmatmul.bf16.gmra.mxu0 %v764
    %v955 = vpop.f32.mrf.mxu0
    %v956 = vadd.f32 %v800, %v955
    %v957 = vpop.f32.mrf.mxu0
    %958 = vdwg.mxu0
    %959 = vmatpush.bf16.msra.mxu0 %v908
    %960 = vmatpush.bf16.msra.mxu0 %v905
    %961 = vmatpush.bf16.msra.mxu0 %v902
    %962 = vmatpush.bf16.msra.mxu0 %v899
    %963 = vmatpush.bf16.msra.mxu0 %v896
    %964 = vmatpush.bf16.msra.mxu0 %v893
    %965 = vmatpush.bf16.msra.mxu0 %v890
    %966 = vmatpush.bf16.msra.mxu0 %v887
    %967 = vmatmul.bf16.gmra.mxu0 %v764
    %v968 = vpop.f32.mrf.mxu0
    %v969 = vadd.f32 %v801, %v968
    %v970 = vpop.f32.mrf.mxu0
    %971 = vdwg.mxu0
    %v972 = vpack.c.bf16 %v502, %v502
    %v973 = vld [vmem:[#allocation15] sm:$0xff]
    %v974 = vld [vmem:[#allocation15 + $0x8] sm:$0xf]
    %v975 = vld [vmem:[#allocation15 + $0xc] sm:$0xff]
    %v976 = vld [vmem:[#allocation15 + $0x14] sm:$0xf]
    %v977 = vld [vmem:[#allocation15 + $0x18] sm:$0xff]
    %v978 = vld [vmem:[#allocation15 + $0x20] sm:$0xf]
    %v979 = vld [vmem:[#allocation15 + $0x24] sm:$0xff]
    %v980 = vld [vmem:[#allocation15 + $0x2c] sm:$0xf]
    %v981 = vld [vmem:[#allocation15 + $0x30] sm:$0xff]
    %v982 = vld [vmem:[#allocation15 + $0x38] sm:$0xf]
    %v983 = vld [vmem:[#allocation15 + $0x3c] sm:$0xff]
    %v984 = vld [vmem:[#allocation15 + $0x44] sm:$0xf]
    %v985 = vld [vmem:[#allocation15 + $0x48] sm:$0xff]
    %v986 = vld [vmem:[#allocation15 + $0x50] sm:$0xf]
    %v987 = vld [vmem:[#allocation15 + $0x54] sm:$0xff]
    %v988 = vld [vmem:[#allocation15 + $0x5c] sm:$0xf]
    %v989 = vld [vmem:[#allocation15 + $0x60] sm:$0xff]
    %v990 = vld [vmem:[#allocation15 + $0x68] sm:$0xf]
    %v991 = vld [vmem:[#allocation15 + $0x6c] sm:$0xff]
    %v992 = vld [vmem:[#allocation15 + $0x74] sm:$0xf]
    %v993 = vld [vmem:[#allocation15 + $0x78] sm:$0xff]
    %v994 = vld [vmem:[#allocation15 + $0x80] sm:$0xf]
    %v995 = vld [vmem:[#allocation15 + $0x84] sm:$0xff]
    %v996 = vld [vmem:[#allocation15 + $0x8c] sm:$0xf]
    %v997 = vld [vmem:[#allocation15 + $0x90] sm:$0xff]
    %v998 = vld [vmem:[#allocation15 + $0x98] sm:$0xf]
    %v999 = vld [vmem:[#allocation15 + $0x9c] sm:$0xff]
    %v1000 = vld [vmem:[#allocation15 + $0xa4] sm:$0xf]
    %v1001 = vld [vmem:[#allocation15 + $0xa8] sm:$0xff]
    %v1002 = vld [vmem:[#allocation15 + $0xb0] sm:$0xf]
    %v1003 = vld [vmem:[#allocation15 + $0xb4] sm:$0xff]
    %v1004 = vld [vmem:[#allocation15 + $0xbc] sm:$0xf]
    %v1005 = vld [vmem:[#allocation17] sm:$0x7]
    %v1007 = vperm.slane %v1005, 0
    %v1008 = vperm.slane %v1005, 1
    %v1009 = vperm.slane %v1005, 2
    %v1045 = vunpack.c.l.b16 %v973
    %v1046 = vunpack.c.h.b16 %v973
    %v1047 = vunpack.c.l.b16 %v974
    %v1048 = vunpack.c.l.b16 %v975
    %v1049 = vunpack.c.h.b16 %v975
    %v1050 = vunpack.c.l.b16 %v976
    %v1051 = vunpack.c.l.b16 %v977
    %v1052 = vunpack.c.h.b16 %v977
    %v1053 = vunpack.c.l.b16 %v978
    %v1054 = vunpack.c.l.b16 %v979
    %v1055 = vunpack.c.h.b16 %v979
    %v1056 = vunpack.c.l.b16 %v980
    %v1057 = vunpack.c.l.b16 %v981
    %v1058 = vunpack.c.h.b16 %v981
    %v1059 = vunpack.c.l.b16 %v982
    %v1060 = vunpack.c.l.b16 %v983
    %v1061 = vunpack.c.h.b16 %v983
    %v1062 = vunpack.c.l.b16 %v984
    %v1063 = vunpack.c.l.b16 %v985
    %v1064 = vunpack.c.h.b16 %v985
    %v1065 = vunpack.c.l.b16 %v986
    %v1066 = vunpack.c.l.b16 %v987
    %v1067 = vunpack.c.h.b16 %v987
    %v1068 = vunpack.c.l.b16 %v988
    %v1069 = vunpack.c.l.b16 %v989
    %v1070 = vunpack.c.h.b16 %v989
    %v1071 = vunpack.c.l.b16 %v990
    %v1072 = vunpack.c.l.b16 %v991
    %v1073 = vunpack.c.h.b16 %v991
    %v1074 = vunpack.c.l.b16 %v992
    %v1075 = vunpack.c.l.b16 %v993
    %v1076 = vunpack.c.h.b16 %v993
    %v1077 = vunpack.c.l.b16 %v994
    %v1078 = vunpack.c.l.b16 %v995
    %v1079 = vunpack.c.h.b16 %v995
    %v1080 = vunpack.c.l.b16 %v996
    %v1081 = vunpack.c.l.b16 %v997
    %v1082 = vunpack.c.h.b16 %v997
    %v1083 = vunpack.c.l.b16 %v998
    %v1084 = vunpack.c.l.b16 %v999
    %v1085 = vunpack.c.h.b16 %v999
    %v1086 = vunpack.c.l.b16 %v1000
    %v1087 = vunpack.c.l.b16 %v1001
    %v1088 = vunpack.c.h.b16 %v1001
    %v1089 = vunpack.c.l.b16 %v1002
    %v1090 = vunpack.c.l.b16 %v1003
    %v1091 = vunpack.c.h.b16 %v1003
    %v1092 = vunpack.c.l.b16 %v1004
    %v1093 = vpack.c.b16 %v1048, %v1045
    %v1094 = vpack.c.b16 %v1049, %v1046
    %v1095 = vpack.c.b16 %v1050, %v1047
    %v1096 = vpack.c.b16 %v1054, %v1051
    %v1097 = vpack.c.b16 %v1055, %v1052
    %v1098 = vpack.c.b16 %v1056, %v1053
    %v1099 = vpack.c.b16 %v1060, %v1057
    %v1100 = vpack.c.b16 %v1061, %v1058
    %v1101 = vpack.c.b16 %v1062, %v1059
    %v1102 = vpack.c.b16 %v1066, %v1063
    %v1103 = vpack.c.b16 %v1067, %v1064
    %v1104 = vpack.c.b16 %v1068, %v1065
    %v1105 = vpack.c.b16 %v1072, %v1069
    %v1106 = vpack.c.b16 %v1073, %v1070
    %v1107 = vpack.c.b16 %v1074, %v1071
    %v1108 = vpack.c.b16 %v1078, %v1075
    %v1109 = vpack.c.b16 %v1079, %v1076
    %v1110 = vpack.c.b16 %v1080, %v1077
    %v1111 = vpack.c.b16 %v1084, %v1081
    %v1112 = vpack.c.b16 %v1085, %v1082
    %v1113 = vpack.c.b16 %v1086, %v1083
    %v1114 = vpack.c.b16 %v1090, %v1087
    %v1115 = vpack.c.b16 %v1091, %v1088
    %v1116 = vpack.c.b16 %v1092, %v1089
    %1141 = vmatpush.bf16.msra.mxu0 %v1114
    %1142 = vmatpush.bf16.msra.mxu0 %v1111
    %1143 = vmatpush.bf16.msra.mxu0 %v1108
    %1144 = vmatpush.bf16.msra.mxu0 %v1105
    %1145 = vmatpush.bf16.msra.mxu0 %v1102
    %1146 = vmatpush.bf16.msra.mxu0 %v1099
    %1147 = vmatpush.bf16.msra.mxu0 %v1096
    %1148 = vmatpush.bf16.msra.mxu0 %v1093
    %1149 = vmatmul.bf16.gmra.mxu0 %v972
    %v1150 = vpop.f32.mrf.mxu0
    %v1151 = vadd.f32 %v1007, %v1150
    %v1152 = vpop.f32.mrf.mxu0
    %1153 = vdwg.mxu0
    %1154 = vmatpush.bf16.msra.mxu0 %v1115
    %1155 = vmatpush.bf16.msra.mxu0 %v1112
    %1156 = vmatpush.bf16.msra.mxu0 %v1109
    %1157 = vmatpush.bf16.msra.mxu0 %v1106
    %1158 = vmatpush.bf16.msra.mxu0 %v1103
    %1159 = vmatpush.bf16.msra.mxu0 %v1100
    %1160 = vmatpush.bf16.msra.mxu0 %v1097
    %1161 = vmatpush.bf16.msra.mxu0 %v1094
    %1162 = vmatmul.bf16.gmra.mxu0 %v972
    %v1163 = vpop.f32.mrf.mxu0
    %v1164 = vadd.f32 %v1008, %v1163
    %v1165 = vpop.f32.mrf.mxu0
    %1166 = vdwg.mxu0
    %1167 = vmatpush.bf16.msra.mxu0 %v1116
    %1168 = vmatpush.bf16.msra.mxu0 %v1113
    %1169 = vmatpush.bf16.msra.mxu0 %v1110
    %1170 = vmatpush.bf16.msra.mxu0 %v1107
    %1171 = vmatpush.bf16.msra.mxu0 %v1104
    %1172 = vmatpush.bf16.msra.mxu0 %v1101
    %1173 = vmatpush.bf16.msra.mxu0 %v1098
    %1174 = vmatpush.bf16.msra.mxu0 %v1095
    %1175 = vmatmul.bf16.gmra.mxu0 %v972
    %v1176 = vpop.f32.mrf.mxu0
    %v1177 = vadd.f32 %v1009, %v1176
    %v1178 = vpop.f32.mrf.mxu0
    %1179 = vdwg.mxu0
    %v1180 = vadd.f32 %v943, %v1151
    %v1181 = vxor.u32 %v1180, 2147483648
    %v1182 = vmul.f32 %v1181, 1.442695
    %v1183 = vpow.pop %v1182
    %v1184 = vadd.f32 %v1183, 1.0
    %v1185 = vrcp.pop %v1184
    %v1186 = vmul.f32 %v1184, %v1185
    %v1187 = vsub.f32 1.0, %v1186
    %v1188 = vmul.f32 %v1185, %v1187
    %v1189 = vadd.f32 %v1185, %v1188
    %vm1190 = vweird.f32 %v1184
    %vm1191 = vweird.f32 %v1185
    %vm1192 = vmor %vm1190, %vm1191
    %v1193 = vsel %vm1192, %v1185, %v1189
    %v1194 = vand.u32 2147483647, %v1184
    %vm1195 = vcmp.eq.f32.partialorder %v1194, 8.507059e+37
    %v1196 = vand.u32 %v1184, 2147483648
    %v1197 = vor.u32 1.1754944e-38, %v1196
    %v1198 = vsel %vm1195, %v1197, %v1193
    %v1199 = vmul.f32 1.0, %v1198
    %v1200 = vadd.f32 %v956, %v1164
    %v1201 = vxor.u32 %v1200, 2147483648
    %v1202 = vmul.f32 %v1201, 1.442695
    %v1203 = vpow.pop %v1202
    %v1204 = vadd.f32 %v1203, 1.0
    %v1205 = vrcp.pop %v1204
    %v1206 = vmul.f32 %v1204, %v1205
    %v1207 = vsub.f32 1.0, %v1206
    %v1208 = vmul.f32 %v1205, %v1207
    %v1209 = vadd.f32 %v1205, %v1208
    %vm1210 = vweird.f32 %v1204
    %vm1211 = vweird.f32 %v1205
    %vm1212 = vmor %vm1210, %vm1211
    %v1213 = vsel %vm1212, %v1205, %v1209
    %v1214 = vand.u32 2147483647, %v1204
    %vm1215 = vcmp.eq.f32.partialorder %v1214, 8.507059e+37
    %v1216 = vand.u32 %v1204, 2147483648
    %v1217 = vor.u32 1.1754944e-38, %v1216
    %v1218 = vsel %vm1215, %v1217, %v1213
    %v1219 = vmul.f32 1.0, %v1218
    %v1220 = vmul.f32 %v1199, %v1177
    %v1221 = vadd.f32 %v969, %v1220
    %v1222 = vtanh.pop %v1221
    %v1223 = vsub.f32 1.0, %v1219
    %v1224 = vmul.f32 %v1223, %v1222
    %v1225 = vmul.f32 %v1219, %v502
    %v1226 = vadd.f32 %v1224, %v1225
    %s1227 = smul.u32 1, 3
    %s1228 = smul.addr %s1227, 8
    %s1229 = scalar_lea.vmem [#allocation2], %s1228
    %v1230 = vld [vmem:[%s1229] sm:$0xff]
    %v1231 = vld [vmem:[%s1229 + $0x8] sm:$0xff]
    %v1232 = vld [vmem:[%s1229 + $0x10] sm:$0xff]
    %1233 = vmatpush.bf16.msra.mxu0 %v651
    %1234 = vmatpush.bf16.msra.mxu0 %v648
    %1235 = vmatpush.bf16.msra.mxu0 %v645
    %1236 = vmatpush.bf16.msra.mxu0 %v642
    %1237 = vmatpush.bf16.msra.mxu0 %v639
    %1238 = vmatpush.bf16.msra.mxu0 %v636
    %1239 = vmatpush.bf16.msra.mxu0 %v633
    %1240 = vmatpush.bf16.msra.mxu0 %v630
    %1241 = vmatmul.bf16.gmra.mxu0 %v764
    %v1242 = vpop.f32.mrf.mxu0
    %v1243 = vadd.f32 %v544, %v1242
    %v1244 = vpop.f32.mrf.mxu0
    %1245 = vdwg.mxu0
    %1246 = vmatpush.bf16.msra.mxu0 %v652
    %1247 = vmatpush.bf16.msra.mxu0 %v649
    %1248 = vmatpush.bf16.msra.mxu0 %v646
    %1249 = vmatpush.bf16.msra.mxu0 %v643
    %1250 = vmatpush.bf16.msra.mxu0 %v640
    %1251 = vmatpush.bf16.msra.mxu0 %v637
    %1252 = vmatpush.bf16.msra.mxu0 %v634
    %1253 = vmatpush.bf16.msra.mxu0 %v631
    %1254 = vmatmul.bf16.gmra.mxu0 %v764
    %v1255 = vpop.f32.mrf.mxu0
    %v1256 = vadd.f32 %v545, %v1255
    %v1257 = vpop.f32.mrf.mxu0
    %1258 = vdwg.mxu0
    %1259 = vmatpush.bf16.msra.mxu0 %v653
    %1260 = vmatpush.bf16.msra.mxu0 %v650
    %1261 = vmatpush.bf16.msra.mxu0 %v647
    %1262 = vmatpush.bf16.msra.mxu0 %v644
    %1263 = vmatpush.bf16.msra.mxu0 %v641
    %1264 = vmatpush.bf16.msra.mxu0 %v638
    %1265 = vmatpush.bf16.msra.mxu0 %v635
    %1266 = vmatpush.bf16.msra.mxu0 %v632
    %1267 = vmatmul.bf16.gmra.mxu0 %v764
    %v1268 = vpop.f32.mrf.mxu0
    %v1269 = vadd.f32 %v546, %v1268
    %v1270 = vpop.f32.mrf.mxu0
    %1271 = vdwg.mxu0
    %v1272 = vadd.f32 %v1230, %v1243
    %v1273 = vxor.u32 %v1272, 2147483648
    %v1274 = vmul.f32 %v1273, 1.442695
    %v1275 = vpow.pop %v1274
    %v1276 = vadd.f32 %v1275, 1.0
    %v1277 = vrcp.pop %v1276
    %v1278 = vmul.f32 %v1276, %v1277
    %v1279 = vsub.f32 1.0, %v1278
    %v1280 = vmul.f32 %v1277, %v1279
    %v1281 = vadd.f32 %v1277, %v1280
    %vm1282 = vweird.f32 %v1276
    %vm1283 = vweird.f32 %v1277
    %vm1284 = vmor %vm1282, %vm1283
    %v1285 = vsel %vm1284, %v1277, %v1281
    %v1286 = vand.u32 2147483647, %v1276
    %vm1287 = vcmp.eq.f32.partialorder %v1286, 8.507059e+37
    %v1288 = vand.u32 %v1276, 2147483648
    %v1289 = vor.u32 1.1754944e-38, %v1288
    %v1290 = vsel %vm1287, %v1289, %v1285
    %v1291 = vmul.f32 1.0, %v1290
    %v1292 = vadd.f32 %v1231, %v1256
    %v1293 = vxor.u32 %v1292, 2147483648
    %v1294 = vmul.f32 %v1293, 1.442695
    %v1295 = vpow.pop %v1294
    %v1296 = vadd.f32 %v1295, 1.0
    %v1297 = vrcp.pop %v1296
    %v1298 = vmul.f32 %v1296, %v1297
    %v1299 = vsub.f32 1.0, %v1298
    %v1300 = vmul.f32 %v1297, %v1299
    %v1301 = vadd.f32 %v1297, %v1300
    %vm1302 = vweird.f32 %v1296
    %vm1303 = vweird.f32 %v1297
    %vm1304 = vmor %vm1302, %vm1303
    %v1305 = vsel %vm1304, %v1297, %v1301
    %v1306 = vand.u32 2147483647, %v1296
    %vm1307 = vcmp.eq.f32.partialorder %v1306, 8.507059e+37
    %v1308 = vand.u32 %v1296, 2147483648
    %v1309 = vor.u32 1.1754944e-38, %v1308
    %v1310 = vsel %vm1307, %v1309, %v1305
    %v1311 = vmul.f32 1.0, %v1310
    %v1312 = vmul.f32 %v1291, %v1269
    %v1313 = vadd.f32 %v1232, %v1312
    %v1314 = vtanh.pop %v1313
    %v1315 = vsub.f32 1.0, %v1311
    %v1316 = vmul.f32 %v1315, %v1314
    %v1317 = vmul.f32 %v1311, %v763
    %v1318 = vadd.f32 %v1316, %v1317
    %v1319 = vpack.c.bf16 %v1318, %v1318
    %1320 = vmatpush.bf16.msra.mxu0 %v906
    %1321 = vmatpush.bf16.msra.mxu0 %v903
    %1322 = vmatpush.bf16.msra.mxu0 %v900
    %1323 = vmatpush.bf16.msra.mxu0 %v897
    %1324 = vmatpush.bf16.msra.mxu0 %v894
    %1325 = vmatpush.bf16.msra.mxu0 %v891
    %1326 = vmatpush.bf16.msra.mxu0 %v888
    %1327 = vmatpush.bf16.msra.mxu0 %v885
    %1328 = vmatmul.bf16.gmra.mxu0 %v1319
    %v1329 = vpop.f32.mrf.mxu0
    %v1330 = vadd.f32 %v799, %v1329
    %v1331 = vpop.f32.mrf.mxu0
    %1332 = vdwg.mxu0
    %1333 = vmatpush.bf16.msra.mxu0 %v907
    %1334 = vmatpush.bf16.msra.mxu0 %v904
    %1335 = vmatpush.bf16.msra.mxu0 %v901
    %1336 = vmatpush.bf16.msra.mxu0 %v898
    %1337 = vmatpush.bf16.msra.mxu0 %v895
    %1338 = vmatpush.bf16.msra.mxu0 %v892
    %1339 = vmatpush.bf16.msra.mxu0 %v889
    %1340 = vmatpush.bf16.msra.mxu0 %v886
    %1341 = vmatmul.bf16.gmra.mxu0 %v1319
    %v1342 = vpop.f32.mrf.mxu0
    %v1343 = vadd.f32 %v800, %v1342
    %v1344 = vpop.f32.mrf.mxu0
    %1345 = vdwg.mxu0
    %1346 = vmatpush.bf16.msra.mxu0 %v908
    %1347 = vmatpush.bf16.msra.mxu0 %v905
    %1348 = vmatpush.bf16.msra.mxu0 %v902
    %1349 = vmatpush.bf16.msra.mxu0 %v899
    %1350 = vmatpush.bf16.msra.mxu0 %v896
    %1351 = vmatpush.bf16.msra.mxu0 %v893
    %1352 = vmatpush.bf16.msra.mxu0 %v890
    %1353 = vmatpush.bf16.msra.mxu0 %v887
    %1354 = vmatmul.bf16.gmra.mxu0 %v1319
    %v1355 = vpop.f32.mrf.mxu0
    %v1356 = vadd.f32 %v801, %v1355
    %v1357 = vpop.f32.mrf.mxu0
    %1358 = vdwg.mxu0
    %v1359 = vpack.c.bf16 %v1226, %v1226
    %1360 = vmatpush.bf16.msra.mxu0 %v1114
    %1361 = vmatpush.bf16.msra.mxu0 %v1111
    %1362 = vmatpush.bf16.msra.mxu0 %v1108
    %1363 = vmatpush.bf16.msra.mxu0 %v1105
    %1364 = vmatpush.bf16.msra.mxu0 %v1102
    %1365 = vmatpush.bf16.msra.mxu0 %v1099
    %1366 = vmatpush.bf16.msra.mxu0 %v1096
    %1367 = vmatpush.bf16.msra.mxu0 %v1093
    %1368 = vmatmul.bf16.gmra.mxu0 %v1359
    %v1369 = vpop.f32.mrf.mxu0
    %v1370 = vadd.f32 %v1007, %v1369
    %v1371 = vpop.f32.mrf.mxu0
    %1372 = vdwg.mxu0
    %1373 = vmatpush.bf16.msra.mxu0 %v1115
    %1374 = vmatpush.bf16.msra.mxu0 %v1112
    %1375 = vmatpush.bf16.msra.mxu0 %v1109
    %1376 = vmatpush.bf16.msra.mxu0 %v1106
    %1377 = vmatpush.bf16.msra.mxu0 %v1103
    %1378 = vmatpush.bf16.msra.mxu0 %v1100
    %1379 = vmatpush.bf16.msra.mxu0 %v1097
    %1380 = vmatpush.bf16.msra.mxu0 %v1094
    %1381 = vmatmul.bf16.gmra.mxu0 %v1359
    %v1382 = vpop.f32.mrf.mxu0
    %v1383 = vadd.f32 %v1008, %v1382
    %v1384 = vpop.f32.mrf.mxu0
    %1385 = vdwg.mxu0
    %1386 = vmatpush.bf16.msra.mxu0 %v1116
    %1387 = vmatpush.bf16.msra.mxu0 %v1113
    %1388 = vmatpush.bf16.msra.mxu0 %v1110
    %1389 = vmatpush.bf16.msra.mxu0 %v1107
    %1390 = vmatpush.bf16.msra.mxu0 %v1104
    %1391 = vmatpush.bf16.msra.mxu0 %v1101
    %1392 = vmatpush.bf16.msra.mxu0 %v1098
    %1393 = vmatpush.bf16.msra.mxu0 %v1095
    %1394 = vmatmul.bf16.gmra.mxu0 %v1359
    %v1395 = vpop.f32.mrf.mxu0
    %v1396 = vadd.f32 %v1009, %v1395
    %v1397 = vpop.f32.mrf.mxu0
    %1398 = vdwg.mxu0
    %v1399 = vadd.f32 %v1330, %v1370
    %v1400 = vxor.u32 %v1399, 2147483648
    %v1401 = vmul.f32 %v1400, 1.442695
    %v1402 = vpow.pop %v1401
    %v1403 = vadd.f32 %v1402, 1.0
    %v1404 = vrcp.pop %v1403
    %v1405 = vmul.f32 %v1403, %v1404
    %v1406 = vsub.f32 1.0, %v1405
    %v1407 = vmul.f32 %v1404, %v1406
    %v1408 = vadd.f32 %v1404, %v1407
    %vm1409 = vweird.f32 %v1403
    %vm1410 = vweird.f32 %v1404
    %vm1411 = vmor %vm1409, %vm1410
    %v1412 = vsel %vm1411, %v1404, %v1408
    %v1413 = vand.u32 2147483647, %v1403
    %vm1414 = vcmp.eq.f32.partialorder %v1413, 8.507059e+37
    %v1415 = vand.u32 %v1403, 2147483648
    %v1416 = vor.u32 1.1754944e-38, %v1415
    %v1417 = vsel %vm1414, %v1416, %v1412
    %v1418 = vmul.f32 1.0, %v1417
    %v1419 = vadd.f32 %v1343, %v1383
    %v1420 = vxor.u32 %v1419, 2147483648
    %v1421 = vmul.f32 %v1420, 1.442695
    %v1422 = vpow.pop %v1421
    %v1423 = vadd.f32 %v1422, 1.0
    %v1424 = vrcp.pop %v1423
    %v1425 = vmul.f32 %v1423, %v1424
    %v1426 = vsub.f32 1.0, %v1425
    %v1427 = vmul.f32 %v1424, %v1426
    %v1428 = vadd.f32 %v1424, %v1427
    %vm1429 = vweird.f32 %v1423
    %vm1430 = vweird.f32 %v1424
    %vm1431 = vmor %vm1429, %vm1430
    %v1432 = vsel %vm1431, %v1424, %v1428
    %v1433 = vand.u32 2147483647, %v1423
    %vm1434 = vcmp.eq.f32.partialorder %v1433, 8.507059e+37
    %v1435 = vand.u32 %v1423, 2147483648
    %v1436 = vor.u32 1.1754944e-38, %v1435
    %v1437 = vsel %vm1434, %v1436, %v1432
    %v1438 = vmul.f32 1.0, %v1437
    %v1439 = vmul.f32 %v1418, %v1396
    %v1440 = vadd.f32 %v1356, %v1439
    %v1441 = vtanh.pop %v1440
    %v1442 = vsub.f32 1.0, %v1438
    %v1443 = vmul.f32 %v1442, %v1441
    %v1444 = vmul.f32 %v1438, %v1226
    %v1445 = vadd.f32 %v1443, %v1444
    %s1446 = smul.u32 2, 3
    %s1447 = smul.addr %s1446, 8
    %s1448 = scalar_lea.vmem [#allocation2], %s1447
    %v1449 = vld [vmem:[%s1448] sm:$0xff]
    %v1450 = vld [vmem:[%s1448 + $0x8] sm:$0xff]
    %v1451 = vld [vmem:[%s1448 + $0x10] sm:$0xff]
    %1452 = vmatpush.bf16.msra.mxu0 %v651
    %1453 = vmatpush.bf16.msra.mxu0 %v648
    %1454 = vmatpush.bf16.msra.mxu0 %v645
    %1455 = vmatpush.bf16.msra.mxu0 %v642
    %1456 = vmatpush.bf16.msra.mxu0 %v639
    %1457 = vmatpush.bf16.msra.mxu0 %v636
    %1458 = vmatpush.bf16.msra.mxu0 %v633
    %1459 = vmatpush.bf16.msra.mxu0 %v630
    %1460 = vmatmul.bf16.gmra.mxu0 %v1319
    %v1461 = vpop.f32.mrf.mxu0
    %v1462 = vadd.f32 %v544, %v1461
    %v1463 = vpop.f32.mrf.mxu0
    %1464 = vdwg.mxu0
    %1465 = vmatpush.bf16.msra.mxu0 %v652
    %1466 = vmatpush.bf16.msra.mxu0 %v649
    %1467 = vmatpush.bf16.msra.mxu0 %v646
    %1468 = vmatpush.bf16.msra.mxu0 %v643
    %1469 = vmatpush.bf16.msra.mxu0 %v640
    %1470 = vmatpush.bf16.msra.mxu0 %v637
    %1471 = vmatpush.bf16.msra.mxu0 %v634
    %1472 = vmatpush.bf16.msra.mxu0 %v631
    %1473 = vmatmul.bf16.gmra.mxu0 %v1319
    %v1474 = vpop.f32.mrf.mxu0
    %v1475 = vadd.f32 %v545, %v1474
    %v1476 = vpop.f32.mrf.mxu0
    %1477 = vdwg.mxu0
    %1478 = vmatpush.bf16.msra.mxu0 %v653
    %1479 = vmatpush.bf16.msra.mxu0 %v650
    %1480 = vmatpush.bf16.msra.mxu0 %v647
    %1481 = vmatpush.bf16.msra.mxu0 %v644
    %1482 = vmatpush.bf16.msra.mxu0 %v641
    %1483 = vmatpush.bf16.msra.mxu0 %v638
    %1484 = vmatpush.bf16.msra.mxu0 %v635
    %1485 = vmatpush.bf16.msra.mxu0 %v632
    %1486 = vmatmul.bf16.gmra.mxu0 %v1319
    %v1487 = vpop.f32.mrf.mxu0
    %v1488 = vadd.f32 %v546, %v1487
    %v1489 = vpop.f32.mrf.mxu0
    %1490 = vdwg.mxu0
    %v1491 = vadd.f32 %v1449, %v1462
    %v1492 = vxor.u32 %v1491, 2147483648
    %v1493 = vmul.f32 %v1492, 1.442695
    %v1494 = vpow.pop %v1493
    %v1495 = vadd.f32 %v1494, 1.0
    %v1496 = vrcp.pop %v1495
    %v1497 = vmul.f32 %v1495, %v1496
    %v1498 = vsub.f32 1.0, %v1497
    %v1499 = vmul.f32 %v1496, %v1498
    %v1500 = vadd.f32 %v1496, %v1499
    %vm1501 = vweird.f32 %v1495
    %vm1502 = vweird.f32 %v1496
    %vm1503 = vmor %vm1501, %vm1502
    %v1504 = vsel %vm1503, %v1496, %v1500
    %v1505 = vand.u32 2147483647, %v1495
    %vm1506 = vcmp.eq.f32.partialorder %v1505, 8.507059e+37
    %v1507 = vand.u32 %v1495, 2147483648
    %v1508 = vor.u32 1.1754944e-38, %v1507
    %v1509 = vsel %vm1506, %v1508, %v1504
    %v1510 = vmul.f32 1.0, %v1509
    %v1511 = vadd.f32 %v1450, %v1475
    %v1512 = vxor.u32 %v1511, 2147483648
    %v1513 = vmul.f32 %v1512, 1.442695
    %v1514 = vpow.pop %v1513
    %v1515 = vadd.f32 %v1514, 1.0
    %v1516 = vrcp.pop %v1515
    %v1517 = vmul.f32 %v1515, %v1516
    %v1518 = vsub.f32 1.0, %v1517
    %v1519 = vmul.f32 %v1516, %v1518
    %v1520 = vadd.f32 %v1516, %v1519
    %vm1521 = vweird.f32 %v1515
    %vm1522 = vweird.f32 %v1516
    %vm1523 = vmor %vm1521, %vm1522
    %v1524 = vsel %vm1523, %v1516, %v1520
    %v1525 = vand.u32 2147483647, %v1515
    %vm1526 = vcmp.eq.f32.partialorder %v1525, 8.507059e+37
    %v1527 = vand.u32 %v1515, 2147483648
    %v1528 = vor.u32 1.1754944e-38, %v1527
    %v1529 = vsel %vm1526, %v1528, %v1524
    %v1530 = vmul.f32 1.0, %v1529
    %v1531 = vmul.f32 %v1510, %v1488
    %v1532 = vadd.f32 %v1451, %v1531
    %v1533 = vtanh.pop %v1532
    %v1534 = vsub.f32 1.0, %v1530
    %v1535 = vmul.f32 %v1534, %v1533
    %v1536 = vmul.f32 %v1530, %v1318
    %v1537 = vadd.f32 %v1535, %v1536
    %v1538 = vpack.c.bf16 %v1537, %v1537
    %1539 = vmatpush.bf16.msra.mxu0 %v906
    %1540 = vmatpush.bf16.msra.mxu0 %v903
    %1541 = vmatpush.bf16.msra.mxu0 %v900
    %1542 = vmatpush.bf16.msra.mxu0 %v897
    %1543 = vmatpush.bf16.msra.mxu0 %v894
    %1544 = vmatpush.bf16.msra.mxu0 %v891
    %1545 = vmatpush.bf16.msra.mxu0 %v888
    %1546 = vmatpush.bf16.msra.mxu0 %v885
    %1547 = vmatmul.bf16.gmra.mxu0 %v1538
    %v1548 = vpop.f32.mrf.mxu0
    %v1549 = vadd.f32 %v799, %v1548
    %v1550 = vpop.f32.mrf.mxu0
    %1551 = vdwg.mxu0
    %1552 = vmatpush.bf16.msra.mxu0 %v907
    %1553 = vmatpush.bf16.msra.mxu0 %v904
    %1554 = vmatpush.bf16.msra.mxu0 %v901
    %1555 = vmatpush.bf16.msra.mxu0 %v898
    %1556 = vmatpush.bf16.msra.mxu0 %v895
    %1557 = vmatpush.bf16.msra.mxu0 %v892
    %1558 = vmatpush.bf16.msra.mxu0 %v889
    %1559 = vmatpush.bf16.msra.mxu0 %v886
    %1560 = vmatmul.bf16.gmra.mxu0 %v1538
    %v1561 = vpop.f32.mrf.mxu0
    %v1562 = vadd.f32 %v800, %v1561
    %v1563 = vpop.f32.mrf.mxu0
    %1564 = vdwg.mxu0
    %1565 = vmatpush.bf16.msra.mxu0 %v908
    %1566 = vmatpush.bf16.msra.mxu0 %v905
    %1567 = vmatpush.bf16.msra.mxu0 %v902
    %1568 = vmatpush.bf16.msra.mxu0 %v899
    %1569 = vmatpush.bf16.msra.mxu0 %v896
    %1570 = vmatpush.bf16.msra.mxu0 %v893
    %1571 = vmatpush.bf16.msra.mxu0 %v890
    %1572 = vmatpush.bf16.msra.mxu0 %v887
    %1573 = vmatmul.bf16.gmra.mxu0 %v1538
    %v1574 = vpop.f32.mrf.mxu0
    %v1575 = vadd.f32 %v801, %v1574
    %v1576 = vpop.f32.mrf.mxu0
    %1577 = vdwg.mxu0
    %v1578 = vpack.c.bf16 %v1445, %v1445
    %1579 = vmatpush.bf16.msra.mxu0 %v1114
    %1580 = vmatpush.bf16.msra.mxu0 %v1111
    %1581 = vmatpush.bf16.msra.mxu0 %v1108
    %1582 = vmatpush.bf16.msra.mxu0 %v1105
    %1583 = vmatpush.bf16.msra.mxu0 %v1102
    %1584 = vmatpush.bf16.msra.mxu0 %v1099
    %1585 = vmatpush.bf16.msra.mxu0 %v1096
    %1586 = vmatpush.bf16.msra.mxu0 %v1093
    %1587 = vmatmul.bf16.gmra.mxu0 %v1578
    %v1588 = vpop.f32.mrf.mxu0
    %v1589 = vadd.f32 %v1007, %v1588
    %v1590 = vpop.f32.mrf.mxu0
    %1591 = vdwg.mxu0
    %1592 = vmatpush.bf16.msra.mxu0 %v1115
    %1593 = vmatpush.bf16.msra.mxu0 %v1112
    %1594 = vmatpush.bf16.msra.mxu0 %v1109
    %1595 = vmatpush.bf16.msra.mxu0 %v1106
    %1596 = vmatpush.bf16.msra.mxu0 %v1103
    %1597 = vmatpush.bf16.msra.mxu0 %v1100
    %1598 = vmatpush.bf16.msra.mxu0 %v1097
    %1599 = vmatpush.bf16.msra.mxu0 %v1094
    %1600 = vmatmul.bf16.gmra.mxu0 %v1578
    %v1601 = vpop.f32.mrf.mxu0
    %v1602 = vadd.f32 %v1008, %v1601
    %v1603 = vpop.f32.mrf.mxu0
    %1604 = vdwg.mxu0
    %1605 = vmatpush.bf16.msra.mxu0 %v1116
    %1606 = vmatpush.bf16.msra.mxu0 %v1113
    %1607 = vmatpush.bf16.msra.mxu0 %v1110
    %1608 = vmatpush.bf16.msra.mxu0 %v1107
    %1609 = vmatpush.bf16.msra.mxu0 %v1104
    %1610 = vmatpush.bf16.msra.mxu0 %v1101
    %1611 = vmatpush.bf16.msra.mxu0 %v1098
    %1612 = vmatpush.bf16.msra.mxu0 %v1095
    %1613 = vmatmul.bf16.gmra.mxu0 %v1578
    %v1614 = vpop.f32.mrf.mxu0
    %v1615 = vadd.f32 %v1009, %v1614
    %v1616 = vpop.f32.mrf.mxu0
    %1617 = vdwg.mxu0
    %v1618 = vadd.f32 %v1549, %v1589
    %v1619 = vxor.u32 %v1618, 2147483648
    %v1620 = vmul.f32 %v1619, 1.442695
    %v1621 = vpow.pop %v1620
    %v1622 = vadd.f32 %v1621, 1.0
    %v1623 = vrcp.pop %v1622
    %v1624 = vmul.f32 %v1622, %v1623
    %v1625 = vsub.f32 1.0, %v1624
    %v1626 = vmul.f32 %v1623, %v1625
    %v1627 = vadd.f32 %v1623, %v1626
    %vm1628 = vweird.f32 %v1622
    %vm1629 = vweird.f32 %v1623
    %vm1630 = vmor %vm1628, %vm1629
    %v1631 = vsel %vm1630, %v1623, %v1627
    %v1632 = vand.u32 2147483647, %v1622
    %vm1633 = vcmp.eq.f32.partialorder %v1632, 8.507059e+37
    %v1634 = vand.u32 %v1622, 2147483648
    %v1635 = vor.u32 1.1754944e-38, %v1634
    %v1636 = vsel %vm1633, %v1635, %v1631
    %v1637 = vmul.f32 1.0, %v1636
    %v1638 = vadd.f32 %v1562, %v1602
    %v1639 = vxor.u32 %v1638, 2147483648
    %v1640 = vmul.f32 %v1639, 1.442695
    %v1641 = vpow.pop %v1640
    %v1642 = vadd.f32 %v1641, 1.0
    %v1643 = vrcp.pop %v1642
    %v1644 = vmul.f32 %v1642, %v1643
    %v1645 = vsub.f32 1.0, %v1644
    %v1646 = vmul.f32 %v1643, %v1645
    %v1647 = vadd.f32 %v1643, %v1646
    %vm1648 = vweird.f32 %v1642
    %vm1649 = vweird.f32 %v1643
    %vm1650 = vmor %vm1648, %vm1649
    %v1651 = vsel %vm1650, %v1643, %v1647
    %v1652 = vand.u32 2147483647, %v1642
    %vm1653 = vcmp.eq.f32.partialorder %v1652, 8.507059e+37
    %v1654 = vand.u32 %v1642, 2147483648
    %v1655 = vor.u32 1.1754944e-38, %v1654
    %v1656 = vsel %vm1653, %v1655, %v1651
    %v1657 = vmul.f32 1.0, %v1656
    %v1658 = vmul.f32 %v1637, %v1615
    %v1659 = vadd.f32 %v1575, %v1658
    %v1660 = vtanh.pop %v1659
    %v1661 = vsub.f32 1.0, %v1657
    %v1662 = vmul.f32 %v1661, %v1660
    %v1663 = vmul.f32 %v1657, %v1445
    %v1664 = vadd.f32 %v1662, %v1663
    %s1665 = smul.u32 3, 3
    %s1666 = smul.addr %s1665, 8
    %s1667 = scalar_lea.vmem [#allocation2], %s1666
    %v1668 = vld [vmem:[%s1667] sm:$0xff]
    %v1669 = vld [vmem:[%s1667 + $0x8] sm:$0xff]
    %v1670 = vld [vmem:[%s1667 + $0x10] sm:$0xff]
    %1671 = vmatpush.bf16.msra.mxu0 %v651
    %1672 = vmatpush.bf16.msra.mxu0 %v648
    %1673 = vmatpush.bf16.msra.mxu0 %v645
    %1674 = vmatpush.bf16.msra.mxu0 %v642
    %1675 = vmatpush.bf16.msra.mxu0 %v639
    %1676 = vmatpush.bf16.msra.mxu0 %v636
    %1677 = vmatpush.bf16.msra.mxu0 %v633
    %1678 = vmatpush.bf16.msra.mxu0 %v630
    %1679 = vmatmul.bf16.gmra.mxu0 %v1538
    %v1680 = vpop.f32.mrf.mxu0
    %v1681 = vadd.f32 %v544, %v1680
    %v1682 = vpop.f32.mrf.mxu0
    %1683 = vdwg.mxu0
    %1684 = vmatpush.bf16.msra.mxu0 %v652
    %1685 = vmatpush.bf16.msra.mxu0 %v649
    %1686 = vmatpush.bf16.msra.mxu0 %v646
    %1687 = vmatpush.bf16.msra.mxu0 %v643
    %1688 = vmatpush.bf16.msra.mxu0 %v640
    %1689 = vmatpush.bf16.msra.mxu0 %v637
    %1690 = vmatpush.bf16.msra.mxu0 %v634
    %1691 = vmatpush.bf16.msra.mxu0 %v631
    %1692 = vmatmul.bf16.gmra.mxu0 %v1538
    %v1693 = vpop.f32.mrf.mxu0
    %v1694 = vadd.f32 %v545, %v1693
    %v1695 = vpop.f32.mrf.mxu0
    %1696 = vdwg.mxu0
    %1697 = vmatpush.bf16.msra.mxu0 %v653
    %1698 = vmatpush.bf16.msra.mxu0 %v650
    %1699 = vmatpush.bf16.msra.mxu0 %v647
    %1700 = vmatpush.bf16.msra.mxu0 %v644
    %1701 = vmatpush.bf16.msra.mxu0 %v641
    %1702 = vmatpush.bf16.msra.mxu0 %v638
    %1703 = vmatpush.bf16.msra.mxu0 %v635
    %1704 = vmatpush.bf16.msra.mxu0 %v632
    %1705 = vmatmul.bf16.gmra.mxu0 %v1538
    %v1706 = vpop.f32.mrf.mxu0
    %v1707 = vadd.f32 %v546, %v1706
    %v1708 = vpop.f32.mrf.mxu0
    %1709 = vdwg.mxu0
    %v1710 = vadd.f32 %v1668, %v1681
    %v1711 = vxor.u32 %v1710, 2147483648
    %v1712 = vmul.f32 %v1711, 1.442695
    %v1713 = vpow.pop %v1712
    %v1714 = vadd.f32 %v1713, 1.0
    %v1715 = vrcp.pop %v1714
    %v1716 = vmul.f32 %v1714, %v1715
    %v1717 = vsub.f32 1.0, %v1716
    %v1718 = vmul.f32 %v1715, %v1717
    %v1719 = vadd.f32 %v1715, %v1718
    %vm1720 = vweird.f32 %v1714
    %vm1721 = vweird.f32 %v1715
    %vm1722 = vmor %vm1720, %vm1721
    %v1723 = vsel %vm1722, %v1715, %v1719
    %v1724 = vand.u32 2147483647, %v1714
    %vm1725 = vcmp.eq.f32.partialorder %v1724, 8.507059e+37
    %v1726 = vand.u32 %v1714, 2147483648
    %v1727 = vor.u32 1.1754944e-38, %v1726
    %v1728 = vsel %vm1725, %v1727, %v1723
    %v1729 = vmul.f32 1.0, %v1728
    %v1730 = vadd.f32 %v1669, %v1694
    %v1731 = vxor.u32 %v1730, 2147483648
    %v1732 = vmul.f32 %v1731, 1.442695
    %v1733 = vpow.pop %v1732
    %v1734 = vadd.f32 %v1733, 1.0
    %v1735 = vrcp.pop %v1734
    %v1736 = vmul.f32 %v1734, %v1735
    %v1737 = vsub.f32 1.0, %v1736
    %v1738 = vmul.f32 %v1735, %v1737
    %v1739 = vadd.f32 %v1735, %v1738
    %vm1740 = vweird.f32 %v1734
    %vm1741 = vweird.f32 %v1735
    %vm1742 = vmor %vm1740, %vm1741
    %v1743 = vsel %vm1742, %v1735, %v1739
    %v1744 = vand.u32 2147483647, %v1734
    %vm1745 = vcmp.eq.f32.partialorder %v1744, 8.507059e+37
    %v1746 = vand.u32 %v1734, 2147483648
    %v1747 = vor.u32 1.1754944e-38, %v1746
    %v1748 = vsel %vm1745, %v1747, %v1743
    %v1749 = vmul.f32 1.0, %v1748
    %v1750 = vmul.f32 %v1729, %v1707
    %v1751 = vadd.f32 %v1670, %v1750
    %v1752 = vtanh.pop %v1751
    %v1753 = vsub.f32 1.0, %v1749
    %v1754 = vmul.f32 %v1753, %v1752
    %v1755 = vmul.f32 %v1749, %v1537
    %v1756 = vadd.f32 %v1754, %v1755
    %v1757 = vpack.c.bf16 %v1756, %v1756
    %1758 = vmatpush.bf16.msra.mxu0 %v906
    %1759 = vmatpush.bf16.msra.mxu0 %v903
    %1760 = vmatpush.bf16.msra.mxu0 %v900
    %1761 = vmatpush.bf16.msra.mxu0 %v897
    %1762 = vmatpush.bf16.msra.mxu0 %v894
    %1763 = vmatpush.bf16.msra.mxu0 %v891
    %1764 = vmatpush.bf16.msra.mxu0 %v888
    %1765 = vmatpush.bf16.msra.mxu0 %v885
    %1766 = vmatmul.bf16.gmra.mxu0 %v1757
    %v1767 = vpop.f32.mrf.mxu0
    %v1768 = vadd.f32 %v799, %v1767
    %v1769 = vpop.f32.mrf.mxu0
    %1770 = vdwg.mxu0
    %1771 = vmatpush.bf16.msra.mxu0 %v907
    %1772 = vmatpush.bf16.msra.mxu0 %v904
    %1773 = vmatpush.bf16.msra.mxu0 %v901
    %1774 = vmatpush.bf16.msra.mxu0 %v898
    %1775 = vmatpush.bf16.msra.mxu0 %v895
    %1776 = vmatpush.bf16.msra.mxu0 %v892
    %1777 = vmatpush.bf16.msra.mxu0 %v889
    %1778 = vmatpush.bf16.msra.mxu0 %v886
    %1779 = vmatmul.bf16.gmra.mxu0 %v1757
    %v1780 = vpop.f32.mrf.mxu0
    %v1781 = vadd.f32 %v800, %v1780
    %v1782 = vpop.f32.mrf.mxu0
    %1783 = vdwg.mxu0
    %1784 = vmatpush.bf16.msra.mxu0 %v908
    %1785 = vmatpush.bf16.msra.mxu0 %v905
    %1786 = vmatpush.bf16.msra.mxu0 %v902
    %1787 = vmatpush.bf16.msra.mxu0 %v899
    %1788 = vmatpush.bf16.msra.mxu0 %v896
    %1789 = vmatpush.bf16.msra.mxu0 %v893
    %1790 = vmatpush.bf16.msra.mxu0 %v890
    %1791 = vmatpush.bf16.msra.mxu0 %v887
    %1792 = vmatmul.bf16.gmra.mxu0 %v1757
    %v1793 = vpop.f32.mrf.mxu0
    %v1794 = vadd.f32 %v801, %v1793
    %v1795 = vpop.f32.mrf.mxu0
    %1796 = vdwg.mxu0
    %v1797 = vpack.c.bf16 %v1664, %v1664
    %1798 = vmatpush.bf16.msra.mxu0 %v1114
    %1799 = vmatpush.bf16.msra.mxu0 %v1111
    %1800 = vmatpush.bf16.msra.mxu0 %v1108
    %1801 = vmatpush.bf16.msra.mxu0 %v1105
    %1802 = vmatpush.bf16.msra.mxu0 %v1102
    %1803 = vmatpush.bf16.msra.mxu0 %v1099
    %1804 = vmatpush.bf16.msra.mxu0 %v1096
    %1805 = vmatpush.bf16.msra.mxu0 %v1093
    %1806 = vmatmul.bf16.gmra.mxu0 %v1797
    %v1807 = vpop.f32.mrf.mxu0
    %v1808 = vadd.f32 %v1007, %v1807
    %v1809 = vpop.f32.mrf.mxu0
    %1810 = vdwg.mxu0
    %1811 = vmatpush.bf16.msra.mxu0 %v1115
    %1812 = vmatpush.bf16.msra.mxu0 %v1112
    %1813 = vmatpush.bf16.msra.mxu0 %v1109
    %1814 = vmatpush.bf16.msra.mxu0 %v1106
    %1815 = vmatpush.bf16.msra.mxu0 %v1103
    %1816 = vmatpush.bf16.msra.mxu0 %v1100
    %1817 = vmatpush.bf16.msra.mxu0 %v1097
    %1818 = vmatpush.bf16.msra.mxu0 %v1094
    %1819 = vmatmul.bf16.gmra.mxu0 %v1797
    %v1820 = vpop.f32.mrf.mxu0
    %v1821 = vadd.f32 %v1008, %v1820
    %v1822 = vpop.f32.mrf.mxu0
    %1823 = vdwg.mxu0
    %1824 = vmatpush.bf16.msra.mxu0 %v1116
    %1825 = vmatpush.bf16.msra.mxu0 %v1113
    %1826 = vmatpush.bf16.msra.mxu0 %v1110
    %1827 = vmatpush.bf16.msra.mxu0 %v1107
    %1828 = vmatpush.bf16.msra.mxu0 %v1104
    %1829 = vmatpush.bf16.msra.mxu0 %v1101
    %1830 = vmatpush.bf16.msra.mxu0 %v1098
    %1831 = vmatpush.bf16.msra.mxu0 %v1095
    %1832 = vmatmul.bf16.gmra.mxu0 %v1797
    %v1833 = vpop.f32.mrf.mxu0
    %v1834 = vadd.f32 %v1009, %v1833
    %v1835 = vpop.f32.mrf.mxu0
    %1836 = vdwg.mxu0
    %v1837 = vadd.f32 %v1768, %v1808
    %v1838 = vxor.u32 %v1837, 2147483648
    %v1839 = vmul.f32 %v1838, 1.442695
    %v1840 = vpow.pop %v1839
    %v1841 = vadd.f32 %v1840, 1.0
    %v1842 = vrcp.pop %v1841
    %v1843 = vmul.f32 %v1841, %v1842
    %v1844 = vsub.f32 1.0, %v1843
    %v1845 = vmul.f32 %v1842, %v1844
    %v1846 = vadd.f32 %v1842, %v1845
    %vm1847 = vweird.f32 %v1841
    %vm1848 = vweird.f32 %v1842
    %vm1849 = vmor %vm1847, %vm1848
    %v1850 = vsel %vm1849, %v1842, %v1846
    %v1851 = vand.u32 2147483647, %v1841
    %vm1852 = vcmp.eq.f32.partialorder %v1851, 8.507059e+37
    %v1853 = vand.u32 %v1841, 2147483648
    %v1854 = vor.u32 1.1754944e-38, %v1853
    %v1855 = vsel %vm1852, %v1854, %v1850
    %v1856 = vmul.f32 1.0, %v1855
    %v1857 = vadd.f32 %v1781, %v1821
    %v1858 = vxor.u32 %v1857, 2147483648
    %v1859 = vmul.f32 %v1858, 1.442695
    %v1860 = vpow.pop %v1859
    %v1861 = vadd.f32 %v1860, 1.0
    %v1862 = vrcp.pop %v1861
    %v1863 = vmul.f32 %v1861, %v1862
    %v1864 = vsub.f32 1.0, %v1863
    %v1865 = vmul.f32 %v1862, %v1864
    %v1866 = vadd.f32 %v1862, %v1865
    %vm1867 = vweird.f32 %v1861
    %vm1868 = vweird.f32 %v1862
    %vm1869 = vmor %vm1867, %vm1868
    %v1870 = vsel %vm1869, %v1862, %v1866
    %v1871 = vand.u32 2147483647, %v1861
    %vm1872 = vcmp.eq.f32.partialorder %v1871, 8.507059e+37
    %v1873 = vand.u32 %v1861, 2147483648
    %v1874 = vor.u32 1.1754944e-38, %v1873
    %v1875 = vsel %vm1872, %v1874, %v1870
    %v1876 = vmul.f32 1.0, %v1875
    %v1877 = vmul.f32 %v1856, %v1834
    %v1878 = vadd.f32 %v1794, %v1877
    %v1879 = vtanh.pop %v1878
    %v1880 = vsub.f32 1.0, %v1876
    %v1881 = vmul.f32 %v1880, %v1879
    %v1882 = vmul.f32 %v1876, %v1664
    %v1883 = vadd.f32 %v1881, %v1882
    %s1884 = smul.u32 4, 3
    %s1885 = smul.addr %s1884, 8
    %s1886 = scalar_lea.vmem [#allocation2], %s1885
    %v1887 = vld [vmem:[%s1886] sm:$0xff]
    %v1888 = vld [vmem:[%s1886 + $0x8] sm:$0xff]
    %v1889 = vld [vmem:[%s1886 + $0x10] sm:$0xff]
    %1890 = vmatpush.bf16.msra.mxu0 %v651
    %1891 = vmatpush.bf16.msra.mxu0 %v648
    %1892 = vmatpush.bf16.msra.mxu0 %v645
    %1893 = vmatpush.bf16.msra.mxu0 %v642
    %1894 = vmatpush.bf16.msra.mxu0 %v639
    %1895 = vmatpush.bf16.msra.mxu0 %v636
    %1896 = vmatpush.bf16.msra.mxu0 %v633
    %1897 = vmatpush.bf16.msra.mxu0 %v630
    %1898 = vmatmul.bf16.gmra.mxu0 %v1757
    %v1899 = vpop.f32.mrf.mxu0
    %v1900 = vadd.f32 %v544, %v1899
    %v1901 = vpop.f32.mrf.mxu0
    %1902 = vdwg.mxu0
    %1903 = vmatpush.bf16.msra.mxu0 %v652
    %1904 = vmatpush.bf16.msra.mxu0 %v649
    %1905 = vmatpush.bf16.msra.mxu0 %v646
    %1906 = vmatpush.bf16.msra.mxu0 %v643
    %1907 = vmatpush.bf16.msra.mxu0 %v640
    %1908 = vmatpush.bf16.msra.mxu0 %v637
    %1909 = vmatpush.bf16.msra.mxu0 %v634
    %1910 = vmatpush.bf16.msra.mxu0 %v631
    %1911 = vmatmul.bf16.gmra.mxu0 %v1757
    %v1912 = vpop.f32.mrf.mxu0
    %v1913 = vadd.f32 %v545, %v1912
    %v1914 = vpop.f32.mrf.mxu0
    %1915 = vdwg.mxu0
    %1916 = vmatpush.bf16.msra.mxu0 %v653
    %1917 = vmatpush.bf16.msra.mxu0 %v650
    %1918 = vmatpush.bf16.msra.mxu0 %v647
    %1919 = vmatpush.bf16.msra.mxu0 %v644
    %1920 = vmatpush.bf16.msra.mxu0 %v641
    %1921 = vmatpush.bf16.msra.mxu0 %v638
    %1922 = vmatpush.bf16.msra.mxu0 %v635
    %1923 = vmatpush.bf16.msra.mxu0 %v632
    %1924 = vmatmul.bf16.gmra.mxu0 %v1757
    %v1925 = vpop.f32.mrf.mxu0
    %v1926 = vadd.f32 %v546, %v1925
    %v1927 = vpop.f32.mrf.mxu0
    %1928 = vdwg.mxu0
    %v1929 = vadd.f32 %v1887, %v1900
    %v1930 = vxor.u32 %v1929, 2147483648
    %v1931 = vmul.f32 %v1930, 1.442695
    %v1932 = vpow.pop %v1931
    %v1933 = vadd.f32 %v1932, 1.0
    %v1934 = vrcp.pop %v1933
    %v1935 = vmul.f32 %v1933, %v1934
    %v1936 = vsub.f32 1.0, %v1935
    %v1937 = vmul.f32 %v1934, %v1936
    %v1938 = vadd.f32 %v1934, %v1937
    %vm1939 = vweird.f32 %v1933
    %vm1940 = vweird.f32 %v1934
    %vm1941 = vmor %vm1939, %vm1940
    %v1942 = vsel %vm1941, %v1934, %v1938
    %v1943 = vand.u32 2147483647, %v1933
    %vm1944 = vcmp.eq.f32.partialorder %v1943, 8.507059e+37
    %v1945 = vand.u32 %v1933, 2147483648
    %v1946 = vor.u32 1.1754944e-38, %v1945
    %v1947 = vsel %vm1944, %v1946, %v1942
    %v1948 = vmul.f32 1.0, %v1947
    %v1949 = vadd.f32 %v1888, %v1913
    %v1950 = vxor.u32 %v1949, 2147483648
    %v1951 = vmul.f32 %v1950, 1.442695
    %v1952 = vpow.pop %v1951
    %v1953 = vadd.f32 %v1952, 1.0
    %v1954 = vrcp.pop %v1953
    %v1955 = vmul.f32 %v1953, %v1954
    %v1956 = vsub.f32 1.0, %v1955
    %v1957 = vmul.f32 %v1954, %v1956
    %v1958 = vadd.f32 %v1954, %v1957
    %vm1959 = vweird.f32 %v1953
    %vm1960 = vweird.f32 %v1954
    %vm1961 = vmor %vm1959, %vm1960
    %v1962 = vsel %vm1961, %v1954, %v1958
    %v1963 = vand.u32 2147483647, %v1953
    %vm1964 = vcmp.eq.f32.partialorder %v1963, 8.507059e+37
    %v1965 = vand.u32 %v1953, 2147483648
    %v1966 = vor.u32 1.1754944e-38, %v1965
    %v1967 = vsel %vm1964, %v1966, %v1962
    %v1968 = vmul.f32 1.0, %v1967
    %v1969 = vmul.f32 %v1948, %v1926
    %v1970 = vadd.f32 %v1889, %v1969
    %v1971 = vtanh.pop %v1970
    %v1972 = vsub.f32 1.0, %v1968
    %v1973 = vmul.f32 %v1972, %v1971
    %v1974 = vmul.f32 %v1968, %v1756
    %v1975 = vadd.f32 %v1973, %v1974
    %v1976 = vpack.c.bf16 %v1975, %v1975
    %1977 = vmatpush.bf16.msra.mxu0 %v906
    %1978 = vmatpush.bf16.msra.mxu0 %v903
    %1979 = vmatpush.bf16.msra.mxu0 %v900
    %1980 = vmatpush.bf16.msra.mxu0 %v897
    %1981 = vmatpush.bf16.msra.mxu0 %v894
    %1982 = vmatpush.bf16.msra.mxu0 %v891
    %1983 = vmatpush.bf16.msra.mxu0 %v888
    %1984 = vmatpush.bf16.msra.mxu0 %v885
    %1985 = vmatmul.bf16.gmra.mxu0 %v1976
    %v1986 = vpop.f32.mrf.mxu0
    %v1987 = vadd.f32 %v799, %v1986
    %v1988 = vpop.f32.mrf.mxu0
    %1989 = vdwg.mxu0
    %1990 = vmatpush.bf16.msra.mxu0 %v907
    %1991 = vmatpush.bf16.msra.mxu0 %v904
    %1992 = vmatpush.bf16.msra.mxu0 %v901
    %1993 = vmatpush.bf16.msra.mxu0 %v898
    %1994 = vmatpush.bf16.msra.mxu0 %v895
    %1995 = vmatpush.bf16.msra.mxu0 %v892
    %1996 = vmatpush.bf16.msra.mxu0 %v889
    %1997 = vmatpush.bf16.msra.mxu0 %v886
    %1998 = vmatmul.bf16.gmra.mxu0 %v1976
    %v1999 = vpop.f32.mrf.mxu0
    %v2000 = vadd.f32 %v800, %v1999
    %v2001 = vpop.f32.mrf.mxu0
    %2002 = vdwg.mxu0
    %2003 = vmatpush.bf16.msra.mxu0 %v908
    %2004 = vmatpush.bf16.msra.mxu0 %v905
    %2005 = vmatpush.bf16.msra.mxu0 %v902
    %2006 = vmatpush.bf16.msra.mxu0 %v899
    %2007 = vmatpush.bf16.msra.mxu0 %v896
    %2008 = vmatpush.bf16.msra.mxu0 %v893
    %2009 = vmatpush.bf16.msra.mxu0 %v890
    %2010 = vmatpush.bf16.msra.mxu0 %v887
    %2011 = vmatmul.bf16.gmra.mxu0 %v1976
    %v2012 = vpop.f32.mrf.mxu0
    %v2013 = vadd.f32 %v801, %v2012
    %v2014 = vpop.f32.mrf.mxu0
    %2015 = vdwg.mxu0
    %v2016 = vpack.c.bf16 %v1883, %v1883
    %2017 = vmatpush.bf16.msra.mxu0 %v1114
    %2018 = vmatpush.bf16.msra.mxu0 %v1111
    %2019 = vmatpush.bf16.msra.mxu0 %v1108
    %2020 = vmatpush.bf16.msra.mxu0 %v1105
    %2021 = vmatpush.bf16.msra.mxu0 %v1102
    %2022 = vmatpush.bf16.msra.mxu0 %v1099
    %2023 = vmatpush.bf16.msra.mxu0 %v1096
    %2024 = vmatpush.bf16.msra.mxu0 %v1093
    %2025 = vmatmul.bf16.gmra.mxu0 %v2016
    %v2026 = vpop.f32.mrf.mxu0
    %v2027 = vadd.f32 %v1007, %v2026
    %v2028 = vpop.f32.mrf.mxu0
    %2029 = vdwg.mxu0
    %2030 = vmatpush.bf16.msra.mxu0 %v1115
    %2031 = vmatpush.bf16.msra.mxu0 %v1112
    %2032 = vmatpush.bf16.msra.mxu0 %v1109
    %2033 = vmatpush.bf16.msra.mxu0 %v1106
    %2034 = vmatpush.bf16.msra.mxu0 %v1103
    %2035 = vmatpush.bf16.msra.mxu0 %v1100
    %2036 = vmatpush.bf16.msra.mxu0 %v1097
    %2037 = vmatpush.bf16.msra.mxu0 %v1094
    %2038 = vmatmul.bf16.gmra.mxu0 %v2016
    %v2039 = vpop.f32.mrf.mxu0
    %v2040 = vadd.f32 %v1008, %v2039
    %v2041 = vpop.f32.mrf.mxu0
    %2042 = vdwg.mxu0
    %2043 = vmatpush.bf16.msra.mxu0 %v1116
    %2044 = vmatpush.bf16.msra.mxu0 %v1113
    %2045 = vmatpush.bf16.msra.mxu0 %v1110
    %2046 = vmatpush.bf16.msra.mxu0 %v1107
    %2047 = vmatpush.bf16.msra.mxu0 %v1104
    %2048 = vmatpush.bf16.msra.mxu0 %v1101
    %2049 = vmatpush.bf16.msra.mxu0 %v1098
    %2050 = vmatpush.bf16.msra.mxu0 %v1095
    %2051 = vmatmul.bf16.gmra.mxu0 %v2016
    %v2052 = vpop.f32.mrf.mxu0
    %v2053 = vadd.f32 %v1009, %v2052
    %v2054 = vpop.f32.mrf.mxu0
    %2055 = vdwg.mxu0
    %v2056 = vadd.f32 %v1987, %v2027
    %v2057 = vxor.u32 %v2056, 2147483648
    %v2058 = vmul.f32 %v2057, 1.442695
    %v2059 = vpow.pop %v2058
    %v2060 = vadd.f32 %v2059, 1.0
    %v2061 = vrcp.pop %v2060
    %v2062 = vmul.f32 %v2060, %v2061
    %v2063 = vsub.f32 1.0, %v2062
    %v2064 = vmul.f32 %v2061, %v2063
    %v2065 = vadd.f32 %v2061, %v2064
    %vm2066 = vweird.f32 %v2060
    %vm2067 = vweird.f32 %v2061
    %vm2068 = vmor %vm2066, %vm2067
    %v2069 = vsel %vm2068, %v2061, %v2065
    %v2070 = vand.u32 2147483647, %v2060
    %vm2071 = vcmp.eq.f32.partialorder %v2070, 8.507059e+37
    %v2072 = vand.u32 %v2060, 2147483648
    %v2073 = vor.u32 1.1754944e-38, %v2072
    %v2074 = vsel %vm2071, %v2073, %v2069
    %v2075 = vmul.f32 1.0, %v2074
    %v2076 = vadd.f32 %v2000, %v2040
    %v2077 = vxor.u32 %v2076, 2147483648
    %v2078 = vmul.f32 %v2077, 1.442695
    %v2079 = vpow.pop %v2078
    %v2080 = vadd.f32 %v2079, 1.0
    %v2081 = vrcp.pop %v2080
    %v2082 = vmul.f32 %v2080, %v2081
    %v2083 = vsub.f32 1.0, %v2082
    %v2084 = vmul.f32 %v2081, %v2083
    %v2085 = vadd.f32 %v2081, %v2084
    %vm2086 = vweird.f32 %v2080
    %vm2087 = vweird.f32 %v2081
    %vm2088 = vmor %vm2086, %vm2087
    %v2089 = vsel %vm2088, %v2081, %v2085
    %v2090 = vand.u32 2147483647, %v2080
    %vm2091 = vcmp.eq.f32.partialorder %v2090, 8.507059e+37
    %v2092 = vand.u32 %v2080, 2147483648
    %v2093 = vor.u32 1.1754944e-38, %v2092
    %v2094 = vsel %vm2091, %v2093, %v2089
    %v2095 = vmul.f32 1.0, %v2094
    %v2096 = vmul.f32 %v2075, %v2053
    %v2097 = vadd.f32 %v2013, %v2096
    %v2098 = vtanh.pop %v2097
    %v2099 = vsub.f32 1.0, %v2095
    %v2100 = vmul.f32 %v2099, %v2098
    %v2101 = vmul.f32 %v2095, %v1883
    %v2102 = vadd.f32 %v2100, %v2101
    %s2103 = smul.u32 5, 3
    %s2104 = smul.addr %s2103, 8
    %s2105 = scalar_lea.vmem [#allocation2], %s2104
    %v2106 = vld [vmem:[%s2105] sm:$0xff]
    %v2107 = vld [vmem:[%s2105 + $0x8] sm:$0xff]
    %v2108 = vld [vmem:[%s2105 + $0x10] sm:$0xff]
    %2109 = vmatpush.bf16.msra.mxu0 %v651
    %2110 = vmatpush.bf16.msra.mxu0 %v648
    %2111 = vmatpush.bf16.msra.mxu0 %v645
    %2112 = vmatpush.bf16.msra.mxu0 %v642
    %2113 = vmatpush.bf16.msra.mxu0 %v639
    %2114 = vmatpush.bf16.msra.mxu0 %v636
    %2115 = vmatpush.bf16.msra.mxu0 %v633
    %2116 = vmatpush.bf16.msra.mxu0 %v630
    %2117 = vmatmul.bf16.gmra.mxu0 %v1976
    %v2118 = vpop.f32.mrf.mxu0
    %v2119 = vadd.f32 %v544, %v2118
    %v2120 = vpop.f32.mrf.mxu0
    %2121 = vdwg.mxu0
    %2122 = vmatpush.bf16.msra.mxu0 %v652
    %2123 = vmatpush.bf16.msra.mxu0 %v649
    %2124 = vmatpush.bf16.msra.mxu0 %v646
    %2125 = vmatpush.bf16.msra.mxu0 %v643
    %2126 = vmatpush.bf16.msra.mxu0 %v640
    %2127 = vmatpush.bf16.msra.mxu0 %v637
    %2128 = vmatpush.bf16.msra.mxu0 %v634
    %2129 = vmatpush.bf16.msra.mxu0 %v631
    %2130 = vmatmul.bf16.gmra.mxu0 %v1976
    %v2131 = vpop.f32.mrf.mxu0
    %v2132 = vadd.f32 %v545, %v2131
    %v2133 = vpop.f32.mrf.mxu0
    %2134 = vdwg.mxu0
    %2135 = vmatpush.bf16.msra.mxu0 %v653
    %2136 = vmatpush.bf16.msra.mxu0 %v650
    %2137 = vmatpush.bf16.msra.mxu0 %v647
    %2138 = vmatpush.bf16.msra.mxu0 %v644
    %2139 = vmatpush.bf16.msra.mxu0 %v641
    %2140 = vmatpush.bf16.msra.mxu0 %v638
    %2141 = vmatpush.bf16.msra.mxu0 %v635
    %2142 = vmatpush.bf16.msra.mxu0 %v632
    %2143 = vmatmul.bf16.gmra.mxu0 %v1976
    %v2144 = vpop.f32.mrf.mxu0
    %v2145 = vadd.f32 %v546, %v2144
    %v2146 = vpop.f32.mrf.mxu0
    %2147 = vdwg.mxu0
    %v2148 = vadd.f32 %v2106, %v2119
    %v2149 = vxor.u32 %v2148, 2147483648
    %v2150 = vmul.f32 %v2149, 1.442695
    %v2151 = vpow.pop %v2150
    %v2152 = vadd.f32 %v2151, 1.0
    %v2153 = vrcp.pop %v2152
    %v2154 = vmul.f32 %v2152, %v2153
    %v2155 = vsub.f32 1.0, %v2154
    %v2156 = vmul.f32 %v2153, %v2155
    %v2157 = vadd.f32 %v2153, %v2156
    %vm2158 = vweird.f32 %v2152
    %vm2159 = vweird.f32 %v2153
    %vm2160 = vmor %vm2158, %vm2159
    %v2161 = vsel %vm2160, %v2153, %v2157
    %v2162 = vand.u32 2147483647, %v2152
    %vm2163 = vcmp.eq.f32.partialorder %v2162, 8.507059e+37
    %v2164 = vand.u32 %v2152, 2147483648
    %v2165 = vor.u32 1.1754944e-38, %v2164
    %v2166 = vsel %vm2163, %v2165, %v2161
    %v2167 = vmul.f32 1.0, %v2166
    %v2168 = vadd.f32 %v2107, %v2132
    %v2169 = vxor.u32 %v2168, 2147483648
    %v2170 = vmul.f32 %v2169, 1.442695
    %v2171 = vpow.pop %v2170
    %v2172 = vadd.f32 %v2171, 1.0
    %v2173 = vrcp.pop %v2172
    %v2174 = vmul.f32 %v2172, %v2173
    %v2175 = vsub.f32 1.0, %v2174
    %v2176 = vmul.f32 %v2173, %v2175
    %v2177 = vadd.f32 %v2173, %v2176
    %vm2178 = vweird.f32 %v2172
    %vm2179 = vweird.f32 %v2173
    %vm2180 = vmor %vm2178, %vm2179
    %v2181 = vsel %vm2180, %v2173, %v2177
    %v2182 = vand.u32 2147483647, %v2172
    %vm2183 = vcmp.eq.f32.partialorder %v2182, 8.507059e+37
    %v2184 = vand.u32 %v2172, 2147483648
    %v2185 = vor.u32 1.1754944e-38, %v2184
    %v2186 = vsel %vm2183, %v2185, %v2181
    %v2187 = vmul.f32 1.0, %v2186
    %v2188 = vmul.f32 %v2167, %v2145
    %v2189 = vadd.f32 %v2108, %v2188
    %v2190 = vtanh.pop %v2189
    %v2191 = vsub.f32 1.0, %v2187
    %v2192 = vmul.f32 %v2191, %v2190
    %v2193 = vmul.f32 %v2187, %v1975
    %v2194 = vadd.f32 %v2192, %v2193
    %v2195 = vpack.c.bf16 %v2194, %v2194
    %2196 = vmatpush.bf16.msra.mxu0 %v906
    %2197 = vmatpush.bf16.msra.mxu0 %v903
    %2198 = vmatpush.bf16.msra.mxu0 %v900
    %2199 = vmatpush.bf16.msra.mxu0 %v897
    %2200 = vmatpush.bf16.msra.mxu0 %v894
    %2201 = vmatpush.bf16.msra.mxu0 %v891
    %2202 = vmatpush.bf16.msra.mxu0 %v888
    %2203 = vmatpush.bf16.msra.mxu0 %v885
    %2204 = vmatmul.bf16.gmra.mxu0 %v2195
    %v2205 = vpop.f32.mrf.mxu0
    %v2206 = vadd.f32 %v799, %v2205
    %v2207 = vpop.f32.mrf.mxu0
    %2208 = vdwg.mxu0
    %2209 = vmatpush.bf16.msra.mxu0 %v907
    %2210 = vmatpush.bf16.msra.mxu0 %v904
    %2211 = vmatpush.bf16.msra.mxu0 %v901
    %2212 = vmatpush.bf16.msra.mxu0 %v898
    %2213 = vmatpush.bf16.msra.mxu0 %v895
    %2214 = vmatpush.bf16.msra.mxu0 %v892
    %2215 = vmatpush.bf16.msra.mxu0 %v889
    %2216 = vmatpush.bf16.msra.mxu0 %v886
    %2217 = vmatmul.bf16.gmra.mxu0 %v2195
    %v2218 = vpop.f32.mrf.mxu0
    %v2219 = vadd.f32 %v800, %v2218
    %v2220 = vpop.f32.mrf.mxu0
    %2221 = vdwg.mxu0
    %2222 = vmatpush.bf16.msra.mxu0 %v908
    %2223 = vmatpush.bf16.msra.mxu0 %v905
    %2224 = vmatpush.bf16.msra.mxu0 %v902
    %2225 = vmatpush.bf16.msra.mxu0 %v899
    %2226 = vmatpush.bf16.msra.mxu0 %v896
    %2227 = vmatpush.bf16.msra.mxu0 %v893
    %2228 = vmatpush.bf16.msra.mxu0 %v890
    %2229 = vmatpush.bf16.msra.mxu0 %v887
    %2230 = vmatmul.bf16.gmra.mxu0 %v2195
    %v2231 = vpop.f32.mrf.mxu0
    %v2232 = vadd.f32 %v801, %v2231
    %v2233 = vpop.f32.mrf.mxu0
    %2234 = vdwg.mxu0
    %v2235 = vpack.c.bf16 %v2102, %v2102
    %2236 = vmatpush.bf16.msra.mxu0 %v1114
    %2237 = vmatpush.bf16.msra.mxu0 %v1111
    %2238 = vmatpush.bf16.msra.mxu0 %v1108
    %2239 = vmatpush.bf16.msra.mxu0 %v1105
    %2240 = vmatpush.bf16.msra.mxu0 %v1102
    %2241 = vmatpush.bf16.msra.mxu0 %v1099
    %2242 = vmatpush.bf16.msra.mxu0 %v1096
    %2243 = vmatpush.bf16.msra.mxu0 %v1093
    %2244 = vmatmul.bf16.gmra.mxu0 %v2235
    %v2245 = vpop.f32.mrf.mxu0
    %v2246 = vadd.f32 %v1007, %v2245
    %v2247 = vpop.f32.mrf.mxu0
    %2248 = vdwg.mxu0
    %2249 = vmatpush.bf16.msra.mxu0 %v1115
    %2250 = vmatpush.bf16.msra.mxu0 %v1112
    %2251 = vmatpush.bf16.msra.mxu0 %v1109
    %2252 = vmatpush.bf16.msra.mxu0 %v1106
    %2253 = vmatpush.bf16.msra.mxu0 %v1103
    %2254 = vmatpush.bf16.msra.mxu0 %v1100
    %2255 = vmatpush.bf16.msra.mxu0 %v1097
    %2256 = vmatpush.bf16.msra.mxu0 %v1094
    %2257 = vmatmul.bf16.gmra.mxu0 %v2235
    %v2258 = vpop.f32.mrf.mxu0
    %v2259 = vadd.f32 %v1008, %v2258
    %v2260 = vpop.f32.mrf.mxu0
    %2261 = vdwg.mxu0
    %2262 = vmatpush.bf16.msra.mxu0 %v1116
    %2263 = vmatpush.bf16.msra.mxu0 %v1113
    %2264 = vmatpush.bf16.msra.mxu0 %v1110
    %2265 = vmatpush.bf16.msra.mxu0 %v1107
    %2266 = vmatpush.bf16.msra.mxu0 %v1104
    %2267 = vmatpush.bf16.msra.mxu0 %v1101
    %2268 = vmatpush.bf16.msra.mxu0 %v1098
    %2269 = vmatpush.bf16.msra.mxu0 %v1095
    %2270 = vmatmul.bf16.gmra.mxu0 %v2235
    %v2271 = vpop.f32.mrf.mxu0
    %v2272 = vadd.f32 %v1009, %v2271
    %v2273 = vpop.f32.mrf.mxu0
    %2274 = vdwg.mxu0
    %v2275 = vadd.f32 %v2206, %v2246
    %v2276 = vxor.u32 %v2275, 2147483648
    %v2277 = vmul.f32 %v2276, 1.442695
    %v2278 = vpow.pop %v2277
    %v2279 = vadd.f32 %v2278, 1.0
    %v2280 = vrcp.pop %v2279
    %v2281 = vmul.f32 %v2279, %v2280
    %v2282 = vsub.f32 1.0, %v2281
    %v2283 = vmul.f32 %v2280, %v2282
    %v2284 = vadd.f32 %v2280, %v2283
    %vm2285 = vweird.f32 %v2279
    %vm2286 = vweird.f32 %v2280
    %vm2287 = vmor %vm2285, %vm2286
    %v2288 = vsel %vm2287, %v2280, %v2284
    %v2289 = vand.u32 2147483647, %v2279
    %vm2290 = vcmp.eq.f32.partialorder %v2289, 8.507059e+37
    %v2291 = vand.u32 %v2279, 2147483648
    %v2292 = vor.u32 1.1754944e-38, %v2291
    %v2293 = vsel %vm2290, %v2292, %v2288
    %v2294 = vmul.f32 1.0, %v2293
    %v2295 = vadd.f32 %v2219, %v2259
    %v2296 = vxor.u32 %v2295, 2147483648
    %v2297 = vmul.f32 %v2296, 1.442695
    %v2298 = vpow.pop %v2297
    %v2299 = vadd.f32 %v2298, 1.0
    %v2300 = vrcp.pop %v2299
    %v2301 = vmul.f32 %v2299, %v2300
    %v2302 = vsub.f32 1.0, %v2301
    %v2303 = vmul.f32 %v2300, %v2302
    %v2304 = vadd.f32 %v2300, %v2303
    %vm2305 = vweird.f32 %v2299
    %vm2306 = vweird.f32 %v2300
    %vm2307 = vmor %vm2305, %vm2306
    %v2308 = vsel %vm2307, %v2300, %v2304
    %v2309 = vand.u32 2147483647, %v2299
    %vm2310 = vcmp.eq.f32.partialorder %v2309, 8.507059e+37
    %v2311 = vand.u32 %v2299, 2147483648
    %v2312 = vor.u32 1.1754944e-38, %v2311
    %v2313 = vsel %vm2310, %v2312, %v2308
    %v2314 = vmul.f32 1.0, %v2313
    %v2315 = vmul.f32 %v2294, %v2272
    %v2316 = vadd.f32 %v2232, %v2315
    %v2317 = vtanh.pop %v2316
    %v2318 = vsub.f32 1.0, %v2314
    %v2319 = vmul.f32 %v2318, %v2317
    %v2320 = vmul.f32 %v2314, %v2102
    %v2321 = vadd.f32 %v2319, %v2320
    %s2322 = smul.u32 6, 3
    %s2323 = smul.addr %s2322, 8
    %s2324 = scalar_lea.vmem [#allocation2], %s2323
    %v2325 = vld [vmem:[%s2324] sm:$0xff]
    %v2326 = vld [vmem:[%s2324 + $0x8] sm:$0xff]
    %v2327 = vld [vmem:[%s2324 + $0x10] sm:$0xff]
    %2328 = vmatpush.bf16.msra.mxu0 %v651
    %2329 = vmatpush.bf16.msra.mxu0 %v648
    %2330 = vmatpush.bf16.msra.mxu0 %v645
    %2331 = vmatpush.bf16.msra.mxu0 %v642
    %2332 = vmatpush.bf16.msra.mxu0 %v639
    %2333 = vmatpush.bf16.msra.mxu0 %v636
    %2334 = vmatpush.bf16.msra.mxu0 %v633
    %2335 = vmatpush.bf16.msra.mxu0 %v630
    %2336 = vmatmul.bf16.gmra.mxu0 %v2195
    %v2337 = vpop.f32.mrf.mxu0
    %v2338 = vadd.f32 %v544, %v2337
    %v2339 = vpop.f32.mrf.mxu0
    %2340 = vdwg.mxu0
    %2341 = vmatpush.bf16.msra.mxu0 %v652
    %2342 = vmatpush.bf16.msra.mxu0 %v649
    %2343 = vmatpush.bf16.msra.mxu0 %v646
    %2344 = vmatpush.bf16.msra.mxu0 %v643
    %2345 = vmatpush.bf16.msra.mxu0 %v640
    %2346 = vmatpush.bf16.msra.mxu0 %v637
    %2347 = vmatpush.bf16.msra.mxu0 %v634
    %2348 = vmatpush.bf16.msra.mxu0 %v631
    %2349 = vmatmul.bf16.gmra.mxu0 %v2195
    %v2350 = vpop.f32.mrf.mxu0
    %v2351 = vadd.f32 %v545, %v2350
    %v2352 = vpop.f32.mrf.mxu0
    %2353 = vdwg.mxu0
    %2354 = vmatpush.bf16.msra.mxu0 %v653
    %2355 = vmatpush.bf16.msra.mxu0 %v650
    %2356 = vmatpush.bf16.msra.mxu0 %v647
    %2357 = vmatpush.bf16.msra.mxu0 %v644
    %2358 = vmatpush.bf16.msra.mxu0 %v641
    %2359 = vmatpush.bf16.msra.mxu0 %v638
    %2360 = vmatpush.bf16.msra.mxu0 %v635
    %2361 = vmatpush.bf16.msra.mxu0 %v632
    %2362 = vmatmul.bf16.gmra.mxu0 %v2195
    %v2363 = vpop.f32.mrf.mxu0
    %v2364 = vadd.f32 %v546, %v2363
    %v2365 = vpop.f32.mrf.mxu0
    %2366 = vdwg.mxu0
    %v2367 = vadd.f32 %v2325, %v2338
    %v2368 = vxor.u32 %v2367, 2147483648
    %v2369 = vmul.f32 %v2368, 1.442695
    %v2370 = vpow.pop %v2369
    %v2371 = vadd.f32 %v2370, 1.0
    %v2372 = vrcp.pop %v2371
    %v2373 = vmul.f32 %v2371, %v2372
    %v2374 = vsub.f32 1.0, %v2373
    %v2375 = vmul.f32 %v2372, %v2374
    %v2376 = vadd.f32 %v2372, %v2375
    %vm2377 = vweird.f32 %v2371
    %vm2378 = vweird.f32 %v2372
    %vm2379 = vmor %vm2377, %vm2378
    %v2380 = vsel %vm2379, %v2372, %v2376
    %v2381 = vand.u32 2147483647, %v2371
    %vm2382 = vcmp.eq.f32.partialorder %v2381, 8.507059e+37
    %v2383 = vand.u32 %v2371, 2147483648
    %v2384 = vor.u32 1.1754944e-38, %v2383
    %v2385 = vsel %vm2382, %v2384, %v2380
    %v2386 = vmul.f32 1.0, %v2385
    %v2387 = vadd.f32 %v2326, %v2351
    %v2388 = vxor.u32 %v2387, 2147483648
    %v2389 = vmul.f32 %v2388, 1.442695
    %v2390 = vpow.pop %v2389
    %v2391 = vadd.f32 %v2390, 1.0
    %v2392 = vrcp.pop %v2391
    %v2393 = vmul.f32 %v2391, %v2392
    %v2394 = vsub.f32 1.0, %v2393
    %v2395 = vmul.f32 %v2392, %v2394
    %v2396 = vadd.f32 %v2392, %v2395
    %vm2397 = vweird.f32 %v2391
    %vm2398 = vweird.f32 %v2392
    %vm2399 = vmor %vm2397, %vm2398
    %v2400 = vsel %vm2399, %v2392, %v2396
    %v2401 = vand.u32 2147483647, %v2391
    %vm2402 = vcmp.eq.f32.partialorder %v2401, 8.507059e+37
    %v2403 = vand.u32 %v2391, 2147483648
    %v2404 = vor.u32 1.1754944e-38, %v2403
    %v2405 = vsel %vm2402, %v2404, %v2400
    %v2406 = vmul.f32 1.0, %v2405
    %v2407 = vmul.f32 %v2386, %v2364
    %v2408 = vadd.f32 %v2327, %v2407
    %v2409 = vtanh.pop %v2408
    %v2410 = vsub.f32 1.0, %v2406
    %v2411 = vmul.f32 %v2410, %v2409
    %v2412 = vmul.f32 %v2406, %v2194
    %v2413 = vadd.f32 %v2411, %v2412
    %v2414 = vpack.c.bf16 %v2413, %v2413
    %2415 = vmatpush.bf16.msra.mxu0 %v906
    %2416 = vmatpush.bf16.msra.mxu0 %v903
    %2417 = vmatpush.bf16.msra.mxu0 %v900
    %2418 = vmatpush.bf16.msra.mxu0 %v897
    %2419 = vmatpush.bf16.msra.mxu0 %v894
    %2420 = vmatpush.bf16.msra.mxu0 %v891
    %2421 = vmatpush.bf16.msra.mxu0 %v888
    %2422 = vmatpush.bf16.msra.mxu0 %v885
    %2423 = vmatmul.bf16.gmra.mxu0 %v2414
    %v2424 = vpop.f32.mrf.mxu0
    %v2425 = vadd.f32 %v799, %v2424
    %v2426 = vpop.f32.mrf.mxu0
    %2427 = vdwg.mxu0
    %2428 = vmatpush.bf16.msra.mxu0 %v907
    %2429 = vmatpush.bf16.msra.mxu0 %v904
    %2430 = vmatpush.bf16.msra.mxu0 %v901
    %2431 = vmatpush.bf16.msra.mxu0 %v898
    %2432 = vmatpush.bf16.msra.mxu0 %v895
    %2433 = vmatpush.bf16.msra.mxu0 %v892
    %2434 = vmatpush.bf16.msra.mxu0 %v889
    %2435 = vmatpush.bf16.msra.mxu0 %v886
    %2436 = vmatmul.bf16.gmra.mxu0 %v2414
    %v2437 = vpop.f32.mrf.mxu0
    %v2438 = vadd.f32 %v800, %v2437
    %v2439 = vpop.f32.mrf.mxu0
    %2440 = vdwg.mxu0
    %2441 = vmatpush.bf16.msra.mxu0 %v908
    %2442 = vmatpush.bf16.msra.mxu0 %v905
    %2443 = vmatpush.bf16.msra.mxu0 %v902
    %2444 = vmatpush.bf16.msra.mxu0 %v899
    %2445 = vmatpush.bf16.msra.mxu0 %v896
    %2446 = vmatpush.bf16.msra.mxu0 %v893
    %2447 = vmatpush.bf16.msra.mxu0 %v890
    %2448 = vmatpush.bf16.msra.mxu0 %v887
    %2449 = vmatmul.bf16.gmra.mxu0 %v2414
    %v2450 = vpop.f32.mrf.mxu0
    %v2451 = vadd.f32 %v801, %v2450
    %v2452 = vpop.f32.mrf.mxu0
    %2453 = vdwg.mxu0
    %v2454 = vpack.c.bf16 %v2321, %v2321
    %2455 = vmatpush.bf16.msra.mxu0 %v1114
    %2456 = vmatpush.bf16.msra.mxu0 %v1111
    %2457 = vmatpush.bf16.msra.mxu0 %v1108
    %2458 = vmatpush.bf16.msra.mxu0 %v1105
    %2459 = vmatpush.bf16.msra.mxu0 %v1102
    %2460 = vmatpush.bf16.msra.mxu0 %v1099
    %2461 = vmatpush.bf16.msra.mxu0 %v1096
    %2462 = vmatpush.bf16.msra.mxu0 %v1093
    %2463 = vmatmul.bf16.gmra.mxu0 %v2454
    %v2464 = vpop.f32.mrf.mxu0
    %v2465 = vadd.f32 %v1007, %v2464
    %v2466 = vpop.f32.mrf.mxu0
    %2467 = vdwg.mxu0
    %2468 = vmatpush.bf16.msra.mxu0 %v1115
    %2469 = vmatpush.bf16.msra.mxu0 %v1112
    %2470 = vmatpush.bf16.msra.mxu0 %v1109
    %2471 = vmatpush.bf16.msra.mxu0 %v1106
    %2472 = vmatpush.bf16.msra.mxu0 %v1103
    %2473 = vmatpush.bf16.msra.mxu0 %v1100
    %2474 = vmatpush.bf16.msra.mxu0 %v1097
    %2475 = vmatpush.bf16.msra.mxu0 %v1094
    %2476 = vmatmul.bf16.gmra.mxu0 %v2454
    %v2477 = vpop.f32.mrf.mxu0
    %v2478 = vadd.f32 %v1008, %v2477
    %v2479 = vpop.f32.mrf.mxu0
    %2480 = vdwg.mxu0
    %2481 = vmatpush.bf16.msra.mxu0 %v1116
    %2482 = vmatpush.bf16.msra.mxu0 %v1113
    %2483 = vmatpush.bf16.msra.mxu0 %v1110
    %2484 = vmatpush.bf16.msra.mxu0 %v1107
    %2485 = vmatpush.bf16.msra.mxu0 %v1104
    %2486 = vmatpush.bf16.msra.mxu0 %v1101
    %2487 = vmatpush.bf16.msra.mxu0 %v1098
    %2488 = vmatpush.bf16.msra.mxu0 %v1095
    %2489 = vmatmul.bf16.gmra.mxu0 %v2454
    %v2490 = vpop.f32.mrf.mxu0
    %v2491 = vadd.f32 %v1009, %v2490
    %v2492 = vpop.f32.mrf.mxu0
    %2493 = vdwg.mxu0
    %v2494 = vadd.f32 %v2425, %v2465
    %v2495 = vxor.u32 %v2494, 2147483648
    %v2496 = vmul.f32 %v2495, 1.442695
    %v2497 = vpow.pop %v2496
    %v2498 = vadd.f32 %v2497, 1.0
    %v2499 = vrcp.pop %v2498
    %v2500 = vmul.f32 %v2498, %v2499
    %v2501 = vsub.f32 1.0, %v2500
    %v2502 = vmul.f32 %v2499, %v2501
    %v2503 = vadd.f32 %v2499, %v2502
    %vm2504 = vweird.f32 %v2498
    %vm2505 = vweird.f32 %v2499
    %vm2506 = vmor %vm2504, %vm2505
    %v2507 = vsel %vm2506, %v2499, %v2503
    %v2508 = vand.u32 2147483647, %v2498
    %vm2509 = vcmp.eq.f32.partialorder %v2508, 8.507059e+37
    %v2510 = vand.u32 %v2498, 2147483648
    %v2511 = vor.u32 1.1754944e-38, %v2510
    %v2512 = vsel %vm2509, %v2511, %v2507
    %v2513 = vmul.f32 1.0, %v2512
    %v2514 = vadd.f32 %v2438, %v2478
    %v2515 = vxor.u32 %v2514, 2147483648
    %v2516 = vmul.f32 %v2515, 1.442695
    %v2517 = vpow.pop %v2516
    %v2518 = vadd.f32 %v2517, 1.0
    %v2519 = vrcp.pop %v2518
    %v2520 = vmul.f32 %v2518, %v2519
    %v2521 = vsub.f32 1.0, %v2520
    %v2522 = vmul.f32 %v2519, %v2521
    %v2523 = vadd.f32 %v2519, %v2522
    %vm2524 = vweird.f32 %v2518
    %vm2525 = vweird.f32 %v2519
    %vm2526 = vmor %vm2524, %vm2525
    %v2527 = vsel %vm2526, %v2519, %v2523
    %v2528 = vand.u32 2147483647, %v2518
    %vm2529 = vcmp.eq.f32.partialorder %v2528, 8.507059e+37
    %v2530 = vand.u32 %v2518, 2147483648
    %v2531 = vor.u32 1.1754944e-38, %v2530
    %v2532 = vsel %vm2529, %v2531, %v2527
    %v2533 = vmul.f32 1.0, %v2532
    %v2534 = vmul.f32 %v2513, %v2491
    %v2535 = vadd.f32 %v2451, %v2534
    %v2536 = vtanh.pop %v2535
    %v2537 = vsub.f32 1.0, %v2533
    %v2538 = vmul.f32 %v2537, %v2536
    %v2539 = vmul.f32 %v2533, %v2321
    %v2540 = vadd.f32 %v2538, %v2539
    %s2541 = smul.u32 7, 3
    %s2542 = smul.addr %s2541, 8
    %s2543 = scalar_lea.vmem [#allocation2], %s2542
    %v2544 = vld [vmem:[%s2543] sm:$0xff]
    %v2545 = vld [vmem:[%s2543 + $0x8] sm:$0xff]
    %v2546 = vld [vmem:[%s2543 + $0x10] sm:$0xff]
    %2547 = vmatpush.bf16.msra.mxu0 %v651
    %2548 = vmatpush.bf16.msra.mxu0 %v648
    %2549 = vmatpush.bf16.msra.mxu0 %v645
    %2550 = vmatpush.bf16.msra.mxu0 %v642
    %2551 = vmatpush.bf16.msra.mxu0 %v639
    %2552 = vmatpush.bf16.msra.mxu0 %v636
    %2553 = vmatpush.bf16.msra.mxu0 %v633
    %2554 = vmatpush.bf16.msra.mxu0 %v630
    %2555 = vmatmul.bf16.gmra.mxu0 %v2414
    %v2556 = vpop.f32.mrf.mxu0
    %v2557 = vadd.f32 %v544, %v2556
    %v2558 = vpop.f32.mrf.mxu0
    %2559 = vdwg.mxu0
    %2560 = vmatpush.bf16.msra.mxu0 %v652
    %2561 = vmatpush.bf16.msra.mxu0 %v649
    %2562 = vmatpush.bf16.msra.mxu0 %v646
    %2563 = vmatpush.bf16.msra.mxu0 %v643
    %2564 = vmatpush.bf16.msra.mxu0 %v640
    %2565 = vmatpush.bf16.msra.mxu0 %v637
    %2566 = vmatpush.bf16.msra.mxu0 %v634
    %2567 = vmatpush.bf16.msra.mxu0 %v631
    %2568 = vmatmul.bf16.gmra.mxu0 %v2414
    %v2569 = vpop.f32.mrf.mxu0
    %v2570 = vadd.f32 %v545, %v2569
    %v2571 = vpop.f32.mrf.mxu0
    %2572 = vdwg.mxu0
    %2573 = vmatpush.bf16.msra.mxu0 %v653
    %2574 = vmatpush.bf16.msra.mxu0 %v650
    %2575 = vmatpush.bf16.msra.mxu0 %v647
    %2576 = vmatpush.bf16.msra.mxu0 %v644
    %2577 = vmatpush.bf16.msra.mxu0 %v641
    %2578 = vmatpush.bf16.msra.mxu0 %v638
    %2579 = vmatpush.bf16.msra.mxu0 %v635
    %2580 = vmatpush.bf16.msra.mxu0 %v632
    %2581 = vmatmul.bf16.gmra.mxu0 %v2414
    %v2582 = vpop.f32.mrf.mxu0
    %v2583 = vadd.f32 %v546, %v2582
    %v2584 = vpop.f32.mrf.mxu0
    %2585 = vdwg.mxu0
    %v2586 = vadd.f32 %v2544, %v2557
    %v2587 = vxor.u32 %v2586, 2147483648
    %v2588 = vmul.f32 %v2587, 1.442695
    %v2589 = vpow.pop %v2588
    %v2590 = vadd.f32 %v2589, 1.0
    %v2591 = vrcp.pop %v2590
    %v2592 = vmul.f32 %v2590, %v2591
    %v2593 = vsub.f32 1.0, %v2592
    %v2594 = vmul.f32 %v2591, %v2593
    %v2595 = vadd.f32 %v2591, %v2594
    %vm2596 = vweird.f32 %v2590
    %vm2597 = vweird.f32 %v2591
    %vm2598 = vmor %vm2596, %vm2597
    %v2599 = vsel %vm2598, %v2591, %v2595
    %v2600 = vand.u32 2147483647, %v2590
    %vm2601 = vcmp.eq.f32.partialorder %v2600, 8.507059e+37
    %v2602 = vand.u32 %v2590, 2147483648
    %v2603 = vor.u32 1.1754944e-38, %v2602
    %v2604 = vsel %vm2601, %v2603, %v2599
    %v2605 = vmul.f32 1.0, %v2604
    %v2606 = vadd.f32 %v2545, %v2570
    %v2607 = vxor.u32 %v2606, 2147483648
    %v2608 = vmul.f32 %v2607, 1.442695
    %v2609 = vpow.pop %v2608
    %v2610 = vadd.f32 %v2609, 1.0
    %v2611 = vrcp.pop %v2610
    %v2612 = vmul.f32 %v2610, %v2611
    %v2613 = vsub.f32 1.0, %v2612
    %v2614 = vmul.f32 %v2611, %v2613
    %v2615 = vadd.f32 %v2611, %v2614
    %vm2616 = vweird.f32 %v2610
    %vm2617 = vweird.f32 %v2611
    %vm2618 = vmor %vm2616, %vm2617
    %v2619 = vsel %vm2618, %v2611, %v2615
    %v2620 = vand.u32 2147483647, %v2610
    %vm2621 = vcmp.eq.f32.partialorder %v2620, 8.507059e+37
    %v2622 = vand.u32 %v2610, 2147483648
    %v2623 = vor.u32 1.1754944e-38, %v2622
    %v2624 = vsel %vm2621, %v2623, %v2619
    %v2625 = vmul.f32 1.0, %v2624
    %v2626 = vmul.f32 %v2605, %v2583
    %v2627 = vadd.f32 %v2546, %v2626
    %v2628 = vtanh.pop %v2627
    %v2629 = vsub.f32 1.0, %v2625
    %v2630 = vmul.f32 %v2629, %v2628
    %v2631 = vmul.f32 %v2625, %v2413
    %v2632 = vadd.f32 %v2630, %v2631
    %v2633 = vpack.c.bf16 %v2632, %v2632
    %2634 = vmatpush.bf16.msra.mxu0 %v906
    %2635 = vmatpush.bf16.msra.mxu0 %v903
    %2636 = vmatpush.bf16.msra.mxu0 %v900
    %2637 = vmatpush.bf16.msra.mxu0 %v897
    %2638 = vmatpush.bf16.msra.mxu0 %v894
    %2639 = vmatpush.bf16.msra.mxu0 %v891
    %2640 = vmatpush.bf16.msra.mxu0 %v888
    %2641 = vmatpush.bf16.msra.mxu0 %v885
    %2642 = vmatmul.bf16.gmra.mxu0 %v2633
    %v2643 = vpop.f32.mrf.mxu0
    %v2644 = vadd.f32 %v799, %v2643
    %v2645 = vpop.f32.mrf.mxu0
    %2646 = vdwg.mxu0
    %2647 = vmatpush.bf16.msra.mxu0 %v907
    %2648 = vmatpush.bf16.msra.mxu0 %v904
    %2649 = vmatpush.bf16.msra.mxu0 %v901
    %2650 = vmatpush.bf16.msra.mxu0 %v898
    %2651 = vmatpush.bf16.msra.mxu0 %v895
    %2652 = vmatpush.bf16.msra.mxu0 %v892
    %2653 = vmatpush.bf16.msra.mxu0 %v889
    %2654 = vmatpush.bf16.msra.mxu0 %v886
    %2655 = vmatmul.bf16.gmra.mxu0 %v2633
    %v2656 = vpop.f32.mrf.mxu0
    %v2657 = vadd.f32 %v800, %v2656
    %v2658 = vpop.f32.mrf.mxu0
    %2659 = vdwg.mxu0
    %2660 = vmatpush.bf16.msra.mxu0 %v908
    %2661 = vmatpush.bf16.msra.mxu0 %v905
    %2662 = vmatpush.bf16.msra.mxu0 %v902
    %2663 = vmatpush.bf16.msra.mxu0 %v899
    %2664 = vmatpush.bf16.msra.mxu0 %v896
    %2665 = vmatpush.bf16.msra.mxu0 %v893
    %2666 = vmatpush.bf16.msra.mxu0 %v890
    %2667 = vmatpush.bf16.msra.mxu0 %v887
    %2668 = vmatmul.bf16.gmra.mxu0 %v2633
    %v2669 = vpop.f32.mrf.mxu0
    %v2670 = vadd.f32 %v801, %v2669
    %v2671 = vpop.f32.mrf.mxu0
    %2672 = vdwg.mxu0
    %v2673 = vpack.c.bf16 %v2540, %v2540
    %2674 = vmatpush.bf16.msra.mxu0 %v1114
    %2675 = vmatpush.bf16.msra.mxu0 %v1111
    %2676 = vmatpush.bf16.msra.mxu0 %v1108
    %2677 = vmatpush.bf16.msra.mxu0 %v1105
    %2678 = vmatpush.bf16.msra.mxu0 %v1102
    %2679 = vmatpush.bf16.msra.mxu0 %v1099
    %2680 = vmatpush.bf16.msra.mxu0 %v1096
    %2681 = vmatpush.bf16.msra.mxu0 %v1093
    %2682 = vmatmul.bf16.gmra.mxu0 %v2673
    %v2683 = vpop.f32.mrf.mxu0
    %v2684 = vadd.f32 %v1007, %v2683
    %v2685 = vpop.f32.mrf.mxu0
    %2686 = vdwg.mxu0
    %2687 = vmatpush.bf16.msra.mxu0 %v1115
    %2688 = vmatpush.bf16.msra.mxu0 %v1112
    %2689 = vmatpush.bf16.msra.mxu0 %v1109
    %2690 = vmatpush.bf16.msra.mxu0 %v1106
    %2691 = vmatpush.bf16.msra.mxu0 %v1103
    %2692 = vmatpush.bf16.msra.mxu0 %v1100
    %2693 = vmatpush.bf16.msra.mxu0 %v1097
    %2694 = vmatpush.bf16.msra.mxu0 %v1094
    %2695 = vmatmul.bf16.gmra.mxu0 %v2673
    %v2696 = vpop.f32.mrf.mxu0
    %v2697 = vadd.f32 %v1008, %v2696
    %v2698 = vpop.f32.mrf.mxu0
    %2699 = vdwg.mxu0
    %2700 = vmatpush.bf16.msra.mxu0 %v1116
    %2701 = vmatpush.bf16.msra.mxu0 %v1113
    %2702 = vmatpush.bf16.msra.mxu0 %v1110
    %2703 = vmatpush.bf16.msra.mxu0 %v1107
    %2704 = vmatpush.bf16.msra.mxu0 %v1104
    %2705 = vmatpush.bf16.msra.mxu0 %v1101
    %2706 = vmatpush.bf16.msra.mxu0 %v1098
    %2707 = vmatpush.bf16.msra.mxu0 %v1095
    %2708 = vmatmul.bf16.gmra.mxu0 %v2673
    %v2709 = vpop.f32.mrf.mxu0
    %v2710 = vadd.f32 %v1009, %v2709
    %v2711 = vpop.f32.mrf.mxu0
    %2712 = vdwg.mxu0
    %v2713 = vadd.f32 %v2644, %v2684
    %v2714 = vxor.u32 %v2713, 2147483648
    %v2715 = vmul.f32 %v2714, 1.442695
    %v2716 = vpow.pop %v2715
    %v2717 = vadd.f32 %v2716, 1.0
    %v2718 = vrcp.pop %v2717
    %v2719 = vmul.f32 %v2717, %v2718
    %v2720 = vsub.f32 1.0, %v2719
    %v2721 = vmul.f32 %v2718, %v2720
    %v2722 = vadd.f32 %v2718, %v2721
    %vm2723 = vweird.f32 %v2717
    %vm2724 = vweird.f32 %v2718
    %vm2725 = vmor %vm2723, %vm2724
    %v2726 = vsel %vm2725, %v2718, %v2722
    %v2727 = vand.u32 2147483647, %v2717
    %vm2728 = vcmp.eq.f32.partialorder %v2727, 8.507059e+37
    %v2729 = vand.u32 %v2717, 2147483648
    %v2730 = vor.u32 1.1754944e-38, %v2729
    %v2731 = vsel %vm2728, %v2730, %v2726
    %v2732 = vmul.f32 1.0, %v2731
    %v2733 = vadd.f32 %v2657, %v2697
    %v2734 = vxor.u32 %v2733, 2147483648
    %v2735 = vmul.f32 %v2734, 1.442695
    %v2736 = vpow.pop %v2735
    %v2737 = vadd.f32 %v2736, 1.0
    %v2738 = vrcp.pop %v2737
    %v2739 = vmul.f32 %v2737, %v2738
    %v2740 = vsub.f32 1.0, %v2739
    %v2741 = vmul.f32 %v2738, %v2740
    %v2742 = vadd.f32 %v2738, %v2741
    %vm2743 = vweird.f32 %v2737
    %vm2744 = vweird.f32 %v2738
    %vm2745 = vmor %vm2743, %vm2744
    %v2746 = vsel %vm2745, %v2738, %v2742
    %v2747 = vand.u32 2147483647, %v2737
    %vm2748 = vcmp.eq.f32.partialorder %v2747, 8.507059e+37
    %v2749 = vand.u32 %v2737, 2147483648
    %v2750 = vor.u32 1.1754944e-38, %v2749
    %v2751 = vsel %vm2748, %v2750, %v2746
    %v2752 = vmul.f32 1.0, %v2751
    %v2753 = vmul.f32 %v2732, %v2710
    %v2754 = vadd.f32 %v2670, %v2753
    %v2755 = vtanh.pop %v2754
    %v2756 = vsub.f32 1.0, %v2752
    %v2757 = vmul.f32 %v2756, %v2755
    %v2758 = vmul.f32 %v2752, %v2540
    %v2759 = vadd.f32 %v2757, %v2758
    %2760 = vst [vmem:[#allocation3] sm:$0xff] %v2632
    %2761 = vst [vmem:[#allocation4] sm:$0xff] %v2759
    // Predicated region
    $region94: #{tpu_custom_call.1} parent=1 // pred_check
      %p2762 = pneg %p184
    $region95: #{tpu_custom_call.1} parent=1 // pred_check_branch
      %2764 = sbr.rel (%p2762) target = $region97
    $region96: #{tpu_custom_call.1} parent=1 // pred_region
      %v2765 = vpack.c.bf16 %v2759, %v2759
      %v2766 = vld [vmem:[#allocation18] sm:$0xf]
      %v2767 = vld [vmem:[#allocation18 + $0x4] sm:$0xf]
      %v2768 = vld [vmem:[#allocation18 + $0x8] sm:$0xf]
      %v2769 = vld [vmem:[#allocation18 + $0xc] sm:$0xf]
      %v2770 = vld [vmem:[#allocation18 + $0x10] sm:$0xf]
      %v2771 = vld [vmem:[#allocation18 + $0x14] sm:$0xf]
      %v2772 = vld [vmem:[#allocation18 + $0x18] sm:$0xf]
      %v2773 = vld [vmem:[#allocation18 + $0x1c] sm:$0xf]
      %v2774 = vld [vmem:[#allocation18 + $0x20] sm:$0xf]
      %v2775 = vld [vmem:[#allocation18 + $0x24] sm:$0xf]
      %v2776 = vld [vmem:[#allocation18 + $0x28] sm:$0xf]
      %v2777 = vld [vmem:[#allocation18 + $0x2c] sm:$0xf]
      %v2778 = vld [vmem:[#allocation18 + $0x30] sm:$0xf]
      %v2779 = vld [vmem:[#allocation18 + $0x34] sm:$0xf]
      %v2780 = vld [vmem:[#allocation18 + $0x38] sm:$0xf]
      %v2781 = vld [vmem:[#allocation18 + $0x3c] sm:$0xf]
      %v2782 = vld [vmem:[%s10] sm:$0x1]
      %v2784 = vperm.slane %v2782, 0
      %v2802 = vunpack.c.l.b16 %v2766
      %v2803 = vunpack.c.l.b16 %v2767
      %v2804 = vunpack.c.l.b16 %v2768
      %v2805 = vunpack.c.l.b16 %v2769
      %v2806 = vunpack.c.l.b16 %v2770
      %v2807 = vunpack.c.l.b16 %v2771
      %v2808 = vunpack.c.l.b16 %v2772
      %v2809 = vunpack.c.l.b16 %v2773
      %v2810 = vunpack.c.l.b16 %v2774
      %v2811 = vunpack.c.l.b16 %v2775
      %v2812 = vunpack.c.l.b16 %v2776
      %v2813 = vunpack.c.l.b16 %v2777
      %v2814 = vunpack.c.l.b16 %v2778
      %v2815 = vunpack.c.l.b16 %v2779
      %v2816 = vunpack.c.l.b16 %v2780
      %v2817 = vunpack.c.l.b16 %v2781
      %v2818 = vpack.c.b16 %v2803, %v2802
      %v2819 = vpack.c.b16 %v2805, %v2804
      %v2820 = vpack.c.b16 %v2807, %v2806
      %v2821 = vpack.c.b16 %v2809, %v2808
      %v2822 = vpack.c.b16 %v2811, %v2810
      %v2823 = vpack.c.b16 %v2813, %v2812
      %v2824 = vpack.c.b16 %v2815, %v2814
      %v2825 = vpack.c.b16 %v2817, %v2816
      %2834 = vmatpush.bf16.msra.mxu0 %v2825
      %2835 = vmatpush.bf16.msra.mxu0 %v2824
      %2836 = vmatpush.bf16.msra.mxu0 %v2823
      %2837 = vmatpush.bf16.msra.mxu0 %v2822
      %2838 = vmatpush.bf16.msra.mxu0 %v2821
      %2839 = vmatpush.bf16.msra.mxu0 %v2820
      %2840 = vmatpush.bf16.msra.mxu0 %v2819
      %2841 = vmatpush.bf16.msra.mxu0 %v2818
      %2842 = vmatmul.bf16.gmra.mxu0 %v2765
      %v2843 = vpop.f32.mrf.mxu0
      %v2844 = vadd.f32 %v2784, %v2843
      %v2845 = vpop.f32.mrf.mxu0
      %2846 = vdwg.mxu0
      %2847 = vst [vmem:[#allocation21] sm:$0xff] %v2844
      %v2848 = vpack.c.bf16 %v2844, %v2844
      %v2849 = vld [vmem:[#allocation20] sm:$0xff]
      %v2850 = vld [vmem:[#allocation20 + $0x8] sm:$0xff]
      %v2851 = vld [vmem:[#allocation20 + $0x10] sm:$0xff]
      %v2852 = vld [vmem:[#allocation20 + $0x18] sm:$0xff]
      %v2853 = vld [vmem:[#allocation20 + $0x20] sm:$0xff]
      %v2854 = vld [vmem:[#allocation20 + $0x28] sm:$0xff]
      %v2855 = vld [vmem:[#allocation20 + $0x30] sm:$0xff]
      %v2856 = vld [vmem:[#allocation20 + $0x38] sm:$0xff]
      %v2857 = vld [vmem:[#allocation20 + $0x40] sm:$0xff]
      %v2858 = vld [vmem:[#allocation20 + $0x48] sm:$0xff]
      %v2859 = vld [vmem:[#allocation20 + $0x50] sm:$0xff]
      %v2860 = vld [vmem:[#allocation20 + $0x58] sm:$0xff]
      %v2861 = vld [vmem:[#allocation20 + $0x60] sm:$0xff]
      %v2862 = vld [vmem:[#allocation20 + $0x68] sm:$0xff]
      %v2863 = vld [vmem:[#allocation20 + $0x70] sm:$0xff]
      %v2864 = vld [vmem:[#allocation20 + $0x78] sm:$0xff]
      %v2865 = vld [vmem:[%s12] sm:$0x3]
      %v2867 = vperm.slane %v2865, 0
      %v2868 = vperm.slane %v2865, 1
      %v2887 = vunpack.c.l.b16 %v2849
      %v2888 = vunpack.c.h.b16 %v2849
      %v2889 = vunpack.c.l.b16 %v2850
      %v2890 = vunpack.c.h.b16 %v2850
      %v2891 = vunpack.c.l.b16 %v2851
      %v2892 = vunpack.c.h.b16 %v2851
      %v2893 = vunpack.c.l.b16 %v2852
      %v2894 = vunpack.c.h.b16 %v2852
      %v2895 = vunpack.c.l.b16 %v2853
      %v2896 = vunpack.c.h.b16 %v2853
      %v2897 = vunpack.c.l.b16 %v2854
      %v2898 = vunpack.c.h.b16 %v2854
      %v2899 = vunpack.c.l.b16 %v2855
      %v2900 = vunpack.c.h.b16 %v2855
      %v2901 = vunpack.c.l.b16 %v2856
      %v2902 = vunpack.c.h.b16 %v2856
      %v2903 = vunpack.c.l.b16 %v2857
      %v2904 = vunpack.c.h.b16 %v2857
      %v2905 = vunpack.c.l.b16 %v2858
      %v2906 = vunpack.c.h.b16 %v2858
      %v2907 = vunpack.c.l.b16 %v2859
      %v2908 = vunpack.c.h.b16 %v2859
      %v2909 = vunpack.c.l.b16 %v2860
      %v2910 = vunpack.c.h.b16 %v2860
      %v2911 = vunpack.c.l.b16 %v2861
      %v2912 = vunpack.c.h.b16 %v2861
      %v2913 = vunpack.c.l.b16 %v2862
      %v2914 = vunpack.c.h.b16 %v2862
      %v2915 = vunpack.c.l.b16 %v2863
      %v2916 = vunpack.c.h.b16 %v2863
      %v2917 = vunpack.c.l.b16 %v2864
      %v2918 = vunpack.c.h.b16 %v2864
      %v2919 = vpack.c.b16 %v2889, %v2887
      %v2920 = vpack.c.b16 %v2890, %v2888
      %v2921 = vpack.c.b16 %v2893, %v2891
      %v2922 = vpack.c.b16 %v2894, %v2892
      %v2923 = vpack.c.b16 %v2897, %v2895
      %v2924 = vpack.c.b16 %v2898, %v2896
      %v2925 = vpack.c.b16 %v2901, %v2899
      %v2926 = vpack.c.b16 %v2902, %v2900
      %v2927 = vpack.c.b16 %v2905, %v2903
      %v2928 = vpack.c.b16 %v2906, %v2904
      %v2929 = vpack.c.b16 %v2909, %v2907
      %v2930 = vpack.c.b16 %v2910, %v2908
      %v2931 = vpack.c.b16 %v2913, %v2911
      %v2932 = vpack.c.b16 %v2914, %v2912
      %v2933 = vpack.c.b16 %v2917, %v2915
      %v2934 = vpack.c.b16 %v2918, %v2916
      %2951 = vmatpush.bf16.msra.mxu0 %v2933
      %2952 = vmatpush.bf16.msra.mxu0 %v2931
      %2953 = vmatpush.bf16.msra.mxu0 %v2929
      %2954 = vmatpush.bf16.msra.mxu0 %v2927
      %2955 = vmatpush.bf16.msra.mxu0 %v2925
      %2956 = vmatpush.bf16.msra.mxu0 %v2923
      %2957 = vmatpush.bf16.msra.mxu0 %v2921
      %2958 = vmatpush.bf16.msra.mxu0 %v2919
      %2959 = vmatmul.bf16.gmra.mxu0 %v2848
      %v2960 = vpop.f32.mrf.mxu0
      %v2961 = vadd.f32 %v2867, %v2960
      %v2962 = vpop.f32.mrf.mxu0
      %2963 = vdwg.mxu0
      %2964 = vmatpush.bf16.msra.mxu0 %v2934
      %2965 = vmatpush.bf16.msra.mxu0 %v2932
      %2966 = vmatpush.bf16.msra.mxu0 %v2930
      %2967 = vmatpush.bf16.msra.mxu0 %v2928
      %2968 = vmatpush.bf16.msra.mxu0 %v2926
      %2969 = vmatpush.bf16.msra.mxu0 %v2924
      %2970 = vmatpush.bf16.msra.mxu0 %v2922
      %2971 = vmatpush.bf16.msra.mxu0 %v2920
      %2972 = vmatmul.bf16.gmra.mxu0 %v2848
      %v2973 = vpop.f32.mrf.mxu0
      %v2974 = vadd.f32 %v2868, %v2973
      %v2975 = vpop.f32.mrf.mxu0
      %2976 = vdwg.mxu0
      %2977 = vst [vmem:[#allocation22] sm:$0xff] %v2961
      %2978 = vst [vmem:[#allocation22 + $0x8] sm:$0xff] %v2974
    $region97: #{tpu_custom_call.1} parent=1 // pred_fallthru
      _
    // Predicated region
    $region98: #{tpu_custom_call.1} parent=1 // pred_check
      _
    $region99: #{tpu_custom_call.1} parent=1 // pred_check_branch
      %2980 = sbr.rel (0) target = $region101
    $region100: #{tpu_custom_call.1} parent=1 // pred_region
      %2982 = vsyncadd [#allocation8], 0
      %s2984 = sshll.u32 [#allocation21], 4
      %s2985 = int_to_ptr.vmem [resolvable:$true] %s2984
      %s2986 = sshll.u32 %s13, 4
      %s2987 = int_to_ptr.hbm [resolvable:$true] %s2986
      %2989 = dma.vmem_to_hbm [thread:$0]  %s2985, 128, %s2987, [#allocation8]
    $region101: #{tpu_custom_call.1} parent=1 // pred_fallthru
      _
    // Predicated region
    $region102: #{tpu_custom_call.1} parent=1 // pred_check
      _
    $region103: #{tpu_custom_call.1} parent=1 // pred_check_branch
      %2991 = sbr.rel (0) target = $region105
    $region104: #{tpu_custom_call.1} parent=1 // pred_region
      %2993 = vsyncadd [#allocation23], 0
      %s2995 = sshll.u32 [#allocation22], 4
      %s2996 = int_to_ptr.vmem [resolvable:$true] %s2995
      %s2997 = sshll.u32 %s14, 4
      %s2998 = int_to_ptr.hbm [resolvable:$true] %s2997
      %3000 = dma.vmem_to_hbm [thread:$0]  %s2996, 256, %s2998, [#allocation23]
    $region105: #{tpu_custom_call.1} parent=1 // pred_fallthru
      _
    // Predicated region
    $region106: #{tpu_custom_call.1} parent=1 // pred_check
      _
    $region107: #{tpu_custom_call.1} parent=1 // pred_check_branch
      %3002 = sbr.rel (0) target = $region109
    $region108: #{tpu_custom_call.1} parent=1 // pred_region
      %3004 = dma.done [#allocation8], 128
    $region109: #{tpu_custom_call.1} parent=1 // pred_fallthru
      _
    // Predicated region
    $region110: #{tpu_custom_call.1} parent=1 // pred_check
      _
    $region111: #{tpu_custom_call.1} parent=1 // pred_check_branch
      %3006 = sbr.rel (0) target = $region113
    $region112: #{tpu_custom_call.1} parent=1 // pred_region
      %3008 = dma.done [#allocation23], 256
    $region113: #{tpu_custom_call.1} parent=1 // pred_fallthru
      _
    %3009 = vsyncpa [#allocation7], 1
    %3010 = vsyncpa [#allocation10], 1
    %3011 = vsyncpa [#allocation13], 1
    %3012 = vsyncpa [#allocation16], 1
    %3013 = vsyncpa [#allocation19], 1
    %3014 = vsyncpa [#allocation8], 1
    %3015 = vsyncpa [#allocation23], 1

</llo_original>
